<compile_context>
chip_gen: v6e
topology: v6e:2x2x1
jax: 0.10.0
libtpu: 0.0.40
codegen_flags: <defaults>
</compile_context>

<pallas_src>
import functools

import jax
import jax.numpy as jnp
from jax.experimental import pallas as pl
from jax.experimental.pallas import tpu as pltpu

TM_MAX = 512                     # max row tile (M = batch * num_keypoints)
BN_EPS = 1e-5                    # PyTorch BatchNorm1d default
_VMEM_LIMIT = 32 * 1024 * 1024   # safe on v5e/v6e/v7x; worst working set ~11 MiB

N1, N2, N3 = 1024, 512, 256      # MLP channel sizes (ORB input dim = 32)


def _round_up(x, m):
    return (x + m - 1) // m * m


def _cdiv(a, b):
    return (a + b - 1) // b


# ----------------------------------------------------------------------------
# In-kernel helpers
# ----------------------------------------------------------------------------
def _bn_train(y, g, beta, eps):
    """Training-mode BatchNorm over rows (no padding on this path)."""
    mean = jnp.mean(y, axis=0, keepdims=True)
    var = jnp.maximum(jnp.mean(y * y, axis=0, keepdims=True) - mean * mean, 0.0)
    a = g * jax.lax.rsqrt(var + eps)
    return y * a + (beta - mean * a)


def _accum_bn_stats(y, sum_ref, sq_ref, m_idx, num_m, tm, m_real, m_pad):
    """Accumulate per-channel sum / sum-of-squares; mask padded rows only on
    the last M tile (and not at all when there is no padding)."""
    if m_real == m_pad:                                   # static: no padding
        sum_ref[...] += jnp.sum(y, axis=0, keepdims=True)
        sq_ref[...] += jnp.sum(y * y, axis=0, keepdims=True)
    else:
        @pl.when(m_idx < num_m - 1)
        def _():
            sum_ref[...] += jnp.sum(y, axis=0, keepdims=True)
            sq_ref[...] += jnp.sum(y * y, axis=0, keepdims=True)

        @pl.when(m_idx == num_m - 1)
        def _():
            row = jax.lax.broadcasted_iota(jnp.int32, (y.shape[0], 1), 0) + m_idx * tm
            ym = jnp.where(row < m_real, y, 0.0)
            sum_ref[...] += jnp.sum(ym, axis=0, keepdims=True)
            sq_ref[...] += jnp.sum(ym * ym, axis=0, keepdims=True)


def _fold_bn(sum_ref, sq_ref, g, beta, m_real, eps):
    """Turn accumulated sum / sumsq (held in sum_ref / sq_ref) into the folded
    affine a = gamma*rsqrt(var+eps), c = beta - mean*a, stored in the same refs."""
    inv_m = 1.0 / m_real
    mean = sum_ref[...] * inv_m
    var = jnp.maximum(sq_ref[...] * inv_m - mean * mean, 0.0)   # clamp 1-pass var
    a = g * jax.lax.rsqrt(var + eps)
    sum_ref[...] = a
    sq_ref[...] = beta - mean * a


# ----------------------------------------------------------------------------
# Kernel: whole MLP fused in one call (small M, single tile, no padding)
# ----------------------------------------------------------------------------
def _mlp_small_kernel(x_ref, w1_ref, b1_ref, g1_ref, bt1_ref,
                      w2_ref, b2_ref, g2_ref, bt2_ref,
                      w3_ref, b3_ref, o_ref, *, use_bn, eps):
    h = jnp.dot(x_ref[...], w1_ref[...], preferred_element_type=jnp.float32) + b1_ref[...]
    if use_bn:
        h = _bn_train(h, g1_ref[...], bt1_ref[...], eps)
    h = jnp.maximum(h, 0.0)
    h = jnp.dot(h, w2_ref[...], preferred_element_type=jnp.float32) + b2_ref[...]
    if use_bn:
        h = _bn_train(h, g2_ref[...], bt2_ref[...], eps)
    h = jnp.maximum(h, 0.0)
    o_ref[...] = jnp.dot(h, w3_ref[...], preferred_element_type=jnp.float32) + b3_ref[...]


# ----------------------------------------------------------------------------
# Kernel: layer-1 BatchNorm statistics only (y1 is recomputed later)
# grid = (N1 // tn1, M tiles):  axis 0 parallel (megacore), axis 1 reduction.
# ----------------------------------------------------------------------------
def _l1_stats_kernel(x_ref, w_ref, b_ref, g_ref, bt_ref, a_ref, c_ref,
                     *, tm, m_real, m_pad, eps):
    m = pl.program_id(1)
    num_m = pl.num_programs(1)

    @pl.when(m == 0)
    def _():
        a_ref[...] = jnp.zeros_like(a_ref)
        c_ref[...] = jnp.zeros_like(c_ref)

    y = jnp.dot(x_ref[...], w_ref[...], preferred_element_type=jnp.float32) + b_ref[...]
    _accum_bn_stats(y, a_ref, c_ref, m, num_m, tm, m_real, m_pad)

    @pl.when(m == num_m - 1)
    def _():
        _fold_bn(a_ref, c_ref, g_ref[...], bt_ref[...], m_real, eps)


# ----------------------------------------------------------------------------
# Kernel: fused layer 2 — recompute y1, BN1 affine + ReLU, matmul-2,
#         write y2, accumulate + fold BN2 statistics.
# ----------------------------------------------------------------------------
def _l2_fused_kernel(x_ref, w1_ref, b1_ref, a1_ref, c1_ref,
                     w2_ref, b2_ref, g2_ref, bt2_ref,
                     y_ref, a_ref, c_ref, *, tm, m_real, m_pad, eps):
    m = pl.program_id(1)
    num_m = pl.num_programs(1)

    @pl.when(m == 0)
    def _():
        a_ref[...] = jnp.zeros_like(a_ref)
        c_ref[...] = jnp.zeros_like(c_ref)

    # Recompute layer-1 output (K = 32, cheap) and apply folded BN1 + ReLU.
    y1 = jnp.dot(x_ref[...], w1_ref[...], preferred_element_type=jnp.float32) + b1_ref[...]
    h1 = jnp.maximum(y1 * a1_ref[...] + c1_ref[...], 0.0)

    y2 = jnp.dot(h1, w2_ref[...], preferred_element_type=jnp.float32) + b2_ref[...]
    y_ref[...] = y2
    _accum_bn_stats(y2, a_ref, c_ref, m, num_m, tm, m_real, m_pad)

    @pl.when(m == num_m - 1)
    def _():
        _fold_bn(a_ref, c_ref, g2_ref[...], bt2_ref[...], m_real, eps)


# ----------------------------------------------------------------------------
# Kernel: fused layer 3 — BN2 affine + ReLU + matmul-3
# ----------------------------------------------------------------------------
def _l3_fused_kernel(y2_ref, a2_ref, c2_ref, w_ref, b_ref, o_ref):
    h = jnp.maximum(y2_ref[...] * a2_ref[...] + c2_ref[...], 0.0)
    o_ref[...] = jnp.dot(h, w_ref[...], preferred_element_type=jnp.float32) + b_ref[...]


# ----------------------------------------------------------------------------
# Kernel: plain linear (+ optional fused ReLU) — no-BN (batch == 1) tiled path
# ----------------------------------------------------------------------------
def _linear_kernel(x_ref, w_ref, b_ref, y_ref, *, relu):
    y = jnp.dot(x_ref[...], w_ref[...], preferred_element_type=jnp.float32) + b_ref[...]
    if relu:
        y = jnp.maximum(y, 0.0)
    y_ref[...] = y


# ----------------------------------------------------------------------------
# Wrappers
# ----------------------------------------------------------------------------
def _mlp_fused_small(x2d, params, use_bn):
    M, K = x2d.shape

    def full(shape):
        return pl.BlockSpec(shape, lambda i: (0, 0))

    return pl.pallas_call(
        functools.partial(_mlp_small_kernel, use_bn=use_bn, eps=BN_EPS),
        out_shape=jax.ShapeDtypeStruct((M, N3), jnp.float32),
        grid_spec=pltpu.PrefetchScalarGridSpec(
            num_scalar_prefetch=0,
            grid=(1,),
            in_specs=[
                full((M, K)),
                full((K, N1)), full((1, N1)), full((1, N1)), full((1, N1)),
                full((N1, N2)), full((1, N2)), full((1, N2)), full((1, N2)),
                full((N2, N3)), full((1, N3)),
            ],
            out_specs=full((M, N3)),
        ),
        compiler_params=pltpu.CompilerParams(
            dimension_semantics=("arbitrary",),
            vmem_limit_bytes=_VMEM_LIMIT),
    )(x2d,
      params["w1"], params["b1"].reshape(1, N1),
      params["g1"].reshape(1, N1), params["beta1"].reshape(1, N1),
      params["w2"], params["b2"].reshape(1, N2),
      params["g2"].reshape(1, N2), params["beta2"].reshape(1, N2),
      params["w3"], params["b3"].reshape(1, N3))


def _linear(x2d, w, b, tm, *, relu):
    Mp, K = x2d.shape
    N = w.shape[1]
    return pl.pallas_call(
        functools.partial(_linear_kernel, relu=relu),
        out_shape=jax.ShapeDtypeStruct((Mp, N), jnp.float32),
        grid_spec=pltpu.PrefetchScalarGridSpec(
            num_scalar_prefetch=0,
            grid=(Mp // tm,),
            in_specs=[
                pl.BlockSpec((tm, K), lambda m: (m, 0)),
                pl.BlockSpec((K, N), lambda m: (0, 0)),
                pl.BlockSpec((1, N), lambda m: (0, 0)),
            ],
            out_specs=pl.BlockSpec((tm, N), lambda m: (m, 0)),
        ),
        compiler_params=pltpu.CompilerParams(
            dimension_semantics=("parallel",),
            vmem_limit_bytes=_VMEM_LIMIT),
    )(x2d, w, b.reshape(1, N))


def _forward_bn_tiled(x2d, params, m_real, m_pad, tm):
    nM = m_pad // tm
    tn1 = N1 // 2     # 2-way N split: megacore-parallel on v7x, near-free elsewhere
    tn2 = N2 // 2

    w1, w2, w3 = params["w1"], params["w2"], params["w3"]
    b1 = params["b1"].reshape(1, N1)
    g1 = params["g1"].reshape(1, N1)
    bt1 = params["beta1"].reshape(1, N1)
    b2 = params["b2"].reshape(1, N2)
    g2 = params["g2"].reshape(1, N2)
    bt2 = params["beta2"].reshape(1, N2)
    b3 = params["b3"].reshape(1, N3)

    # ---- layer 1: BatchNorm statistics only (no y1 writeback) ----
    a1, c1 = pl.pallas_call(
        functools.partial(_l1_stats_kernel, tm=tm, m_real=m_real, m_pad=m_pad, eps=BN_EPS),
        out_shape=(jax.ShapeDtypeStruct((1, N1), jnp.float32),
                   jax.ShapeDtypeStruct((1, N1), jnp.float32)),
        grid_spec=pltpu.PrefetchScalarGridSpec(
            num_scalar_prefetch=0,
            grid=(N1 // tn1, nM),
            in_specs=[
                pl.BlockSpec((tm, 32), lambda n, m: (m, 0)),
                pl.BlockSpec((32, tn1), lambda n, m: (0, n)),
                pl.BlockSpec((1, tn1), lambda n, m: (0, n)),
                pl.BlockSpec((1, tn1), lambda n, m: (0, n)),
                pl.BlockSpec((1, tn1), lambda n, m: (0, n)),
            ],
            out_specs=(pl.BlockSpec((1, tn1), lambda n, m: (0, n)),
                       pl.BlockSpec((1, tn1), lambda n, m: (0, n))),
        ),
        compiler_params=pltpu.CompilerParams(
            dimension_semantics=("parallel", "arbitrary"),
            vmem_limit_bytes=_VMEM_LIMIT),
    )(x2d, w1, b1, g1, bt1)

    # ---- layer 2 fused: recompute y1, BN1+ReLU, matmul-2, BN2 stats ----
    y2, a2, c2 = pl.pallas_call(
        functools.partial(_l2_fused_kernel, tm=tm, m_real=m_real, m_pad=m_pad, eps=BN_EPS),
        out_shape=(jax.ShapeDtypeStruct((m_pad, N2), jnp.float32),
                   jax.ShapeDtypeStruct((1, N2), jnp.float32),
                   jax.ShapeDtypeStruct((1, N2), jnp.float32)),
        grid_spec=pltpu.PrefetchScalarGridSpec(
            num_scalar_prefetch=0,
            grid=(N2 // tn2, nM),
            in_specs=[
                pl.BlockSpec((tm, 32), lambda n, m: (m, 0)),     # x
                pl.BlockSpec((32, N1), lambda n, m: (0, 0)),     # w1 (full, resident)
                pl.BlockSpec((1, N1), lambda n, m: (0, 0)),      # b1
                pl.BlockSpec((1, N1), lambda n, m: (0, 0)),      # a1
                pl.BlockSpec((1, N1), lambda n, m: (0, 0)),      # c1
                pl.BlockSpec((N1, tn2), lambda n, m: (0, n)),    # w2 (N-split)
                pl.BlockSpec((1, tn2), lambda n, m: (0, n)),     # b2
                pl.BlockSpec((1, tn2), lambda n, m: (0, n)),     # gamma2
                pl.BlockSpec((1, tn2), lambda n, m: (0, n)),     # beta2
            ],
            out_specs=(pl.BlockSpec((tm, tn2), lambda n, m: (m, n)),
                       pl.BlockSpec((1, tn2), lambda n, m: (0, n)),
                       pl.BlockSpec((1, tn2), lambda n, m: (0, n))),
        ),
        compiler_params=pltpu.CompilerParams(
            dimension_semantics=("parallel", "arbitrary"),
            vmem_limit_bytes=_VMEM_LIMIT),
    )(x2d, w1, b1, a1, c1, w2, b2, g2, bt2)

    # ---- layer 3 fused: BN2 affine + ReLU + matmul-3 ----
    out = pl.pallas_call(
        _l3_fused_kernel,
        out_shape=jax.ShapeDtypeStruct((m_pad, N3), jnp.float32),
        grid_spec=pltpu.PrefetchScalarGridSpec(
            num_scalar_prefetch=0,
            grid=(nM,),
            in_specs=[
                pl.BlockSpec((tm, N2), lambda m: (m, 0)),
                pl.BlockSpec((1, N2), lambda m: (0, 0)),
                pl.BlockSpec((1, N2), lambda m: (0, 0)),
                pl.BlockSpec((N2, N3), lambda m: (0, 0)),
                pl.BlockSpec((1, N3), lambda m: (0, 0)),
            ],
            out_specs=pl.BlockSpec((tm, N3), lambda m: (m, 0)),
        ),
        compiler_params=pltpu.CompilerParams(
            dimension_semantics=("parallel",),
            vmem_limit_bytes=_VMEM_LIMIT),
    )(y2, a2, c2, w3, b3)
    return out


# ----------------------------------------------------------------------------
# DescriptorFeatureExtractor forward (keypoint_type='orb'  ->  input_dim = 32)
# ----------------------------------------------------------------------------
def descriptor_feature_extractor_forward(params, x):
    # x: (B, 32, L) or (B, 32) — PyTorch Conv1d layout
    if x.ndim == 2:
        x3 = x[:, :, None]
    elif x.ndim == 3:
        x3 = x
    else:
        raise ValueError(f"Expected 2D or 3D input tensor, got {x.ndim}D tensor")

    B, Cin, L = x3.shape
    m_real = B * L
    use_bn = B != 1   # PyTorch forward skips BatchNorm1d when batch size == 1

    # (B, C, L) -> (M, C) rows, channels in the lane dimension
    x2d = jnp.transpose(x3, (0, 2, 1)).reshape(m_real, Cin)

    if m_real <= TM_MAX:
        # Whole MLP in a single fused pallas_call, no padding / masking needed.
        rows = _mlp_fused_small(x2d, params, use_bn)
    else:
        # Bounded-overshoot padding: at most 8 * ntiles - ... extra rows.
        m8 = _round_up(m_real, 8)
        ntiles = _cdiv(m8, TM_MAX)
        tm = _round_up(_cdiv(m_real, ntiles), 8)
        m_pad = tm * ntiles
        if m_pad != m_real:
            x2d = jnp.pad(x2d, ((0, m_pad - m_real), (0, 0)))

        if use_bn:
            h = _forward_bn_tiled(x2d, params, m_real, m_pad, tm)
        else:
            h = _linear(x2d, params["w1"], params["b1"], tm, relu=True)
            h = _linear(h, params["w2"], params["b2"], tm, relu=True)
            h = _linear(h, params["w3"], params["b3"], tm, relu=False)
        rows = h[:m_real]

    out = rows.reshape(B, L, N3).transpose(0, 2, 1)   # (B, 256, L)
    if out.shape[2] == 1:                             # torch .squeeze(2)
        out = out[:, :, 0]
    return out


# ----------------------------------------------------------------------------
# Pure-JAX reference (training-mode BN, biased variance) for validation
# ----------------------------------------------------------------------------
def _reference_forward(params, x):
    if x.ndim == 2:
        x = x[:, :, None]
    B, C, L = x.shape
    h = jnp.transpose(x, (0, 2, 1)).reshape(B * L, C)
    use_bn = B != 1
    for i in (1, 2):
        h = h @ params[f"w{i}"] + params[f"b{i}"]
        if use_bn:
            mean = jnp.mean(h, axis=0)
            var = jnp.mean((h - mean) ** 2, axis=0)
            h = (h - mean) * jax.lax.rsqrt(var + BN_EPS) * params[f"g{i}"] + params[f"beta{i}"]
        h = jnp.maximum(h, 0.0)
    h = h @ params["w3"] + params["b3"]
    out = h.reshape(B, L, N3).transpose(0, 2, 1)
    if out.shape[2] == 1:
        out = out[:, :, 0]
    return out


# ----------------------------------------------------------------------------
# deterministic synthetic parameters (shapes follow the PyTorch __init__)
# ----------------------------------------------------------------------------
def init_params(key):
    dims = [32, N1, N2, N3]
    ks = jax.random.split(key, 6)
    p = {}
    for i in range(3):
        cin, cout = dims[i], dims[i + 1]
        bound = 1.0 / jnp.sqrt(jnp.float32(cin))   # Conv1d(k=1) fan_in = cin
        # weights stored pre-transposed as (Cin, Cout) ready for x @ w
        p[f"w{i + 1}"] = jax.random.uniform(ks[2 * i], (cin, cout),
                                            jnp.float32, -bound, bound)
        p[f"b{i + 1}"] = jax.random.uniform(ks[2 * i + 1], (cout,),
                                            jnp.float32, -bound, bound)
    # BatchNorm1d affine params (fresh PyTorch init: gamma=1, beta=0)
    p["g1"] = jnp.ones((N1,), jnp.float32)
    p["beta1"] = jnp.zeros((N1,), jnp.float32)
    p["g2"] = jnp.ones((N2,), jnp.float32)
    p["beta2"] = jnp.zeros((N2,), jnp.float32)
    return p
    # TODO(synk): running-stat buffer updates (training-side mutation of
    # running_mean / running_var) are not modeled; only the forward output.


if __name__ == "__main__":
    key = jax.random.PRNGKey(0)
    k_param, k_x1, k_x2 = jax.random.split(key, 3)

    params = init_params(k_param)
    fwd = jax.jit(descriptor_feature_extractor_forward)

    # Small case (batch=2, 8 ORB keypoints): single fused pallas_call path.
    x_small = jax.random.uniform(k_x1, (2, 32, 8), jnp.float32)
    out_small = fwd(params, x_small)
    jax.block_until_ready(out_small)
    assert out_small.shape == (2, 256, 8)
    assert bool(jnp.all(jnp.isfinite(out_small)))
    ref_small = _reference_forward(params, x_small)
    assert float(jnp.max(jnp.abs(out_small - ref_small))) < 1e-1

    # Larger case (batch=7, 143 keypoints, M=1001 rows): exercises the tiled
    # stats-only / fused / masked multi-kernel path.
    x_big = jax.random.uniform(k_x2, (7, 32, 143), jnp.float32)
    out_big = fwd(params, x_big)
    jax.block_until_ready(out_big)
    assert out_big.shape == (7, 256, 143)
    assert bool(jnp.all(jnp.isfinite(out_big)))
    ref_big = _reference_forward(params, x_big)
    assert float(jnp.max(jnp.abs(out_big - ref_big))) < 1e-1

    print("KERNEL_OK")
</pallas_src>

<mosaic_0001>
module attributes {stable_mosaic.version = 11 : i64} {
  func.func @_mlp_small_kernel(%arg0: i32, %arg1: memref<16x32xf32, #tpu.memory_space<vmem>>, %arg2: memref<32x1024xf32, #tpu.memory_space<vmem>>, %arg3: memref<1x1024xf32, #tpu.memory_space<vmem>>, %arg4: memref<1x1024xf32, #tpu.memory_space<vmem>>, %arg5: memref<1x1024xf32, #tpu.memory_space<vmem>>, %arg6: memref<1024x512xf32, #tpu.memory_space<vmem>>, %arg7: memref<1x512xf32, #tpu.memory_space<vmem>>, %arg8: memref<1x512xf32, #tpu.memory_space<vmem>>, %arg9: memref<1x512xf32, #tpu.memory_space<vmem>>, %arg10: memref<512x256xf32, #tpu.memory_space<vmem>>, %arg11: memref<1x256xf32, #tpu.memory_space<vmem>>, %arg12: memref<16x256xf32, #tpu.memory_space<vmem>>) attributes {dimension_semantics = [#tpu.dimension_semantics<arbitrary>], iteration_bounds = array<i64: 1>, scalar_prefetch = 0 : i64, scratch_operands = 0 : i64, tpu.core_type = #tpu.core_type<tc>, window_params = [{pipeline_mode = #tpu.pipeline_mode<synchronous>, transform_indices = @transform_0, window_bounds = array<i64: 16, 32>}, {pipeline_mode = #tpu.pipeline_mode<synchronous>, transform_indices = @transform_1, window_bounds = array<i64: 32, 1024>}, {pipeline_mode = #tpu.pipeline_mode<synchronous>, transform_indices = @transform_2, window_bounds = array<i64: 1, 1024>}, {pipeline_mode = #tpu.pipeline_mode<synchronous>, transform_indices = @transform_3, window_bounds = array<i64: 1, 1024>}, {pipeline_mode = #tpu.pipeline_mode<synchronous>, transform_indices = @transform_4, window_bounds = array<i64: 1, 1024>}, {pipeline_mode = #tpu.pipeline_mode<synchronous>, transform_indices = @transform_5, window_bounds = array<i64: 1024, 512>}, {pipeline_mode = #tpu.pipeline_mode<synchronous>, transform_indices = @transform_6, window_bounds = array<i64: 1, 512>}, {pipeline_mode = #tpu.pipeline_mode<synchronous>, transform_indices = @transform_7, window_bounds = array<i64: 1, 512>}, {pipeline_mode = #tpu.pipeline_mode<synchronous>, transform_indices = @transform_8, window_bounds = array<i64: 1, 512>}, {pipeline_mode = #tpu.pipeline_mode<synchronous>, transform_indices = @transform_9, window_bounds = array<i64: 512, 256>}, {pipeline_mode = #tpu.pipeline_mode<synchronous>, transform_indices = @transform_10, window_bounds = array<i64: 1, 256>}, {pipeline_mode = #tpu.pipeline_mode<synchronous>, transform_indices = @transform_11, window_bounds = array<i64: 16, 256>}]} {
    %c0 = arith.constant 0 : index
    %c0_0 = arith.constant 0 : index
    %0 = vector.load %arg1[%c0, %c0_0] : memref<16x32xf32, #tpu.memory_space<vmem>>, vector<16x32xf32>
    %c0_1 = arith.constant 0 : index
    %c0_2 = arith.constant 0 : index
    %1 = vector.load %arg2[%c0_1, %c0_2] : memref<32x1024xf32, #tpu.memory_space<vmem>>, vector<32x1024xf32>
    %cst = arith.constant dense<0.000000e+00> : vector<16x1024xf32>
    %2 = tpu.matmul %0, %1, %cst {dimension_numbers = #tpu.dot_dimension_numbers<[1], [0], [0], [1], [0, 0, 1, 1], [], []>} : vector<16x32xf32>, vector<32x1024xf32>, vector<16x1024xf32> -> vector<16x1024xf32>
    %c0_3 = arith.constant 0 : index
    %c0_4 = arith.constant 0 : index
    %3 = vector.load %arg3[%c0_3, %c0_4] : memref<1x1024xf32, #tpu.memory_space<vmem>>, vector<1x1024xf32>
    %4 = vector.broadcast %3 : vector<1x1024xf32> to vector<16x1024xf32>
    %5 = arith.addf %2, %4 : vector<16x1024xf32>
    %c0_5 = arith.constant 0 : index
    %c0_6 = arith.constant 0 : index
    %6 = vector.load %arg4[%c0_5, %c0_6] : memref<1x1024xf32, #tpu.memory_space<vmem>>, vector<1x1024xf32>
    %c0_7 = arith.constant 0 : index
    %c0_8 = arith.constant 0 : index
    %7 = vector.load %arg5[%c0_7, %c0_8] : memref<1x1024xf32, #tpu.memory_space<vmem>>, vector<1x1024xf32>
    %cst_9 = arith.constant dense<0.000000e+00> : vector<1024xf32>
    %8 = vector.multi_reduction <add>, %5, %cst_9 [0] : vector<16x1024xf32> to vector<1024xf32>
    %9 = vector.shape_cast %8 : vector<1024xf32> to vector<1x1024xf32>
    %cst_10 = arith.constant 1.600000e+01 : f32
    %10 = vector.broadcast %cst_10 : f32 to vector<1x1024xf32>
    %11 = arith.divf %9, %10 : vector<1x1024xf32>
    %12 = arith.mulf %5, %5 : vector<16x1024xf32>
    %cst_11 = arith.constant dense<0.000000e+00> : vector<1024xf32>
    %13 = vector.multi_reduction <add>, %12, %cst_11 [0] : vector<16x1024xf32> to vector<1024xf32>
    %14 = vector.shape_cast %13 : vector<1024xf32> to vector<1x1024xf32>
    %cst_12 = arith.constant 1.600000e+01 : f32
    %15 = vector.broadcast %cst_12 : f32 to vector<1x1024xf32>
    %16 = arith.divf %14, %15 : vector<1x1024xf32>
    %17 = arith.mulf %11, %11 : vector<1x1024xf32>
    %18 = arith.subf %16, %17 : vector<1x1024xf32>
    %cst_13 = arith.constant 0.000000e+00 : f32
    %19 = vector.broadcast %cst_13 : f32 to vector<1x1024xf32>
    %20 = arith.maximumf %18, %19 : vector<1x1024xf32>
    %cst_14 = arith.constant 9.99999974E-6 : f32
    %21 = vector.broadcast %cst_14 : f32 to vector<1x1024xf32>
    %22 = arith.addf %20, %21 : vector<1x1024xf32>
    %23 = math.rsqrt %22 : vector<1x1024xf32>
    %24 = arith.mulf %6, %23 : vector<1x1024xf32>
    %25 = vector.broadcast %24 : vector<1x1024xf32> to vector<16x1024xf32>
    %26 = arith.mulf %5, %25 : vector<16x1024xf32>
    %27 = arith.mulf %11, %24 : vector<1x1024xf32>
    %28 = arith.subf %7, %27 : vector<1x1024xf32>
    %29 = vector.broadcast %28 : vector<1x1024xf32> to vector<16x1024xf32>
    %30 = arith.addf %26, %29 : vector<16x1024xf32>
    %cst_15 = arith.constant 0.000000e+00 : f32
    %31 = vector.broadcast %cst_15 : f32 to vector<16x1024xf32>
    %32 = arith.maximumf %30, %31 : vector<16x1024xf32>
    %c0_16 = arith.constant 0 : index
    %c0_17 = arith.constant 0 : index
    %33 = vector.load %arg6[%c0_16, %c0_17] : memref<1024x512xf32, #tpu.memory_space<vmem>>, vector<1024x512xf32>
    %cst_18 = arith.constant dense<0.000000e+00> : vector<16x512xf32>
    %34 = tpu.matmul %32, %33, %cst_18 {dimension_numbers = #tpu.dot_dimension_numbers<[1], [0], [0], [1], [0, 0, 1, 1], [], []>} : vector<16x1024xf32>, vector<1024x512xf32>, vector<16x512xf32> -> vector<16x512xf32>
    %c0_19 = arith.constant 0 : index
    %c0_20 = arith.constant 0 : index
    %35 = vector.load %arg7[%c0_19, %c0_20] : memref<1x512xf32, #tpu.memory_space<vmem>>, vector<1x512xf32>
    %36 = vector.broadcast %35 : vector<1x512xf32> to vector<16x512xf32>
    %37 = arith.addf %34, %36 : vector<16x512xf32>
    %c0_21 = arith.constant 0 : index
    %c0_22 = arith.constant 0 : index
    %38 = vector.load %arg8[%c0_21, %c0_22] : memref<1x512xf32, #tpu.memory_space<vmem>>, vector<1x512xf32>
    %c0_23 = arith.constant 0 : index
    %c0_24 = arith.constant 0 : index
    %39 = vector.load %arg9[%c0_23, %c0_24] : memref<1x512xf32, #tpu.memory_space<vmem>>, vector<1x512xf32>
    %cst_25 = arith.constant dense<0.000000e+00> : vector<512xf32>
    %40 = vector.multi_reduction <add>, %37, %cst_25 [0] : vector<16x512xf32> to vector<512xf32>
    %41 = vector.shape_cast %40 : vector<512xf32> to vector<1x512xf32>
    %cst_26 = arith.constant 1.600000e+01 : f32
    %42 = vector.broadcast %cst_26 : f32 to vector<1x512xf32>
    %43 = arith.divf %41, %42 : vector<1x512xf32>
    %44 = arith.mulf %37, %37 : vector<16x512xf32>
    %cst_27 = arith.constant dense<0.000000e+00> : vector<512xf32>
    %45 = vector.multi_reduction <add>, %44, %cst_27 [0] : vector<16x512xf32> to vector<512xf32>
    %46 = vector.shape_cast %45 : vector<512xf32> to vector<1x512xf32>
    %cst_28 = arith.constant 1.600000e+01 : f32
    %47 = vector.broadcast %cst_28 : f32 to vector<1x512xf32>
    %48 = arith.divf %46, %47 : vector<1x512xf32>
    %49 = arith.mulf %43, %43 : vector<1x512xf32>
    %50 = arith.subf %48, %49 : vector<1x512xf32>
    %cst_29 = arith.constant 0.000000e+00 : f32
    %51 = vector.broadcast %cst_29 : f32 to vector<1x512xf32>
    %52 = arith.maximumf %50, %51 : vector<1x512xf32>
    %cst_30 = arith.constant 9.99999974E-6 : f32
    %53 = vector.broadcast %cst_30 : f32 to vector<1x512xf32>
    %54 = arith.addf %52, %53 : vector<1x512xf32>
    %55 = math.rsqrt %54 : vector<1x512xf32>
    %56 = arith.mulf %38, %55 : vector<1x512xf32>
    %57 = vector.broadcast %56 : vector<1x512xf32> to vector<16x512xf32>
    %58 = arith.mulf %37, %57 : vector<16x512xf32>
    %59 = arith.mulf %43, %56 : vector<1x512xf32>
    %60 = arith.subf %39, %59 : vector<1x512xf32>
    %61 = vector.broadcast %60 : vector<1x512xf32> to vector<16x512xf32>
    %62 = arith.addf %58, %61 : vector<16x512xf32>
    %cst_31 = arith.constant 0.000000e+00 : f32
    %63 = vector.broadcast %cst_31 : f32 to vector<16x512xf32>
    %64 = arith.maximumf %62, %63 : vector<16x512xf32>
    %c0_32 = arith.constant 0 : index
    %c0_33 = arith.constant 0 : index
    %65 = vector.load %arg10[%c0_32, %c0_33] : memref<512x256xf32, #tpu.memory_space<vmem>>, vector<512x256xf32>
    %cst_34 = arith.constant dense<0.000000e+00> : vector<16x256xf32>
    %66 = tpu.matmul %64, %65, %cst_34 {dimension_numbers = #tpu.dot_dimension_numbers<[1], [0], [0], [1], [0, 0, 1, 1], [], []>} : vector<16x512xf32>, vector<512x256xf32>, vector<16x256xf32> -> vector<16x256xf32>
    %c0_35 = arith.constant 0 : index
    %c0_36 = arith.constant 0 : index
    %67 = vector.load %arg11[%c0_35, %c0_36] : memref<1x256xf32, #tpu.memory_space<vmem>>, vector<1x256xf32>
    %68 = vector.broadcast %67 : vector<1x256xf32> to vector<16x256xf32>
    %69 = arith.addf %66, %68 : vector<16x256xf32>
    %c0_37 = arith.constant 0 : index
    %c0_38 = arith.constant 0 : index
    %70 = vector.load %arg12[%c0_37, %c0_38] : memref<16x256xf32, #tpu.memory_space<vmem>>, vector<16x256xf32>
    tpu.vector_store %arg12[%c0_37, %c0_38], %69 {strides = array<i32>} : memref<16x256xf32, #tpu.memory_space<vmem>>, vector<16x256xf32>,
    return
  }
  func.func @transform_0(%arg0: i32) -> (i32, i32) {
    %c0_i32 = arith.constant 0 : i32
    %c0_i32_0 = arith.constant 0 : i32
    %c0_i32_1 = arith.constant 0 : i32
    return %c0_i32, %c0_i32_0 : i32, i32
  }
  func.func @transform_1(%arg0: i32) -> (i32, i32) {
    %c0_i32 = arith.constant 0 : i32
    %c0_i32_0 = arith.constant 0 : i32
    %c0_i32_1 = arith.constant 0 : i32
    return %c0_i32, %c0_i32_0 : i32, i32
  }
  func.func @transform_2(%arg0: i32) -> (i32, i32) {
    %c0_i32 = arith.constant 0 : i32
    %c0_i32_0 = arith.constant 0 : i32
    %c0_i32_1 = arith.constant 0 : i32
    return %c0_i32, %c0_i32_0 : i32, i32
  }
  func.func @transform_3(%arg0: i32) -> (i32, i32) {
    %c0_i32 = arith.constant 0 : i32
    %c0_i32_0 = arith.constant 0 : i32
    %c0_i32_1 = arith.constant 0 : i32
    return %c0_i32, %c0_i32_0 : i32, i32
  }
  func.func @transform_4(%arg0: i32) -> (i32, i32) {
    %c0_i32 = arith.constant 0 : i32
    %c0_i32_0 = arith.constant 0 : i32
    %c0_i32_1 = arith.constant 0 : i32
    return %c0_i32, %c0_i32_0 : i32, i32
  }
  func.func @transform_5(%arg0: i32) -> (i32, i32) {
    %c0_i32 = arith.constant 0 : i32
    %c0_i32_0 = arith.constant 0 : i32
    %c0_i32_1 = arith.constant 0 : i32
    return %c0_i32, %c0_i32_0 : i32, i32
  }
  func.func @transform_6(%arg0: i32) -> (i32, i32) {
    %c0_i32 = arith.constant 0 : i32
    %c0_i32_0 = arith.constant 0 : i32
    %c0_i32_1 = arith.constant 0 : i32
    return %c0_i32, %c0_i32_0 : i32, i32
  }
  func.func @transform_7(%arg0: i32) -> (i32, i32) {
    %c0_i32 = arith.constant 0 : i32
    %c0_i32_0 = arith.constant 0 : i32
    %c0_i32_1 = arith.constant 0 : i32
    return %c0_i32, %c0_i32_0 : i32, i32
  }
  func.func @transform_8(%arg0: i32) -> (i32, i32) {
    %c0_i32 = arith.constant 0 : i32
    %c0_i32_0 = arith.constant 0 : i32
    %c0_i32_1 = arith.constant 0 : i32
    return %c0_i32, %c0_i32_0 : i32, i32
  }
  func.func @transform_9(%arg0: i32) -> (i32, i32) {
    %c0_i32 = arith.constant 0 : i32
    %c0_i32_0 = arith.constant 0 : i32
    %c0_i32_1 = arith.constant 0 : i32
    return %c0_i32, %c0_i32_0 : i32, i32
  }
  func.func @transform_10(%arg0: i32) -> (i32, i32) {
    %c0_i32 = arith.constant 0 : i32
    %c0_i32_0 = arith.constant 0 : i32
    %c0_i32_1 = arith.constant 0 : i32
    return %c0_i32, %c0_i32_0 : i32, i32
  }
  func.func @transform_11(%arg0: i32) -> (i32, i32) {
    %c0_i32 = arith.constant 0 : i32
    %c0_i32_0 = arith.constant 0 : i32
    %c0_i32_1 = arith.constant 0 : i32
    return %c0_i32, %c0_i32_0 : i32, i32
  }
}

</mosaic_0001>

<llo_original>
// kernel: descriptor_feature_extractor_forward.1
$region0: #{descriptor_feature_extractor_forward.1}
  #allocation0 [shape = 'u32[]', space=smem, size = 0x4, offset = 0x4, fixed_abs, tag = 'smem constant byte address 0x4 - core index']
  #allocation1 [shape = 'u32[144,128]{1,0:T(1,128)}', space=vmem, size = 0x12000, scoped, tag = 'internal scratch']
  %s0 = inlined_call_operand.hbm [shape: f32[16,32], index: 0, kind: input, shape index: {}]
  %s1 = inlined_call_operand.hbm [shape: f32[32,1024], index: 1, kind: input, shape index: {}]
  %s2 = inlined_call_operand.hbm [shape: f32[1,1024], index: 2, kind: input, shape index: {}]
  %s3 = inlined_call_operand.hbm [shape: f32[1,1024], index: 3, kind: input, shape index: {}]
  %s4 = inlined_call_operand.hbm [shape: f32[1,1024], index: 4, kind: input, shape index: {}]
  %s5 = inlined_call_operand.hbm [shape: f32[1024,512], index: 5, kind: input, shape index: {}]
  %s6 = inlined_call_operand.hbm [shape: f32[1,512], index: 6, kind: input, shape index: {}]
  %s7 = inlined_call_operand.hbm [shape: f32[1,512], index: 7, kind: input, shape index: {}]
  %s8 = inlined_call_operand.hbm [shape: f32[1,512], index: 8, kind: input, shape index: {}]
  %s9 = inlined_call_operand.hbm [shape: f32[512,256], index: 9, kind: input, shape index: {}]
  %s10 = inlined_call_operand.hbm [shape: f32[1,256], index: 10, kind: input, shape index: {}]
  %s11 = inlined_call_operand.hbm [shape: f32[16,256], index: 11, kind: output, shape index: {}]
  %s12 = sld [smem:[#allocation0]]
  $region98: #{descriptor_feature_extractor_forward.1} parent=0
    _
  %s14 = ssub.s32 1, %s12
  %s15 = scalar_select 0, %s14, %s12
  $region1: #{descriptor_feature_extractor_forward.1} parent=0
    #allocation2 [shape = 'u8[8192]{0}', space=vmem, size = 0x2000, scoped, tag = 'input window, operand 0, single buffered']
    #allocation3 [shape = 's32[1]{0}', space=sflag, size = 0x4, scoped, tag = 'scoped memory for descriptor_feature_extractor_forward.1']
    #allocation4 [shape = 's32[1]{0}', space=sflag, size = 0x4, scoped, tag = 'scoped memory for descriptor_feature_extractor_forward.1']
    #allocation5 [shape = 'u8[131072]{0}', space=vmem, size = 0x20000, scoped, tag = 'input window, operand 1, single buffered']
    #allocation6 [shape = 's32[1]{0}', space=sflag, size = 0x4, scoped, tag = 'scoped memory for descriptor_feature_extractor_forward.1']
    #allocation7 [shape = 'u8[4096]{0}', space=vmem, size = 0x1000, scoped, tag = 'input window, operand 2, single buffered']
    #allocation8 [shape = 'u8[4096]{0}', space=vmem, size = 0x1000, scoped, tag = 'input window, operand 3, single buffered']
    #allocation9 [shape = 's32[1]{0}', space=sflag, size = 0x4, scoped, tag = 'scoped memory for descriptor_feature_extractor_forward.1']
    #allocation10 [shape = 'u8[4096]{0}', space=vmem, size = 0x1000, scoped, tag = 'input window, operand 4, single buffered']
    #allocation11 [shape = 'u8[2097152]{0}', space=vmem, size = 0x200000, scoped, tag = 'input window, operand 5, single buffered']
    #allocation12 [shape = 's32[1]{0}', space=sflag, size = 0x4, scoped, tag = 'scoped memory for descriptor_feature_extractor_forward.1']
    #allocation13 [shape = 'u8[2048]{0}', space=vmem, size = 0x800, scoped, tag = 'input window, operand 6, single buffered']
    #allocation14 [shape = 'u8[2048]{0}', space=vmem, size = 0x800, scoped, tag = 'input window, operand 7, single buffered']
    #allocation15 [shape = 's32[1]{0}', space=sflag, size = 0x4, scoped, tag = 'scoped memory for descriptor_feature_extractor_forward.1']
    #allocation16 [shape = 'u8[2048]{0}', space=vmem, size = 0x800, scoped, tag = 'input window, operand 8, single buffered']
    #allocation17 [shape = 'u8[524288]{0}', space=vmem, size = 0x80000, scoped, tag = 'input window, operand 9, single buffered']
    #allocation18 [shape = 's32[1]{0}', space=sflag, size = 0x4, scoped, tag = 'scoped memory for descriptor_feature_extractor_forward.1']
    #allocation19 [shape = 'u8[1024]{0}', space=vmem, size = 0x400, scoped, tag = 'input window, operand 10, single buffered']
    #allocation20 [shape = 'u8[16384]{0}', space=vmem, size = 0x4000, scoped, tag = 'output window, operand 0, single buffered']
    %16 = vsyncpa [#allocation3], 0
    %17 = vsyncpa [#allocation6], 0
    %18 = vsyncpa [#allocation9], 0
    %19 = vsyncpa [#allocation12], 0
    %20 = vsyncpa [#allocation15], 0
    %21 = vsyncpa [#allocation18], 0
    %22 = vsyncpa [#allocation4], 0
    // Predicated region
    $region2: #{descriptor_feature_extractor_forward.1} parent=1 // pred_check
      _
    $region3: #{descriptor_feature_extractor_forward.1} parent=1 // pred_check_branch
      %24 = sbr.rel (0) target = $region5
    $region4: #{descriptor_feature_extractor_forward.1} parent=1 // pred_region
      %s26 = ssub.s32 256, 256
      %27 = vsyncadd [#allocation3], %s26
      %s28 = sshll.u32 [#allocation2], 4
      %s29 = int_to_ptr.vmem [resolvable:$true] %s28
      %34 = dma.hbm_to_vmem [thread:$0]  %s0, 256, %s29, [#allocation3], 128, 128, 8
    $region5: #{descriptor_feature_extractor_forward.1} parent=1 // pred_fallthru
      _
    // Predicated region
    $region6: #{descriptor_feature_extractor_forward.1} parent=1 // pred_check
      _
    $region7: #{descriptor_feature_extractor_forward.1} parent=1 // pred_check_branch
      %36 = sbr.rel (0) target = $region9
    $region8: #{descriptor_feature_extractor_forward.1} parent=1 // pred_region
      %s38 = ssub.s32 4096, 4096
      %39 = vsyncadd [#allocation6], %s38
      %s40 = sshll.u32 [#allocation5], 4
      %s41 = int_to_ptr.vmem [resolvable:$true] %s40
      %46 = dma.hbm_to_vmem [thread:$0]  %s1, 4096, %s41, [#allocation6], 1024, 1024, 64
    $region9: #{descriptor_feature_extractor_forward.1} parent=1 // pred_fallthru
      _
    // Predicated region
    $region10: #{descriptor_feature_extractor_forward.1} parent=1 // pred_check
      _
    $region11: #{descriptor_feature_extractor_forward.1} parent=1 // pred_check_branch
      %48 = sbr.rel (0) target = $region13
    $region12: #{descriptor_feature_extractor_forward.1} parent=1 // pred_region
      %s50 = ssub.s32 128, 128
      %51 = vsyncadd [#allocation6], %s50
      %s53 = sshll.u32 [#allocation7], 4
      %s54 = int_to_ptr.vmem [resolvable:$true] %s53
      %56 = dma.hbm_to_vmem [thread:$0]  %s2, 128, %s54, [#allocation6]
    $region13: #{descriptor_feature_extractor_forward.1} parent=1 // pred_fallthru
      _
    // Predicated region
    $region14: #{descriptor_feature_extractor_forward.1} parent=1 // pred_check
      _
    $region15: #{descriptor_feature_extractor_forward.1} parent=1 // pred_check_branch
      %58 = sbr.rel (0) target = $region17
    $region16: #{descriptor_feature_extractor_forward.1} parent=1 // pred_region
      %s60 = ssub.s32 128, 128
      %61 = vsyncadd [#allocation9], %s60
      %s63 = sshll.u32 [#allocation8], 4
      %s64 = int_to_ptr.vmem [resolvable:$true] %s63
      %66 = dma.hbm_to_vmem [thread:$0]  %s3, 128, %s64, [#allocation9]
    $region17: #{descriptor_feature_extractor_forward.1} parent=1 // pred_fallthru
      _
    // Predicated region
    $region18: #{descriptor_feature_extractor_forward.1} parent=1 // pred_check
      _
    $region19: #{descriptor_feature_extractor_forward.1} parent=1 // pred_check_branch
      %68 = sbr.rel (0) target = $region21
    $region20: #{descriptor_feature_extractor_forward.1} parent=1 // pred_region
      %s70 = ssub.s32 128, 128
      %71 = vsyncadd [#allocation9], %s70
      %s73 = sshll.u32 [#allocation10], 4
      %s74 = int_to_ptr.vmem [resolvable:$true] %s73
      %76 = dma.hbm_to_vmem [thread:$0]  %s4, 128, %s74, [#allocation9]
    $region21: #{descriptor_feature_extractor_forward.1} parent=1 // pred_fallthru
      _
    // Predicated region
    $region22: #{descriptor_feature_extractor_forward.1} parent=1 // pred_check
      _
    $region23: #{descriptor_feature_extractor_forward.1} parent=1 // pred_check_branch
      %78 = sbr.rel (0) target = $region25
    $region24: #{descriptor_feature_extractor_forward.1} parent=1 // pred_region
      %s80 = ssub.s32 65536, 65536
      %81 = vsyncadd [#allocation12], %s80
      %s82 = sshll.u32 [#allocation11], 4
      %s83 = int_to_ptr.vmem [resolvable:$true] %s82
      %88 = dma.hbm_to_vmem [thread:$0]  %s5, 65536, %s83, [#allocation12], 512, 512, 32
    $region25: #{descriptor_feature_extractor_forward.1} parent=1 // pred_fallthru
      _
    // Predicated region
    $region26: #{descriptor_feature_extractor_forward.1} parent=1 // pred_check
      _
    $region27: #{descriptor_feature_extractor_forward.1} parent=1 // pred_check_branch
      %90 = sbr.rel (0) target = $region29
    $region28: #{descriptor_feature_extractor_forward.1} parent=1 // pred_region
      %s92 = ssub.s32 64, 64
      %93 = vsyncadd [#allocation12], %s92
      %s95 = sshll.u32 [#allocation13], 4
      %s96 = int_to_ptr.vmem [resolvable:$true] %s95
      %98 = dma.hbm_to_vmem [thread:$0]  %s6, 64, %s96, [#allocation12]
    $region29: #{descriptor_feature_extractor_forward.1} parent=1 // pred_fallthru
      _
    // Predicated region
    $region30: #{descriptor_feature_extractor_forward.1} parent=1 // pred_check
      _
    $region31: #{descriptor_feature_extractor_forward.1} parent=1 // pred_check_branch
      %100 = sbr.rel (0) target = $region33
    $region32: #{descriptor_feature_extractor_forward.1} parent=1 // pred_region
      %s102 = ssub.s32 64, 64
      %103 = vsyncadd [#allocation15], %s102
      %s105 = sshll.u32 [#allocation14], 4
      %s106 = int_to_ptr.vmem [resolvable:$true] %s105
      %108 = dma.hbm_to_vmem [thread:$0]  %s7, 64, %s106, [#allocation15]
    $region33: #{descriptor_feature_extractor_forward.1} parent=1 // pred_fallthru
      _
    // Predicated region
    $region34: #{descriptor_feature_extractor_forward.1} parent=1 // pred_check
      _
    $region35: #{descriptor_feature_extractor_forward.1} parent=1 // pred_check_branch
      %110 = sbr.rel (0) target = $region37
    $region36: #{descriptor_feature_extractor_forward.1} parent=1 // pred_region
      %s112 = ssub.s32 64, 64
      %113 = vsyncadd [#allocation15], %s112
      %s115 = sshll.u32 [#allocation16], 4
      %s116 = int_to_ptr.vmem [resolvable:$true] %s115
      %118 = dma.hbm_to_vmem [thread:$0]  %s8, 64, %s116, [#allocation15]
    $region37: #{descriptor_feature_extractor_forward.1} parent=1 // pred_fallthru
      _
    // Predicated region
    $region38: #{descriptor_feature_extractor_forward.1} parent=1 // pred_check
      _
    $region39: #{descriptor_feature_extractor_forward.1} parent=1 // pred_check_branch
      %120 = sbr.rel (0) target = $region41
    $region40: #{descriptor_feature_extractor_forward.1} parent=1 // pred_region
      %s122 = ssub.s32 16384, 16384
      %123 = vsyncadd [#allocation18], %s122
      %s124 = sshll.u32 [#allocation17], 4
      %s125 = int_to_ptr.vmem [resolvable:$true] %s124
      %130 = dma.hbm_to_vmem [thread:$0]  %s9, 16384, %s125, [#allocation18], 256, 256, 16
    $region41: #{descriptor_feature_extractor_forward.1} parent=1 // pred_fallthru
      _
    // Predicated region
    $region42: #{descriptor_feature_extractor_forward.1} parent=1 // pred_check
      _
    $region43: #{descriptor_feature_extractor_forward.1} parent=1 // pred_check_branch
      %132 = sbr.rel (0) target = $region45
    $region44: #{descriptor_feature_extractor_forward.1} parent=1 // pred_region
      %s134 = ssub.s32 32, 32
      %135 = vsyncadd [#allocation18], %s134
      %s137 = sshll.u32 [#allocation19], 4
      %s138 = int_to_ptr.vmem [resolvable:$true] %s137
      %140 = dma.hbm_to_vmem [thread:$0]  %s10, 32, %s138, [#allocation18]
    $region45: #{descriptor_feature_extractor_forward.1} parent=1 // pred_fallthru
      _
    // Predicated region
    $region46: #{descriptor_feature_extractor_forward.1} parent=1 // pred_check
      _
    $region47: #{descriptor_feature_extractor_forward.1} parent=1 // pred_check_branch
      %142 = sbr.rel (0) target = $region49
    $region48: #{descriptor_feature_extractor_forward.1} parent=1 // pred_region
      %143 = dma.done [#allocation3], 256
    $region49: #{descriptor_feature_extractor_forward.1} parent=1 // pred_fallthru
      _
    // Predicated region
    $region50: #{descriptor_feature_extractor_forward.1} parent=1 // pred_check
      _
    $region51: #{descriptor_feature_extractor_forward.1} parent=1 // pred_check_branch
      %145 = sbr.rel (0) target = $region53
    $region52: #{descriptor_feature_extractor_forward.1} parent=1 // pred_region
      %146 = dma.done [#allocation6], 4096
    $region53: #{descriptor_feature_extractor_forward.1} parent=1 // pred_fallthru
      _
    // Predicated region
    $region54: #{descriptor_feature_extractor_forward.1} parent=1 // pred_check
      _
    $region55: #{descriptor_feature_extractor_forward.1} parent=1 // pred_check_branch
      %148 = sbr.rel (0) target = $region57
    $region56: #{descriptor_feature_extractor_forward.1} parent=1 // pred_region
      %149 = dma.done [#allocation6], 128
    $region57: #{descriptor_feature_extractor_forward.1} parent=1 // pred_fallthru
      _
    // Predicated region
    $region58: #{descriptor_feature_extractor_forward.1} parent=1 // pred_check
      _
    $region59: #{descriptor_feature_extractor_forward.1} parent=1 // pred_check_branch
      %151 = sbr.rel (0) target = $region61
    $region60: #{descriptor_feature_extractor_forward.1} parent=1 // pred_region
      %152 = dma.done [#allocation9], 128
    $region61: #{descriptor_feature_extractor_forward.1} parent=1 // pred_fallthru
      _
    // Predicated region
    $region62: #{descriptor_feature_extractor_forward.1} parent=1 // pred_check
      _
    $region63: #{descriptor_feature_extractor_forward.1} parent=1 // pred_check_branch
      %154 = sbr.rel (0) target = $region65
    $region64: #{descriptor_feature_extractor_forward.1} parent=1 // pred_region
      %155 = dma.done [#allocation9], 128
    $region65: #{descriptor_feature_extractor_forward.1} parent=1 // pred_fallthru
      _
    // Predicated region
    $region66: #{descriptor_feature_extractor_forward.1} parent=1 // pred_check
      _
    $region67: #{descriptor_feature_extractor_forward.1} parent=1 // pred_check_branch
      %157 = sbr.rel (0) target = $region69
    $region68: #{descriptor_feature_extractor_forward.1} parent=1 // pred_region
      %158 = dma.done [#allocation12], 65536
    $region69: #{descriptor_feature_extractor_forward.1} parent=1 // pred_fallthru
      _
    // Predicated region
    $region70: #{descriptor_feature_extractor_forward.1} parent=1 // pred_check
      _
    $region71: #{descriptor_feature_extractor_forward.1} parent=1 // pred_check_branch
      %160 = sbr.rel (0) target = $region73
    $region72: #{descriptor_feature_extractor_forward.1} parent=1 // pred_region
      %161 = dma.done [#allocation12], 64
    $region73: #{descriptor_feature_extractor_forward.1} parent=1 // pred_fallthru
      _
    // Predicated region
    $region74: #{descriptor_feature_extractor_forward.1} parent=1 // pred_check
      _
    $region75: #{descriptor_feature_extractor_forward.1} parent=1 // pred_check_branch
      %163 = sbr.rel (0) target = $region77
    $region76: #{descriptor_feature_extractor_forward.1} parent=1 // pred_region
      %164 = dma.done [#allocation15], 64
    $region77: #{descriptor_feature_extractor_forward.1} parent=1 // pred_fallthru
      _
    // Predicated region
    $region78: #{descriptor_feature_extractor_forward.1} parent=1 // pred_check
      _
    $region79: #{descriptor_feature_extractor_forward.1} parent=1 // pred_check_branch
      %166 = sbr.rel (0) target = $region81
    $region80: #{descriptor_feature_extractor_forward.1} parent=1 // pred_region
      %167 = dma.done [#allocation15], 64
    $region81: #{descriptor_feature_extractor_forward.1} parent=1 // pred_fallthru
      _
    // Predicated region
    $region82: #{descriptor_feature_extractor_forward.1} parent=1 // pred_check
      _
    $region83: #{descriptor_feature_extractor_forward.1} parent=1 // pred_check_branch
      %169 = sbr.rel (0) target = $region85
    $region84: #{descriptor_feature_extractor_forward.1} parent=1 // pred_region
      %170 = dma.done [#allocation18], 16384
    $region85: #{descriptor_feature_extractor_forward.1} parent=1 // pred_fallthru
      _
    // Predicated region
    $region86: #{descriptor_feature_extractor_forward.1} parent=1 // pred_check
      _
    $region87: #{descriptor_feature_extractor_forward.1} parent=1 // pred_check_branch
      %172 = sbr.rel (0) target = $region89
    $region88: #{descriptor_feature_extractor_forward.1} parent=1 // pred_region
      %173 = dma.done [#allocation18], 32
    $region89: #{descriptor_feature_extractor_forward.1} parent=1 // pred_fallthru
      _
    %v174 = vld [vmem:[#allocation2] sm:$0xff]
    %v175 = vld [vmem:[#allocation2 + $0x8] sm:$0xff]
    %v176 = vld [vmem:[#allocation5] sm:$0xff]
    %v177 = vld [vmem:[#allocation5 + $0x8] sm:$0xff]
    %v178 = vld [vmem:[#allocation5 + $0x10] sm:$0xff]
    %v179 = vld [vmem:[#allocation5 + $0x18] sm:$0xff]
    %v180 = vld [vmem:[#allocation5 + $0x20] sm:$0xff]
    %v181 = vld [vmem:[#allocation5 + $0x28] sm:$0xff]
    %v182 = vld [vmem:[#allocation5 + $0x30] sm:$0xff]
    %v183 = vld [vmem:[#allocation5 + $0x38] sm:$0xff]
    %v184 = vld [vmem:[#allocation5 + $0x40] sm:$0xff]
    %v185 = vld [vmem:[#allocation5 + $0x48] sm:$0xff]
    %v186 = vld [vmem:[#allocation5 + $0x50] sm:$0xff]
    %v187 = vld [vmem:[#allocation5 + $0x58] sm:$0xff]
    %v188 = vld [vmem:[#allocation5 + $0x60] sm:$0xff]
    %v189 = vld [vmem:[#allocation5 + $0x68] sm:$0xff]
    %v190 = vld [vmem:[#allocation5 + $0x70] sm:$0xff]
    %v191 = vld [vmem:[#allocation5 + $0x78] sm:$0xff]
    %v192 = vld [vmem:[#allocation5 + $0x80] sm:$0xff]
    %v193 = vld [vmem:[#allocation5 + $0x88] sm:$0xff]
    %v194 = vld [vmem:[#allocation5 + $0x90] sm:$0xff]
    %v195 = vld [vmem:[#allocation5 + $0x98] sm:$0xff]
    %v196 = vld [vmem:[#allocation5 + $0xa0] sm:$0xff]
    %v197 = vld [vmem:[#allocation5 + $0xa8] sm:$0xff]
    %v198 = vld [vmem:[#allocation5 + $0xb0] sm:$0xff]
    %v199 = vld [vmem:[#allocation5 + $0xb8] sm:$0xff]
    %v200 = vld [vmem:[#allocation5 + $0xc0] sm:$0xff]
    %v201 = vld [vmem:[#allocation5 + $0xc8] sm:$0xff]
    %v202 = vld [vmem:[#allocation5 + $0xd0] sm:$0xff]
    %v203 = vld [vmem:[#allocation5 + $0xd8] sm:$0xff]
    %v204 = vld [vmem:[#allocation5 + $0xe0] sm:$0xff]
    %v205 = vld [vmem:[#allocation5 + $0xe8] sm:$0xff]
    %v206 = vld [vmem:[#allocation5 + $0xf0] sm:$0xff]
    %v207 = vld [vmem:[#allocation5 + $0xf8] sm:$0xff]
    %v208 = vld [vmem:[#allocation7] sm:$0xff]
    %v210 = vlaneseq
    %v211 = vshrl.u32 %v210, 7
    %v212 = vsub.s32 0, %v211
    %v213 = vrot.slane %v208, %v212
    %v214 = vlaneseq
    %v215 = vshrl.u32 %v214, 7
    %v216 = vsub.s32 1, %v215
    %v217 = vrot.slane %v208, %v216
    %v218 = vlaneseq
    %v219 = vshrl.u32 %v218, 7
    %v220 = vsub.s32 2, %v219
    %v221 = vrot.slane %v208, %v220
    %v222 = vlaneseq
    %v223 = vshrl.u32 %v222, 7
    %v224 = vsub.s32 3, %v223
    %v225 = vrot.slane %v208, %v224
    %v226 = vlaneseq
    %v227 = vshrl.u32 %v226, 7
    %v228 = vsub.s32 4, %v227
    %v229 = vrot.slane %v208, %v228
    %v230 = vlaneseq
    %v231 = vshrl.u32 %v230, 7
    %v232 = vsub.s32 5, %v231
    %v233 = vrot.slane %v208, %v232
    %v234 = vlaneseq
    %v235 = vshrl.u32 %v234, 7
    %v236 = vsub.s32 6, %v235
    %v237 = vrot.slane %v208, %v236
    %v238 = vlaneseq
    %v239 = vshrl.u32 %v238, 7
    %v240 = vsub.s32 7, %v239
    %v241 = vrot.slane %v208, %v240
    %vm250 = vcmask 261120
    %v252 = vsel %vm250, %v174, 0
    %v255 = vsel %vm250, %v175, 0
    %257 = vmatprep.subr.mxu0 0.0
    %258 = vmatpush1.msra.mxu0 0.0
    %259 = vmatprep.subr.mxu0 0.0
    %260 = vmatpush1.msra.mxu0 0.0
    %261 = vmatprep.subr.mxu0 0.0
    %262 = vmatpush1.msra.mxu0 0.0
    %263 = vmatprep.subr.mxu0 0.0
    %264 = vmatpush1.msra.mxu0 0.0
    %265 = vmatprep.subr.mxu0 0.0
    %266 = vmatpush1.msra.mxu0 0.0
    %267 = vmatprep.subr.mxu0 0.0
    %268 = vmatpush1.msra.mxu0 0.0
    %269 = vmatprep.subr.mxu0 0.0
    %270 = vmatpush1.msra.mxu0 0.0
    %271 = vmatprep.subr.mxu0 0.0
    %272 = vmatpush1.msra.mxu0 0.0
    %273 = vmatprep.subr.mxu0 0.0
    %274 = vmatpush1.msra.mxu0 0.0
    %275 = vmatprep.subr.mxu0 0.0
    %276 = vmatpush1.msra.mxu0 0.0
    %277 = vmatprep.subr.mxu0 0.0
    %278 = vmatpush1.msra.mxu0 0.0
    %279 = vmatprep.subr.mxu0 0.0
    %280 = vmatpush1.msra.mxu0 0.0
    %281 = vmatprep.subr.mxu0 %v201
    %282 = vmatpush1.msra.mxu0 %v200
    %283 = vmatprep.subr.mxu0 %v193
    %284 = vmatpush1.msra.mxu0 %v192
    %285 = vmatprep.subr.mxu0 %v185
    %286 = vmatpush1.msra.mxu0 %v184
    %287 = vmatprep.subr.mxu0 %v177
    %288 = vmatpush1.msra.mxu0 %v176
    %289 = vmatprep.subr.mxu0 0.0
    %290 = vmatpush2.msra.mxu0 0.0
    %291 = vmatprep.subr.mxu0 0.0
    %292 = vmatpush2.msra.mxu0 0.0
    %293 = vmatprep.subr.mxu0 0.0
    %294 = vmatpush2.msra.mxu0 0.0
    %295 = vmatprep.subr.mxu0 0.0
    %296 = vmatpush2.msra.mxu0 0.0
    %297 = vmatprep.subr.mxu0 0.0
    %298 = vmatpush2.msra.mxu0 0.0
    %299 = vmatprep.subr.mxu0 0.0
    %300 = vmatpush2.msra.mxu0 0.0
    %301 = vmatprep.subr.mxu0 0.0
    %302 = vmatpush2.msra.mxu0 0.0
    %303 = vmatprep.subr.mxu0 0.0
    %304 = vmatpush2.msra.mxu0 0.0
    %305 = vmatprep.subr.mxu0 0.0
    %306 = vmatpush2.msra.mxu0 0.0
    %307 = vmatprep.subr.mxu0 0.0
    %308 = vmatpush2.msra.mxu0 0.0
    %309 = vmatprep.subr.mxu0 0.0
    %310 = vmatpush2.msra.mxu0 0.0
    %311 = vmatprep.subr.mxu0 0.0
    %312 = vmatpush2.msra.mxu0 0.0
    %313 = vmatprep.subr.mxu0 0.0
    %314 = vmatpush2.msra.mxu0 0.0
    %315 = vmatprep.subr.mxu0 0.0
    %316 = vmatpush2.msra.mxu0 0.0
    %317 = vmatprep.subr.mxu0 0.0
    %318 = vmatpush2.msra.mxu0 0.0
    %319 = vmatprep.subr.mxu0 0.0
    %320 = vmatpush2.msra.mxu0 0.0
    %321 = vmatprep.mubr.f32.mxu0 0.0
    %322 = vmatmul.mubr.f32.gmra.mxu0 %v252
    %v323 = vpop.f32.mrf.mxu0
    %v324 = vadd.f32 %v213, %v323
    %v325 = vpop.f32.mrf.mxu0
    %v326 = vadd.f32 %v217, %v325
    %327 = vmatprep.mubr.f32.mxu0 0.0
    %328 = vmatmul.mubr.f32.gmra.mxu0 %v255
    %v329 = vpop.f32.mrf.mxu0
    %v330 = vadd.f32 %v213, %v329
    %v331 = vpop.f32.mrf.mxu0
    %v332 = vadd.f32 %v217, %v331
    %333 = vdwg.mxu0
    %334 = vmatprep.subr.mxu0 0.0
    %335 = vmatpush1.msra.mxu0 0.0
    %336 = vmatprep.subr.mxu0 0.0
    %337 = vmatpush1.msra.mxu0 0.0
    %338 = vmatprep.subr.mxu0 0.0
    %339 = vmatpush1.msra.mxu0 0.0
    %340 = vmatprep.subr.mxu0 0.0
    %341 = vmatpush1.msra.mxu0 0.0
    %342 = vmatprep.subr.mxu0 0.0
    %343 = vmatpush1.msra.mxu0 0.0
    %344 = vmatprep.subr.mxu0 0.0
    %345 = vmatpush1.msra.mxu0 0.0
    %346 = vmatprep.subr.mxu0 0.0
    %347 = vmatpush1.msra.mxu0 0.0
    %348 = vmatprep.subr.mxu0 0.0
    %349 = vmatpush1.msra.mxu0 0.0
    %350 = vmatprep.subr.mxu0 0.0
    %351 = vmatpush1.msra.mxu0 0.0
    %352 = vmatprep.subr.mxu0 0.0
    %353 = vmatpush1.msra.mxu0 0.0
    %354 = vmatprep.subr.mxu0 0.0
    %355 = vmatpush1.msra.mxu0 0.0
    %356 = vmatprep.subr.mxu0 0.0
    %357 = vmatpush1.msra.mxu0 0.0
    %358 = vmatprep.subr.mxu0 %v203
    %359 = vmatpush1.msra.mxu0 %v202
    %360 = vmatprep.subr.mxu0 %v195
    %361 = vmatpush1.msra.mxu0 %v194
    %362 = vmatprep.subr.mxu0 %v187
    %363 = vmatpush1.msra.mxu0 %v186
    %364 = vmatprep.subr.mxu0 %v179
    %365 = vmatpush1.msra.mxu0 %v178
    %366 = vmatprep.subr.mxu0 0.0
    %367 = vmatpush2.msra.mxu0 0.0
    %368 = vmatprep.subr.mxu0 0.0
    %369 = vmatpush2.msra.mxu0 0.0
    %370 = vmatprep.subr.mxu0 0.0
    %371 = vmatpush2.msra.mxu0 0.0
    %372 = vmatprep.subr.mxu0 0.0
    %373 = vmatpush2.msra.mxu0 0.0
    %374 = vmatprep.subr.mxu0 0.0
    %375 = vmatpush2.msra.mxu0 0.0
    %376 = vmatprep.subr.mxu0 0.0
    %377 = vmatpush2.msra.mxu0 0.0
    %378 = vmatprep.subr.mxu0 0.0
    %379 = vmatpush2.msra.mxu0 0.0
    %380 = vmatprep.subr.mxu0 0.0
    %381 = vmatpush2.msra.mxu0 0.0
    %382 = vmatprep.subr.mxu0 0.0
    %383 = vmatpush2.msra.mxu0 0.0
    %384 = vmatprep.subr.mxu0 0.0
    %385 = vmatpush2.msra.mxu0 0.0
    %386 = vmatprep.subr.mxu0 0.0
    %387 = vmatpush2.msra.mxu0 0.0
    %388 = vmatprep.subr.mxu0 0.0
    %389 = vmatpush2.msra.mxu0 0.0
    %390 = vmatprep.subr.mxu0 0.0
    %391 = vmatpush2.msra.mxu0 0.0
    %392 = vmatprep.subr.mxu0 0.0
    %393 = vmatpush2.msra.mxu0 0.0
    %394 = vmatprep.subr.mxu0 0.0
    %395 = vmatpush2.msra.mxu0 0.0
    %396 = vmatprep.subr.mxu0 0.0
    %397 = vmatpush2.msra.mxu0 0.0
    %398 = vmatprep.mubr.f32.mxu0 0.0
    %399 = vmatmul.mubr.f32.gmra.mxu0 %v252
    %v400 = vpop.f32.mrf.mxu0
    %v401 = vadd.f32 %v221, %v400
    %v402 = vpop.f32.mrf.mxu0
    %v403 = vadd.f32 %v225, %v402
    %404 = vmatprep.mubr.f32.mxu0 0.0
    %405 = vmatmul.mubr.f32.gmra.mxu0 %v255
    %v406 = vpop.f32.mrf.mxu0
    %v407 = vadd.f32 %v221, %v406
    %v408 = vpop.f32.mrf.mxu0
    %v409 = vadd.f32 %v225, %v408
    %410 = vdwg.mxu0
    %411 = vmatprep.subr.mxu0 0.0
    %412 = vmatpush1.msra.mxu0 0.0
    %413 = vmatprep.subr.mxu0 0.0
    %414 = vmatpush1.msra.mxu0 0.0
    %415 = vmatprep.subr.mxu0 0.0
    %416 = vmatpush1.msra.mxu0 0.0
    %417 = vmatprep.subr.mxu0 0.0
    %418 = vmatpush1.msra.mxu0 0.0
    %419 = vmatprep.subr.mxu0 0.0
    %420 = vmatpush1.msra.mxu0 0.0
    %421 = vmatprep.subr.mxu0 0.0
    %422 = vmatpush1.msra.mxu0 0.0
    %423 = vmatprep.subr.mxu0 0.0
    %424 = vmatpush1.msra.mxu0 0.0
    %425 = vmatprep.subr.mxu0 0.0
    %426 = vmatpush1.msra.mxu0 0.0
    %427 = vmatprep.subr.mxu0 0.0
    %428 = vmatpush1.msra.mxu0 0.0
    %429 = vmatprep.subr.mxu0 0.0
    %430 = vmatpush1.msra.mxu0 0.0
    %431 = vmatprep.subr.mxu0 0.0
    %432 = vmatpush1.msra.mxu0 0.0
    %433 = vmatprep.subr.mxu0 0.0
    %434 = vmatpush1.msra.mxu0 0.0
    %435 = vmatprep.subr.mxu0 %v205
    %436 = vmatpush1.msra.mxu0 %v204
    %437 = vmatprep.subr.mxu0 %v197
    %438 = vmatpush1.msra.mxu0 %v196
    %439 = vmatprep.subr.mxu0 %v189
    %440 = vmatpush1.msra.mxu0 %v188
    %441 = vmatprep.subr.mxu0 %v181
    %442 = vmatpush1.msra.mxu0 %v180
    %443 = vmatprep.subr.mxu0 0.0
    %444 = vmatpush2.msra.mxu0 0.0
    %445 = vmatprep.subr.mxu0 0.0
    %446 = vmatpush2.msra.mxu0 0.0
    %447 = vmatprep.subr.mxu0 0.0
    %448 = vmatpush2.msra.mxu0 0.0
    %449 = vmatprep.subr.mxu0 0.0
    %450 = vmatpush2.msra.mxu0 0.0
    %451 = vmatprep.subr.mxu0 0.0
    %452 = vmatpush2.msra.mxu0 0.0
    %453 = vmatprep.subr.mxu0 0.0
    %454 = vmatpush2.msra.mxu0 0.0
    %455 = vmatprep.subr.mxu0 0.0
    %456 = vmatpush2.msra.mxu0 0.0
    %457 = vmatprep.subr.mxu0 0.0
    %458 = vmatpush2.msra.mxu0 0.0
    %459 = vmatprep.subr.mxu0 0.0
    %460 = vmatpush2.msra.mxu0 0.0
    %461 = vmatprep.subr.mxu0 0.0
    %462 = vmatpush2.msra.mxu0 0.0
    %463 = vmatprep.subr.mxu0 0.0
    %464 = vmatpush2.msra.mxu0 0.0
    %465 = vmatprep.subr.mxu0 0.0
    %466 = vmatpush2.msra.mxu0 0.0
    %467 = vmatprep.subr.mxu0 0.0
    %468 = vmatpush2.msra.mxu0 0.0
    %469 = vmatprep.subr.mxu0 0.0
    %470 = vmatpush2.msra.mxu0 0.0
    %471 = vmatprep.subr.mxu0 0.0
    %472 = vmatpush2.msra.mxu0 0.0
    %473 = vmatprep.subr.mxu0 0.0
    %474 = vmatpush2.msra.mxu0 0.0
    %475 = vmatprep.mubr.f32.mxu0 0.0
    %476 = vmatmul.mubr.f32.gmra.mxu0 %v252
    %v477 = vpop.f32.mrf.mxu0
    %v478 = vadd.f32 %v229, %v477
    %v479 = vpop.f32.mrf.mxu0
    %v480 = vadd.f32 %v233, %v479
    %481 = vmatprep.mubr.f32.mxu0 0.0
    %482 = vmatmul.mubr.f32.gmra.mxu0 %v255
    %v483 = vpop.f32.mrf.mxu0
    %v484 = vadd.f32 %v229, %v483
    %v485 = vpop.f32.mrf.mxu0
    %v486 = vadd.f32 %v233, %v485
    %487 = vdwg.mxu0
    %488 = vmatprep.subr.mxu0 0.0
    %489 = vmatpush1.msra.mxu0 0.0
    %490 = vmatprep.subr.mxu0 0.0
    %491 = vmatpush1.msra.mxu0 0.0
    %492 = vmatprep.subr.mxu0 0.0
    %493 = vmatpush1.msra.mxu0 0.0
    %494 = vmatprep.subr.mxu0 0.0
    %495 = vmatpush1.msra.mxu0 0.0
    %496 = vmatprep.subr.mxu0 0.0
    %497 = vmatpush1.msra.mxu0 0.0
    %498 = vmatprep.subr.mxu0 0.0
    %499 = vmatpush1.msra.mxu0 0.0
    %500 = vmatprep.subr.mxu0 0.0
    %501 = vmatpush1.msra.mxu0 0.0
    %502 = vmatprep.subr.mxu0 0.0
    %503 = vmatpush1.msra.mxu0 0.0
    %504 = vmatprep.subr.mxu0 0.0
    %505 = vmatpush1.msra.mxu0 0.0
    %506 = vmatprep.subr.mxu0 0.0
    %507 = vmatpush1.msra.mxu0 0.0
    %508 = vmatprep.subr.mxu0 0.0
    %509 = vmatpush1.msra.mxu0 0.0
    %510 = vmatprep.subr.mxu0 0.0
    %511 = vmatpush1.msra.mxu0 0.0
    %512 = vmatprep.subr.mxu0 %v207
    %513 = vmatpush1.msra.mxu0 %v206
    %514 = vmatprep.subr.mxu0 %v199
    %515 = vmatpush1.msra.mxu0 %v198
    %516 = vmatprep.subr.mxu0 %v191
    %517 = vmatpush1.msra.mxu0 %v190
    %518 = vmatprep.subr.mxu0 %v183
    %519 = vmatpush1.msra.mxu0 %v182
    %520 = vmatprep.subr.mxu0 0.0
    %521 = vmatpush2.msra.mxu0 0.0
    %522 = vmatprep.subr.mxu0 0.0
    %523 = vmatpush2.msra.mxu0 0.0
    %524 = vmatprep.subr.mxu0 0.0
    %525 = vmatpush2.msra.mxu0 0.0
    %526 = vmatprep.subr.mxu0 0.0
    %527 = vmatpush2.msra.mxu0 0.0
    %528 = vmatprep.subr.mxu0 0.0
    %529 = vmatpush2.msra.mxu0 0.0
    %530 = vmatprep.subr.mxu0 0.0
    %531 = vmatpush2.msra.mxu0 0.0
    %532 = vmatprep.subr.mxu0 0.0
    %533 = vmatpush2.msra.mxu0 0.0
    %534 = vmatprep.subr.mxu0 0.0
    %535 = vmatpush2.msra.mxu0 0.0
    %536 = vmatprep.subr.mxu0 0.0
    %537 = vmatpush2.msra.mxu0 0.0
    %538 = vmatprep.subr.mxu0 0.0
    %539 = vmatpush2.msra.mxu0 0.0
    %540 = vmatprep.subr.mxu0 0.0
    %541 = vmatpush2.msra.mxu0 0.0
    %542 = vmatprep.subr.mxu0 0.0
    %543 = vmatpush2.msra.mxu0 0.0
    %544 = vmatprep.subr.mxu0 0.0
    %545 = vmatpush2.msra.mxu0 0.0
    %546 = vmatprep.subr.mxu0 0.0
    %547 = vmatpush2.msra.mxu0 0.0
    %548 = vmatprep.subr.mxu0 0.0
    %549 = vmatpush2.msra.mxu0 0.0
    %550 = vmatprep.subr.mxu0 0.0
    %551 = vmatpush2.msra.mxu0 0.0
    %552 = vmatprep.mubr.f32.mxu0 0.0
    %553 = vmatmul.mubr.f32.gmra.mxu0 %v252
    %v554 = vpop.f32.mrf.mxu0
    %v555 = vadd.f32 %v237, %v554
    %v556 = vpop.f32.mrf.mxu0
    %v557 = vadd.f32 %v241, %v556
    %558 = vmatprep.mubr.f32.mxu0 0.0
    %559 = vmatmul.mubr.f32.gmra.mxu0 %v255
    %v560 = vpop.f32.mrf.mxu0
    %v561 = vadd.f32 %v237, %v560
    %v562 = vpop.f32.mrf.mxu0
    %v563 = vadd.f32 %v241, %v562
    %564 = vdwg.mxu0
    %v565 = vld [vmem:[#allocation8] sm:$0xff]
    %v566 = vld [vmem:[#allocation10] sm:$0xff]
    %v567 = vadd.f32 %v324, %v330
    %v568 = vrot.slane %v567, 4
    %v569 = vadd.f32 %v567, %v568
    %v570 = vrot.slane %v569, 2
    %v571 = vadd.f32 %v569, %v570
    %v572 = vrot.slane %v571, 1
    %v573 = vadd.f32 %v571, %v572
    %v574 = vadd.f32 %v326, %v332
    %v575 = vrot.slane %v574, 4
    %v576 = vadd.f32 %v574, %v575
    %v577 = vrot.slane %v576, 2
    %v578 = vadd.f32 %v576, %v577
    %v579 = vrot.slane %v578, 1
    %v580 = vadd.f32 %v578, %v579
    %v581 = vadd.f32 %v401, %v407
    %v582 = vrot.slane %v581, 4
    %v583 = vadd.f32 %v581, %v582
    %v584 = vrot.slane %v583, 2
    %v585 = vadd.f32 %v583, %v584
    %v586 = vrot.slane %v585, 1
    %v587 = vadd.f32 %v585, %v586
    %v588 = vadd.f32 %v403, %v409
    %v589 = vrot.slane %v588, 4
    %v590 = vadd.f32 %v588, %v589
    %v591 = vrot.slane %v590, 2
    %v592 = vadd.f32 %v590, %v591
    %v593 = vrot.slane %v592, 1
    %v594 = vadd.f32 %v592, %v593
    %v595 = vadd.f32 %v478, %v484
    %v596 = vrot.slane %v595, 4
    %v597 = vadd.f32 %v595, %v596
    %v598 = vrot.slane %v597, 2
    %v599 = vadd.f32 %v597, %v598
    %v600 = vrot.slane %v599, 1
    %v601 = vadd.f32 %v599, %v600
    %v602 = vadd.f32 %v480, %v486
    %v603 = vrot.slane %v602, 4
    %v604 = vadd.f32 %v602, %v603
    %v605 = vrot.slane %v604, 2
    %v606 = vadd.f32 %v604, %v605
    %v607 = vrot.slane %v606, 1
    %v608 = vadd.f32 %v606, %v607
    %v609 = vadd.f32 %v555, %v561
    %v610 = vrot.slane %v609, 4
    %v611 = vadd.f32 %v609, %v610
    %v612 = vrot.slane %v611, 2
    %v613 = vadd.f32 %v611, %v612
    %v614 = vrot.slane %v613, 1
    %v615 = vadd.f32 %v613, %v614
    %v616 = vadd.f32 %v557, %v563
    %v617 = vrot.slane %v616, 4
    %v618 = vadd.f32 %v616, %v617
    %v619 = vrot.slane %v618, 2
    %v620 = vadd.f32 %v618, %v619
    %v621 = vrot.slane %v620, 1
    %v622 = vadd.f32 %v620, %v621
    %v623 = vrcp.pop 16.0
    %v624 = vmul.f32 %v573, %v623
    %v625 = vmul.f32 %v580, %v623
    %v626 = vmul.f32 %v587, %v623
    %v627 = vmul.f32 %v594, %v623
    %v628 = vmul.f32 %v601, %v623
    %v629 = vmul.f32 %v608, %v623
    %v630 = vmul.f32 %v615, %v623
    %v631 = vmul.f32 %v622, %v623
    %v632 = vmul.f32 %v324, %v324
    %v633 = vmul.f32 %v326, %v326
    %v634 = vmul.f32 %v401, %v401
    %v635 = vmul.f32 %v403, %v403
    %v636 = vmul.f32 %v478, %v478
    %v637 = vmul.f32 %v480, %v480
    %v638 = vmul.f32 %v555, %v555
    %v639 = vmul.f32 %v557, %v557
    %v640 = vmul.f32 %v330, %v330
    %v641 = vmul.f32 %v332, %v332
    %v642 = vmul.f32 %v407, %v407
    %v643 = vmul.f32 %v409, %v409
    %v644 = vmul.f32 %v484, %v484
    %v645 = vmul.f32 %v486, %v486
    %v646 = vmul.f32 %v561, %v561
    %v647 = vmul.f32 %v563, %v563
    %v648 = vadd.f32 %v632, %v640
    %v649 = vrot.slane %v648, 4
    %v650 = vadd.f32 %v648, %v649
    %v651 = vrot.slane %v650, 2
    %v652 = vadd.f32 %v650, %v651
    %v653 = vrot.slane %v652, 1
    %v654 = vadd.f32 %v652, %v653
    %v655 = vadd.f32 %v633, %v641
    %v656 = vrot.slane %v655, 4
    %v657 = vadd.f32 %v655, %v656
    %v658 = vrot.slane %v657, 2
    %v659 = vadd.f32 %v657, %v658
    %v660 = vrot.slane %v659, 1
    %v661 = vadd.f32 %v659, %v660
    %v662 = vadd.f32 %v634, %v642
    %v663 = vrot.slane %v662, 4
    %v664 = vadd.f32 %v662, %v663
    %v665 = vrot.slane %v664, 2
    %v666 = vadd.f32 %v664, %v665
    %v667 = vrot.slane %v666, 1
    %v668 = vadd.f32 %v666, %v667
    %v669 = vadd.f32 %v635, %v643
    %v670 = vrot.slane %v669, 4
    %v671 = vadd.f32 %v669, %v670
    %v672 = vrot.slane %v671, 2
    %v673 = vadd.f32 %v671, %v672
    %v674 = vrot.slane %v673, 1
    %v675 = vadd.f32 %v673, %v674
    %v676 = vadd.f32 %v636, %v644
    %v677 = vrot.slane %v676, 4
    %v678 = vadd.f32 %v676, %v677
    %v679 = vrot.slane %v678, 2
    %v680 = vadd.f32 %v678, %v679
    %v681 = vrot.slane %v680, 1
    %v682 = vadd.f32 %v680, %v681
    %v683 = vadd.f32 %v637, %v645
    %v684 = vrot.slane %v683, 4
    %v685 = vadd.f32 %v683, %v684
    %v686 = vrot.slane %v685, 2
    %v687 = vadd.f32 %v685, %v686
    %v688 = vrot.slane %v687, 1
    %v689 = vadd.f32 %v687, %v688
    %v690 = vadd.f32 %v638, %v646
    %v691 = vrot.slane %v690, 4
    %v692 = vadd.f32 %v690, %v691
    %v693 = vrot.slane %v692, 2
    %v694 = vadd.f32 %v692, %v693
    %v695 = vrot.slane %v694, 1
    %v696 = vadd.f32 %v694, %v695
    %v697 = vadd.f32 %v639, %v647
    %v698 = vrot.slane %v697, 4
    %v699 = vadd.f32 %v697, %v698
    %v700 = vrot.slane %v699, 2
    %v701 = vadd.f32 %v699, %v700
    %v702 = vrot.slane %v701, 1
    %v703 = vadd.f32 %v701, %v702
    %v704 = vmul.f32 %v654, %v623
    %v705 = vmul.f32 %v661, %v623
    %v706 = vmul.f32 %v668, %v623
    %v707 = vmul.f32 %v675, %v623
    %v708 = vmul.f32 %v682, %v623
    %v709 = vmul.f32 %v689, %v623
    %v710 = vmul.f32 %v696, %v623
    %v711 = vmul.f32 %v703, %v623
    %v712 = vmul.f32 %v624, %v624
    %v713 = vmul.f32 %v625, %v625
    %v714 = vmul.f32 %v626, %v626
    %v715 = vmul.f32 %v627, %v627
    %v716 = vmul.f32 %v628, %v628
    %v717 = vmul.f32 %v629, %v629
    %v718 = vmul.f32 %v630, %v630
    %v719 = vmul.f32 %v631, %v631
    %v720 = vsub.f32 %v704, %v712
    %v721 = vsub.f32 %v705, %v713
    %v722 = vsub.f32 %v706, %v714
    %v723 = vsub.f32 %v707, %v715
    %v724 = vsub.f32 %v708, %v716
    %v725 = vsub.f32 %v709, %v717
    %v726 = vsub.f32 %v710, %v718
    %v727 = vsub.f32 %v711, %v719
    %v728 = vmax.f32 %v720, 0.0
    %v729 = vmax.f32 %v721, 0.0
    %v730 = vmax.f32 %v722, 0.0
    %v731 = vmax.f32 %v723, 0.0
    %v732 = vmax.f32 %v724, 0.0
    %v733 = vmax.f32 %v725, 0.0
    %v734 = vmax.f32 %v726, 0.0
    %v735 = vmax.f32 %v727, 0.0
    %v736 = vadd.f32 %v728, 1e-05
    %v737 = vadd.f32 %v729, 1e-05
    %v738 = vadd.f32 %v730, 1e-05
    %v739 = vadd.f32 %v731, 1e-05
    %v740 = vadd.f32 %v732, 1e-05
    %v741 = vadd.f32 %v733, 1e-05
    %v742 = vadd.f32 %v734, 1e-05
    %v743 = vadd.f32 %v735, 1e-05
    %v744 = vrsqrt.pop %v736
    %v745 = vrsqrt.pop %v737
    %v746 = vrsqrt.pop %v738
    %v747 = vrsqrt.pop %v739
    %v748 = vrsqrt.pop %v740
    %v749 = vrsqrt.pop %v741
    %v750 = vrsqrt.pop %v742
    %v751 = vrsqrt.pop %v743
    %v760 = vcombine.low %v744, %v745
    %v761 = vcombine.low %v746, %v747
    %v762 = vcombine.low %v748, %v749
    %v763 = vcombine.low %v750, %v751
    %v765 = vunpack.c.l.s4 1966171168
    %v766 = vunpack.c.0.s8 %v765
    %v767 = vlaneseq
    %v768 = vshrl.u32 %v767, 7
    %v769 = vsub.s32 %v766, %v768
    %v770 = vrot.slane %v760, %v769
    %v772 = vunpack.c.l.s4 1966171168
    %v773 = vunpack.c.0.s8 %v772
    %v774 = vlaneseq
    %v775 = vshrl.u32 %v774, 7
    %v776 = vsub.s32 %v773, %v775
    %v777 = vrot.slane %v761, %v776
    %v779 = vunpack.c.l.s4 1966171168
    %v780 = vunpack.c.0.s8 %v779
    %v781 = vlaneseq
    %v782 = vshrl.u32 %v781, 7
    %v783 = vsub.s32 %v780, %v782
    %v784 = vrot.slane %v762, %v783
    %v786 = vunpack.c.l.s4 1966171168
    %v787 = vunpack.c.0.s8 %v786
    %v788 = vlaneseq
    %v789 = vshrl.u32 %v788, 7
    %v790 = vsub.s32 %v787, %v789
    %v791 = vrot.slane %v763, %v790
    %v792 = vcombine.low %v770, %v777
    %v793 = vcombine.low %v784, %v791
    %v795 = vunpack.c.l.s4 1966171168
    %v796 = vunpack.c.0.s8 %v795
    %v797 = vlaneseq
    %v798 = vshrl.u32 %v797, 7
    %v799 = vsub.s32 %v796, %v798
    %v800 = vrot.slane %v792, %v799
    %v802 = vunpack.c.l.s4 1966171168
    %v803 = vunpack.c.0.s8 %v802
    %v804 = vlaneseq
    %v805 = vshrl.u32 %v804, 7
    %v806 = vsub.s32 %v803, %v805
    %v807 = vrot.slane %v793, %v806
    %v808 = vcombine.low %v800, %v807
    %v810 = vmul.f32 %v565, %v808
    %v812 = vlaneseq
    %v813 = vshrl.u32 %v812, 7
    %v814 = vsub.s32 0, %v813
    %v815 = vrot.slane %v810, %v814
    %v816 = vlaneseq
    %v817 = vshrl.u32 %v816, 7
    %v818 = vsub.s32 1, %v817
    %v819 = vrot.slane %v810, %v818
    %v820 = vlaneseq
    %v821 = vshrl.u32 %v820, 7
    %v822 = vsub.s32 2, %v821
    %v823 = vrot.slane %v810, %v822
    %v824 = vlaneseq
    %v825 = vshrl.u32 %v824, 7
    %v826 = vsub.s32 3, %v825
    %v827 = vrot.slane %v810, %v826
    %v828 = vlaneseq
    %v829 = vshrl.u32 %v828, 7
    %v830 = vsub.s32 4, %v829
    %v831 = vrot.slane %v810, %v830
    %v832 = vlaneseq
    %v833 = vshrl.u32 %v832, 7
    %v834 = vsub.s32 5, %v833
    %v835 = vrot.slane %v810, %v834
    %v836 = vlaneseq
    %v837 = vshrl.u32 %v836, 7
    %v838 = vsub.s32 6, %v837
    %v839 = vrot.slane %v810, %v838
    %v840 = vlaneseq
    %v841 = vshrl.u32 %v840, 7
    %v842 = vsub.s32 7, %v841
    %v843 = vrot.slane %v810, %v842
    %v852 = vmul.f32 %v324, %v815
    %v853 = vmul.f32 %v326, %v819
    %v854 = vmul.f32 %v401, %v823
    %v855 = vmul.f32 %v403, %v827
    %v856 = vmul.f32 %v478, %v831
    %v857 = vmul.f32 %v480, %v835
    %v858 = vmul.f32 %v555, %v839
    %v859 = vmul.f32 %v557, %v843
    %v860 = vmul.f32 %v330, %v815
    %v861 = vmul.f32 %v332, %v819
    %v862 = vmul.f32 %v407, %v823
    %v863 = vmul.f32 %v409, %v827
    %v864 = vmul.f32 %v484, %v831
    %v865 = vmul.f32 %v486, %v835
    %v866 = vmul.f32 %v561, %v839
    %v867 = vmul.f32 %v563, %v843
    %v868 = vmul.f32 %v624, %v815
    %v869 = vmul.f32 %v625, %v819
    %v870 = vmul.f32 %v626, %v823
    %v871 = vmul.f32 %v627, %v827
    %v872 = vmul.f32 %v628, %v831
    %v873 = vmul.f32 %v629, %v835
    %v874 = vmul.f32 %v630, %v839
    %v875 = vmul.f32 %v631, %v843
    %v884 = vcombine.low %v868, %v869
    %v885 = vcombine.low %v870, %v871
    %v886 = vcombine.low %v872, %v873
    %v887 = vcombine.low %v874, %v875
    %v889 = vunpack.c.l.s4 1966171168
    %v890 = vunpack.c.0.s8 %v889
    %v891 = vlaneseq
    %v892 = vshrl.u32 %v891, 7
    %v893 = vsub.s32 %v890, %v892
    %v894 = vrot.slane %v884, %v893
    %v896 = vunpack.c.l.s4 1966171168
    %v897 = vunpack.c.0.s8 %v896
    %v898 = vlaneseq
    %v899 = vshrl.u32 %v898, 7
    %v900 = vsub.s32 %v897, %v899
    %v901 = vrot.slane %v885, %v900
    %v903 = vunpack.c.l.s4 1966171168
    %v904 = vunpack.c.0.s8 %v903
    %v905 = vlaneseq
    %v906 = vshrl.u32 %v905, 7
    %v907 = vsub.s32 %v904, %v906
    %v908 = vrot.slane %v886, %v907
    %v910 = vunpack.c.l.s4 1966171168
    %v911 = vunpack.c.0.s8 %v910
    %v912 = vlaneseq
    %v913 = vshrl.u32 %v912, 7
    %v914 = vsub.s32 %v911, %v913
    %v915 = vrot.slane %v887, %v914
    %v916 = vcombine.low %v894, %v901
    %v917 = vcombine.low %v908, %v915
    %v919 = vunpack.c.l.s4 1966171168
    %v920 = vunpack.c.0.s8 %v919
    %v921 = vlaneseq
    %v922 = vshrl.u32 %v921, 7
    %v923 = vsub.s32 %v920, %v922
    %v924 = vrot.slane %v916, %v923
    %v926 = vunpack.c.l.s4 1966171168
    %v927 = vunpack.c.0.s8 %v926
    %v928 = vlaneseq
    %v929 = vshrl.u32 %v928, 7
    %v930 = vsub.s32 %v927, %v929
    %v931 = vrot.slane %v917, %v930
    %v932 = vcombine.low %v924, %v931
    %v934 = vsub.f32 %v566, %v932
    %v936 = vlaneseq
    %v937 = vshrl.u32 %v936, 7
    %v938 = vsub.s32 0, %v937
    %v939 = vrot.slane %v934, %v938
    %v940 = vlaneseq
    %v941 = vshrl.u32 %v940, 7
    %v942 = vsub.s32 1, %v941
    %v943 = vrot.slane %v934, %v942
    %v944 = vlaneseq
    %v945 = vshrl.u32 %v944, 7
    %v946 = vsub.s32 2, %v945
    %v947 = vrot.slane %v934, %v946
    %v948 = vlaneseq
    %v949 = vshrl.u32 %v948, 7
    %v950 = vsub.s32 3, %v949
    %v951 = vrot.slane %v934, %v950
    %v952 = vlaneseq
    %v953 = vshrl.u32 %v952, 7
    %v954 = vsub.s32 4, %v953
    %v955 = vrot.slane %v934, %v954
    %v956 = vlaneseq
    %v957 = vshrl.u32 %v956, 7
    %v958 = vsub.s32 5, %v957
    %v959 = vrot.slane %v934, %v958
    %v960 = vlaneseq
    %v961 = vshrl.u32 %v960, 7
    %v962 = vsub.s32 6, %v961
    %v963 = vrot.slane %v934, %v962
    %v964 = vlaneseq
    %v965 = vshrl.u32 %v964, 7
    %v966 = vsub.s32 7, %v965
    %v967 = vrot.slane %v934, %v966
    %v976 = vadd.f32 %v852, %v939
    %v977 = vadd.f32 %v853, %v943
    %v978 = vadd.f32 %v854, %v947
    %v979 = vadd.f32 %v855, %v951
    %v980 = vadd.f32 %v856, %v955
    %v981 = vadd.f32 %v857, %v959
    %v982 = vadd.f32 %v858, %v963
    %v983 = vadd.f32 %v859, %v967
    %v984 = vadd.f32 %v860, %v939
    %v985 = vadd.f32 %v861, %v943
    %v986 = vadd.f32 %v862, %v947
    %v987 = vadd.f32 %v863, %v951
    %v988 = vadd.f32 %v864, %v955
    %v989 = vadd.f32 %v865, %v959
    %v990 = vadd.f32 %v866, %v963
    %v991 = vadd.f32 %v867, %v967
    %v992 = vmax.f32 %v976, 0.0
    %v993 = vmax.f32 %v977, 0.0
    %v994 = vmax.f32 %v978, 0.0
    %v995 = vmax.f32 %v979, 0.0
    %v996 = vmax.f32 %v980, 0.0
    %v997 = vmax.f32 %v981, 0.0
    %v998 = vmax.f32 %v982, 0.0
    %v999 = vmax.f32 %v983, 0.0
    %v1000 = vmax.f32 %v984, 0.0
    %v1001 = vmax.f32 %v985, 0.0
    %v1002 = vmax.f32 %v986, 0.0
    %v1003 = vmax.f32 %v987, 0.0
    %v1004 = vmax.f32 %v988, 0.0
    %v1005 = vmax.f32 %v989, 0.0
    %v1006 = vmax.f32 %v990, 0.0
    %v1007 = vmax.f32 %v991, 0.0
    %v1008 = vld [vmem:[#allocation11] sm:$0xff]
    %v1009 = vld [vmem:[#allocation11 + $0x8] sm:$0xff]
    %v1010 = vld [vmem:[#allocation11 + $0x10] sm:$0xff]
    %v1011 = vld [vmem:[#allocation11 + $0x18] sm:$0xff]
    %v1012 = vld [vmem:[#allocation11 + $0x20] sm:$0xff]
    %v1013 = vld [vmem:[#allocation11 + $0x28] sm:$0xff]
    %v1014 = vld [vmem:[#allocation11 + $0x30] sm:$0xff]
    %v1015 = vld [vmem:[#allocation11 + $0x38] sm:$0xff]
    %v1016 = vld [vmem:[#allocation11 + $0x40] sm:$0xff]
    %v1017 = vld [vmem:[#allocation11 + $0x48] sm:$0xff]
    %v1018 = vld [vmem:[#allocation11 + $0x50] sm:$0xff]
    %v1019 = vld [vmem:[#allocation11 + $0x58] sm:$0xff]
    %v1020 = vld [vmem:[#allocation11 + $0x60] sm:$0xff]
    %v1021 = vld [vmem:[#allocation11 + $0x68] sm:$0xff]
    %v1022 = vld [vmem:[#allocation11 + $0x70] sm:$0xff]
    %v1023 = vld [vmem:[#allocation11 + $0x78] sm:$0xff]
    %v1024 = vld [vmem:[#allocation11 + $0x80] sm:$0xff]
    %v1025 = vld [vmem:[#allocation11 + $0x88] sm:$0xff]
    %v1026 = vld [vmem:[#allocation11 + $0x90] sm:$0xff]
    %v1027 = vld [vmem:[#allocation11 + $0x98] sm:$0xff]
    %v1028 = vld [vmem:[#allocation11 + $0xa0] sm:$0xff]
    %v1029 = vld [vmem:[#allocation11 + $0xa8] sm:$0xff]
    %v1030 = vld [vmem:[#allocation11 + $0xb0] sm:$0xff]
    %v1031 = vld [vmem:[#allocation11 + $0xb8] sm:$0xff]
    %v1032 = vld [vmem:[#allocation11 + $0xc0] sm:$0xff]
    %v1033 = vld [vmem:[#allocation11 + $0xc8] sm:$0xff]
    %v1034 = vld [vmem:[#allocation11 + $0xd0] sm:$0xff]
    %v1035 = vld [vmem:[#allocation11 + $0xd8] sm:$0xff]
    %v1036 = vld [vmem:[#allocation11 + $0xe0] sm:$0xff]
    %v1037 = vld [vmem:[#allocation11 + $0xe8] sm:$0xff]
    %v1038 = vld [vmem:[#allocation11 + $0xf0] sm:$0xff]
    %v1039 = vld [vmem:[#allocation11 + $0xf8] sm:$0xff]
    %v1040 = vld [vmem:[#allocation11 + $0x100] sm:$0xff]
    %v1041 = vld [vmem:[#allocation11 + $0x108] sm:$0xff]
    %v1042 = vld [vmem:[#allocation11 + $0x110] sm:$0xff]
    %v1043 = vld [vmem:[#allocation11 + $0x118] sm:$0xff]
    %v1044 = vld [vmem:[#allocation11 + $0x120] sm:$0xff]
    %v1045 = vld [vmem:[#allocation11 + $0x128] sm:$0xff]
    %v1046 = vld [vmem:[#allocation11 + $0x130] sm:$0xff]
    %v1047 = vld [vmem:[#allocation11 + $0x138] sm:$0xff]
    %v1048 = vld [vmem:[#allocation11 + $0x140] sm:$0xff]
    %v1049 = vld [vmem:[#allocation11 + $0x148] sm:$0xff]
    %v1050 = vld [vmem:[#allocation11 + $0x150] sm:$0xff]
    %v1051 = vld [vmem:[#allocation11 + $0x158] sm:$0xff]
    %v1052 = vld [vmem:[#allocation11 + $0x160] sm:$0xff]
    %v1053 = vld [vmem:[#allocation11 + $0x168] sm:$0xff]
    %v1054 = vld [vmem:[#allocation11 + $0x170] sm:$0xff]
    %v1055 = vld [vmem:[#allocation11 + $0x178] sm:$0xff]
    %v1056 = vld [vmem:[#allocation11 + $0x180] sm:$0xff]
    %v1057 = vld [vmem:[#allocation11 + $0x188] sm:$0xff]
    %v1058 = vld [vmem:[#allocation11 + $0x190] sm:$0xff]
    %v1059 = vld [vmem:[#allocation11 + $0x198] sm:$0xff]
    %v1060 = vld [vmem:[#allocation11 + $0x1a0] sm:$0xff]
    %v1061 = vld [vmem:[#allocation11 + $0x1a8] sm:$0xff]
    %v1062 = vld [vmem:[#allocation11 + $0x1b0] sm:$0xff]
    %v1063 = vld [vmem:[#allocation11 + $0x1b8] sm:$0xff]
    %v1064 = vld [vmem:[#allocation11 + $0x1c0] sm:$0xff]
    %v1065 = vld [vmem:[#allocation11 + $0x1c8] sm:$0xff]
    %v1066 = vld [vmem:[#allocation11 + $0x1d0] sm:$0xff]
    %v1067 = vld [vmem:[#allocation11 + $0x1d8] sm:$0xff]
    %v1068 = vld [vmem:[#allocation11 + $0x1e0] sm:$0xff]
    %v1069 = vld [vmem:[#allocation11 + $0x1e8] sm:$0xff]
    %v1070 = vld [vmem:[#allocation11 + $0x1f0] sm:$0xff]
    %v1071 = vld [vmem:[#allocation11 + $0x1f8] sm:$0xff]
    %v1072 = vld [vmem:[#allocation11 + $0x200] sm:$0xff]
    %v1073 = vld [vmem:[#allocation11 + $0x208] sm:$0xff]
    %v1074 = vld [vmem:[#allocation11 + $0x210] sm:$0xff]
    %v1075 = vld [vmem:[#allocation11 + $0x218] sm:$0xff]
    %v1076 = vld [vmem:[#allocation11 + $0x220] sm:$0xff]
    %v1077 = vld [vmem:[#allocation11 + $0x228] sm:$0xff]
    %v1078 = vld [vmem:[#allocation11 + $0x230] sm:$0xff]
    %v1079 = vld [vmem:[#allocation11 + $0x238] sm:$0xff]
    %v1080 = vld [vmem:[#allocation11 + $0x240] sm:$0xff]
    %v1081 = vld [vmem:[#allocation11 + $0x248] sm:$0xff]
    %v1082 = vld [vmem:[#allocation11 + $0x250] sm:$0xff]
    %v1083 = vld [vmem:[#allocation11 + $0x258] sm:$0xff]
    %v1084 = vld [vmem:[#allocation11 + $0x260] sm:$0xff]
    %v1085 = vld [vmem:[#allocation11 + $0x268] sm:$0xff]
    %v1086 = vld [vmem:[#allocation11 + $0x270] sm:$0xff]
    %v1087 = vld [vmem:[#allocation11 + $0x278] sm:$0xff]
    %v1088 = vld [vmem:[#allocation11 + $0x280] sm:$0xff]
    %v1089 = vld [vmem:[#allocation11 + $0x288] sm:$0xff]
    %v1090 = vld [vmem:[#allocation11 + $0x290] sm:$0xff]
    %v1091 = vld [vmem:[#allocation11 + $0x298] sm:$0xff]
    %v1092 = vld [vmem:[#allocation11 + $0x2a0] sm:$0xff]
    %v1093 = vld [vmem:[#allocation11 + $0x2a8] sm:$0xff]
    %v1094 = vld [vmem:[#allocation11 + $0x2b0] sm:$0xff]
    %v1095 = vld [vmem:[#allocation11 + $0x2b8] sm:$0xff]
    %v1096 = vld [vmem:[#allocation11 + $0x2c0] sm:$0xff]
    %v1097 = vld [vmem:[#allocation11 + $0x2c8] sm:$0xff]
    %v1098 = vld [vmem:[#allocation11 + $0x2d0] sm:$0xff]
    %v1099 = vld [vmem:[#allocation11 + $0x2d8] sm:$0xff]
    %v1100 = vld [vmem:[#allocation11 + $0x2e0] sm:$0xff]
    %v1101 = vld [vmem:[#allocation11 + $0x2e8] sm:$0xff]
    %v1102 = vld [vmem:[#allocation11 + $0x2f0] sm:$0xff]
    %v1103 = vld [vmem:[#allocation11 + $0x2f8] sm:$0xff]
    %v1104 = vld [vmem:[#allocation11 + $0x300] sm:$0xff]
    %v1105 = vld [vmem:[#allocation11 + $0x308] sm:$0xff]
    %v1106 = vld [vmem:[#allocation11 + $0x310] sm:$0xff]
    %v1107 = vld [vmem:[#allocation11 + $0x318] sm:$0xff]
    %v1108 = vld [vmem:[#allocation11 + $0x320] sm:$0xff]
    %v1109 = vld [vmem:[#allocation11 + $0x328] sm:$0xff]
    %v1110 = vld [vmem:[#allocation11 + $0x330] sm:$0xff]
    %v1111 = vld [vmem:[#allocation11 + $0x338] sm:$0xff]
    %v1112 = vld [vmem:[#allocation11 + $0x340] sm:$0xff]
    %v1113 = vld [vmem:[#allocation11 + $0x348] sm:$0xff]
    %v1114 = vld [vmem:[#allocation11 + $0x350] sm:$0xff]
    %v1115 = vld [vmem:[#allocation11 + $0x358] sm:$0xff]
    %v1116 = vld [vmem:[#allocation11 + $0x360] sm:$0xff]
    %v1117 = vld [vmem:[#allocation11 + $0x368] sm:$0xff]
    %v1118 = vld [vmem:[#allocation11 + $0x370] sm:$0xff]
    %v1119 = vld [vmem:[#allocation11 + $0x378] sm:$0xff]
    %v1120 = vld [vmem:[#allocation11 + $0x380] sm:$0xff]
    %v1121 = vld [vmem:[#allocation11 + $0x388] sm:$0xff]
    %v1122 = vld [vmem:[#allocation11 + $0x390] sm:$0xff]
    %v1123 = vld [vmem:[#allocation11 + $0x398] sm:$0xff]
    %v1124 = vld [vmem:[#allocation11 + $0x3a0] sm:$0xff]
    %v1125 = vld [vmem:[#allocation11 + $0x3a8] sm:$0xff]
    %v1126 = vld [vmem:[#allocation11 + $0x3b0] sm:$0xff]
    %v1127 = vld [vmem:[#allocation11 + $0x3b8] sm:$0xff]
    %v1128 = vld [vmem:[#allocation11 + $0x3c0] sm:$0xff]
    %v1129 = vld [vmem:[#allocation11 + $0x3c8] sm:$0xff]
    %v1130 = vld [vmem:[#allocation11 + $0x3d0] sm:$0xff]
    %v1131 = vld [vmem:[#allocation11 + $0x3d8] sm:$0xff]
    %v1132 = vld [vmem:[#allocation11 + $0x3e0] sm:$0xff]
    %v1133 = vld [vmem:[#allocation11 + $0x3e8] sm:$0xff]
    %v1134 = vld [vmem:[#allocation11 + $0x3f0] sm:$0xff]
    %v1135 = vld [vmem:[#allocation11 + $0x3f8] sm:$0xff]
    %v1136 = vld [vmem:[#allocation11 + $0x400] sm:$0xff]
    %v1137 = vld [vmem:[#allocation11 + $0x408] sm:$0xff]
    %v1138 = vld [vmem:[#allocation11 + $0x410] sm:$0xff]
    %v1139 = vld [vmem:[#allocation11 + $0x418] sm:$0xff]
    %v1140 = vld [vmem:[#allocation11 + $0x420] sm:$0xff]
    %v1141 = vld [vmem:[#allocation11 + $0x428] sm:$0xff]
    %v1142 = vld [vmem:[#allocation11 + $0x430] sm:$0xff]
    %v1143 = vld [vmem:[#allocation11 + $0x438] sm:$0xff]
    %v1144 = vld [vmem:[#allocation11 + $0x440] sm:$0xff]
    %v1145 = vld [vmem:[#allocation11 + $0x448] sm:$0xff]
    %v1146 = vld [vmem:[#allocation11 + $0x450] sm:$0xff]
    %v1147 = vld [vmem:[#allocation11 + $0x458] sm:$0xff]
    %v1148 = vld [vmem:[#allocation11 + $0x460] sm:$0xff]
    %v1149 = vld [vmem:[#allocation11 + $0x468] sm:$0xff]
    %v1150 = vld [vmem:[#allocation11 + $0x470] sm:$0xff]
    %v1151 = vld [vmem:[#allocation11 + $0x478] sm:$0xff]
    %v1152 = vld [vmem:[#allocation11 + $0x480] sm:$0xff]
    %v1153 = vld [vmem:[#allocation11 + $0x488] sm:$0xff]
    %v1154 = vld [vmem:[#allocation11 + $0x490] sm:$0xff]
    %v1155 = vld [vmem:[#allocation11 + $0x498] sm:$0xff]
    %v1156 = vld [vmem:[#allocation11 + $0x4a0] sm:$0xff]
    %v1157 = vld [vmem:[#allocation11 + $0x4a8] sm:$0xff]
    %v1158 = vld [vmem:[#allocation11 + $0x4b0] sm:$0xff]
    %v1159 = vld [vmem:[#allocation11 + $0x4b8] sm:$0xff]
    %v1160 = vld [vmem:[#allocation11 + $0x4c0] sm:$0xff]
    %v1161 = vld [vmem:[#allocation11 + $0x4c8] sm:$0xff]
    %v1162 = vld [vmem:[#allocation11 + $0x4d0] sm:$0xff]
    %v1163 = vld [vmem:[#allocation11 + $0x4d8] sm:$0xff]
    %v1164 = vld [vmem:[#allocation11 + $0x4e0] sm:$0xff]
    %v1165 = vld [vmem:[#allocation11 + $0x4e8] sm:$0xff]
    %v1166 = vld [vmem:[#allocation11 + $0x4f0] sm:$0xff]
    %v1167 = vld [vmem:[#allocation11 + $0x4f8] sm:$0xff]
    %v1168 = vld [vmem:[#allocation11 + $0x500] sm:$0xff]
    %v1169 = vld [vmem:[#allocation11 + $0x508] sm:$0xff]
    %v1170 = vld [vmem:[#allocation11 + $0x510] sm:$0xff]
    %v1171 = vld [vmem:[#allocation11 + $0x518] sm:$0xff]
    %v1172 = vld [vmem:[#allocation11 + $0x520] sm:$0xff]
    %v1173 = vld [vmem:[#allocation11 + $0x528] sm:$0xff]
    %v1174 = vld [vmem:[#allocation11 + $0x530] sm:$0xff]
    %v1175 = vld [vmem:[#allocation11 + $0x538] sm:$0xff]
    %v1176 = vld [vmem:[#allocation11 + $0x540] sm:$0xff]
    %v1177 = vld [vmem:[#allocation11 + $0x548] sm:$0xff]
    %v1178 = vld [vmem:[#allocation11 + $0x550] sm:$0xff]
    %v1179 = vld [vmem:[#allocation11 + $0x558] sm:$0xff]
    %v1180 = vld [vmem:[#allocation11 + $0x560] sm:$0xff]
    %v1181 = vld [vmem:[#allocation11 + $0x568] sm:$0xff]
    %v1182 = vld [vmem:[#allocation11 + $0x570] sm:$0xff]
    %v1183 = vld [vmem:[#allocation11 + $0x578] sm:$0xff]
    %v1184 = vld [vmem:[#allocation11 + $0x580] sm:$0xff]
    %v1185 = vld [vmem:[#allocation11 + $0x588] sm:$0xff]
    %v1186 = vld [vmem:[#allocation11 + $0x590] sm:$0xff]
    %v1187 = vld [vmem:[#allocation11 + $0x598] sm:$0xff]
    %v1188 = vld [vmem:[#allocation11 + $0x5a0] sm:$0xff]
    %v1189 = vld [vmem:[#allocation11 + $0x5a8] sm:$0xff]
    %v1190 = vld [vmem:[#allocation11 + $0x5b0] sm:$0xff]
    %v1191 = vld [vmem:[#allocation11 + $0x5b8] sm:$0xff]
    %v1192 = vld [vmem:[#allocation11 + $0x5c0] sm:$0xff]
    %v1193 = vld [vmem:[#allocation11 + $0x5c8] sm:$0xff]
    %v1194 = vld [vmem:[#allocation11 + $0x5d0] sm:$0xff]
    %v1195 = vld [vmem:[#allocation11 + $0x5d8] sm:$0xff]
    %v1196 = vld [vmem:[#allocation11 + $0x5e0] sm:$0xff]
    %v1197 = vld [vmem:[#allocation11 + $0x5e8] sm:$0xff]
    %v1198 = vld [vmem:[#allocation11 + $0x5f0] sm:$0xff]
    %v1199 = vld [vmem:[#allocation11 + $0x5f8] sm:$0xff]
    %v1200 = vld [vmem:[#allocation11 + $0x600] sm:$0xff]
    %v1201 = vld [vmem:[#allocation11 + $0x608] sm:$0xff]
    %v1202 = vld [vmem:[#allocation11 + $0x610] sm:$0xff]
    %v1203 = vld [vmem:[#allocation11 + $0x618] sm:$0xff]
    %v1204 = vld [vmem:[#allocation11 + $0x620] sm:$0xff]
    %v1205 = vld [vmem:[#allocation11 + $0x628] sm:$0xff]
    %v1206 = vld [vmem:[#allocation11 + $0x630] sm:$0xff]
    %v1207 = vld [vmem:[#allocation11 + $0x638] sm:$0xff]
    %v1208 = vld [vmem:[#allocation11 + $0x640] sm:$0xff]
    %v1209 = vld [vmem:[#allocation11 + $0x648] sm:$0xff]
    %v1210 = vld [vmem:[#allocation11 + $0x650] sm:$0xff]
    %v1211 = vld [vmem:[#allocation11 + $0x658] sm:$0xff]
    %v1212 = vld [vmem:[#allocation11 + $0x660] sm:$0xff]
    %v1213 = vld [vmem:[#allocation11 + $0x668] sm:$0xff]
    %v1214 = vld [vmem:[#allocation11 + $0x670] sm:$0xff]
    %v1215 = vld [vmem:[#allocation11 + $0x678] sm:$0xff]
    %v1216 = vld [vmem:[#allocation11 + $0x680] sm:$0xff]
    %v1217 = vld [vmem:[#allocation11 + $0x688] sm:$0xff]
    %v1218 = vld [vmem:[#allocation11 + $0x690] sm:$0xff]
    %v1219 = vld [vmem:[#allocation11 + $0x698] sm:$0xff]
    %v1220 = vld [vmem:[#allocation11 + $0x6a0] sm:$0xff]
    %v1221 = vld [vmem:[#allocation11 + $0x6a8] sm:$0xff]
    %v1222 = vld [vmem:[#allocation11 + $0x6b0] sm:$0xff]
    %v1223 = vld [vmem:[#allocation11 + $0x6b8] sm:$0xff]
    %v1224 = vld [vmem:[#allocation11 + $0x6c0] sm:$0xff]
    %v1225 = vld [vmem:[#allocation11 + $0x6c8] sm:$0xff]
    %v1226 = vld [vmem:[#allocation11 + $0x6d0] sm:$0xff]
    %v1227 = vld [vmem:[#allocation11 + $0x6d8] sm:$0xff]
    %v1228 = vld [vmem:[#allocation11 + $0x6e0] sm:$0xff]
    %v1229 = vld [vmem:[#allocation11 + $0x6e8] sm:$0xff]
    %v1230 = vld [vmem:[#allocation11 + $0x6f0] sm:$0xff]
    %v1231 = vld [vmem:[#allocation11 + $0x6f8] sm:$0xff]
    %v1232 = vld [vmem:[#allocation11 + $0x700] sm:$0xff]
    %v1233 = vld [vmem:[#allocation11 + $0x708] sm:$0xff]
    %v1234 = vld [vmem:[#allocation11 + $0x710] sm:$0xff]
    %v1235 = vld [vmem:[#allocation11 + $0x718] sm:$0xff]
    %v1236 = vld [vmem:[#allocation11 + $0x720] sm:$0xff]
    %v1237 = vld [vmem:[#allocation11 + $0x728] sm:$0xff]
    %v1238 = vld [vmem:[#allocation11 + $0x730] sm:$0xff]
    %v1239 = vld [vmem:[#allocation11 + $0x738] sm:$0xff]
    %v1240 = vld [vmem:[#allocation11 + $0x740] sm:$0xff]
    %v1241 = vld [vmem:[#allocation11 + $0x748] sm:$0xff]
    %v1242 = vld [vmem:[#allocation11 + $0x750] sm:$0xff]
    %v1243 = vld [vmem:[#allocation11 + $0x758] sm:$0xff]
    %v1244 = vld [vmem:[#allocation11 + $0x760] sm:$0xff]
    %v1245 = vld [vmem:[#allocation11 + $0x768] sm:$0xff]
    %v1246 = vld [vmem:[#allocation11 + $0x770] sm:$0xff]
    %v1247 = vld [vmem:[#allocation11 + $0x778] sm:$0xff]
    %v1248 = vld [vmem:[#allocation11 + $0x780] sm:$0xff]
    %v1249 = vld [vmem:[#allocation11 + $0x788] sm:$0xff]
    %v1250 = vld [vmem:[#allocation11 + $0x790] sm:$0xff]
    %v1251 = vld [vmem:[#allocation11 + $0x798] sm:$0xff]
    %v1252 = vld [vmem:[#allocation11 + $0x7a0] sm:$0xff]
    %v1253 = vld [vmem:[#allocation11 + $0x7a8] sm:$0xff]
    %v1254 = vld [vmem:[#allocation11 + $0x7b0] sm:$0xff]
    %v1255 = vld [vmem:[#allocation11 + $0x7b8] sm:$0xff]
    %v1256 = vld [vmem:[#allocation11 + $0x7c0] sm:$0xff]
    %v1257 = vld [vmem:[#allocation11 + $0x7c8] sm:$0xff]
    %v1258 = vld [vmem:[#allocation11 + $0x7d0] sm:$0xff]
    %v1259 = vld [vmem:[#allocation11 + $0x7d8] sm:$0xff]
    %v1260 = vld [vmem:[#allocation11 + $0x7e0] sm:$0xff]
    %v1261 = vld [vmem:[#allocation11 + $0x7e8] sm:$0xff]
    %v1262 = vld [vmem:[#allocation11 + $0x7f0] sm:$0xff]
    %v1263 = vld [vmem:[#allocation11 + $0x7f8] sm:$0xff]
    %v1264 = vld [vmem:[#allocation11 + $0x800] sm:$0xff]
    %v1265 = vld [vmem:[#allocation11 + $0x808] sm:$0xff]
    %v1266 = vld [vmem:[#allocation11 + $0x810] sm:$0xff]
    %v1267 = vld [vmem:[#allocation11 + $0x818] sm:$0xff]
    %v1268 = vld [vmem:[#allocation11 + $0x820] sm:$0xff]
    %v1269 = vld [vmem:[#allocation11 + $0x828] sm:$0xff]
    %v1270 = vld [vmem:[#allocation11 + $0x830] sm:$0xff]
    %v1271 = vld [vmem:[#allocation11 + $0x838] sm:$0xff]
    %v1272 = vld [vmem:[#allocation11 + $0x840] sm:$0xff]
    %v1273 = vld [vmem:[#allocation11 + $0x848] sm:$0xff]
    %v1274 = vld [vmem:[#allocation11 + $0x850] sm:$0xff]
    %v1275 = vld [vmem:[#allocation11 + $0x858] sm:$0xff]
    %v1276 = vld [vmem:[#allocation11 + $0x860] sm:$0xff]
    %v1277 = vld [vmem:[#allocation11 + $0x868] sm:$0xff]
    %v1278 = vld [vmem:[#allocation11 + $0x870] sm:$0xff]
    %v1279 = vld [vmem:[#allocation11 + $0x878] sm:$0xff]
    %v1280 = vld [vmem:[#allocation11 + $0x880] sm:$0xff]
    %v1281 = vld [vmem:[#allocation11 + $0x888] sm:$0xff]
    %v1282 = vld [vmem:[#allocation11 + $0x890] sm:$0xff]
    %v1283 = vld [vmem:[#allocation11 + $0x898] sm:$0xff]
    %v1284 = vld [vmem:[#allocation11 + $0x8a0] sm:$0xff]
    %v1285 = vld [vmem:[#allocation11 + $0x8a8] sm:$0xff]
    %v1286 = vld [vmem:[#allocation11 + $0x8b0] sm:$0xff]
    %v1287 = vld [vmem:[#allocation11 + $0x8b8] sm:$0xff]
    %v1288 = vld [vmem:[#allocation11 + $0x8c0] sm:$0xff]
    %v1289 = vld [vmem:[#allocation11 + $0x8c8] sm:$0xff]
    %v1290 = vld [vmem:[#allocation11 + $0x8d0] sm:$0xff]
    %v1291 = vld [vmem:[#allocation11 + $0x8d8] sm:$0xff]
    %v1292 = vld [vmem:[#allocation11 + $0x8e0] sm:$0xff]
    %v1293 = vld [vmem:[#allocation11 + $0x8e8] sm:$0xff]
    %v1294 = vld [vmem:[#allocation11 + $0x8f0] sm:$0xff]
    %v1295 = vld [vmem:[#allocation11 + $0x8f8] sm:$0xff]
    %v1296 = vld [vmem:[#allocation11 + $0x900] sm:$0xff]
    %v1297 = vld [vmem:[#allocation11 + $0x908] sm:$0xff]
    %v1298 = vld [vmem:[#allocation11 + $0x910] sm:$0xff]
    %v1299 = vld [vmem:[#allocation11 + $0x918] sm:$0xff]
    %v1300 = vld [vmem:[#allocation11 + $0x920] sm:$0xff]
    %v1301 = vld [vmem:[#allocation11 + $0x928] sm:$0xff]
    %v1302 = vld [vmem:[#allocation11 + $0x930] sm:$0xff]
    %v1303 = vld [vmem:[#allocation11 + $0x938] sm:$0xff]
    %v1304 = vld [vmem:[#allocation11 + $0x940] sm:$0xff]
    %v1305 = vld [vmem:[#allocation11 + $0x948] sm:$0xff]
    %v1306 = vld [vmem:[#allocation11 + $0x950] sm:$0xff]
    %v1307 = vld [vmem:[#allocation11 + $0x958] sm:$0xff]
    %v1308 = vld [vmem:[#allocation11 + $0x960] sm:$0xff]
    %v1309 = vld [vmem:[#allocation11 + $0x968] sm:$0xff]
    %v1310 = vld [vmem:[#allocation11 + $0x970] sm:$0xff]
    %v1311 = vld [vmem:[#allocation11 + $0x978] sm:$0xff]
    %v1312 = vld [vmem:[#allocation11 + $0x980] sm:$0xff]
    %v1313 = vld [vmem:[#allocation11 + $0x988] sm:$0xff]
    %v1314 = vld [vmem:[#allocation11 + $0x990] sm:$0xff]
    %v1315 = vld [vmem:[#allocation11 + $0x998] sm:$0xff]
    %v1316 = vld [vmem:[#allocation11 + $0x9a0] sm:$0xff]
    %v1317 = vld [vmem:[#allocation11 + $0x9a8] sm:$0xff]
    %v1318 = vld [vmem:[#allocation11 + $0x9b0] sm:$0xff]
    %v1319 = vld [vmem:[#allocation11 + $0x9b8] sm:$0xff]
    %v1320 = vld [vmem:[#allocation11 + $0x9c0] sm:$0xff]
    %v1321 = vld [vmem:[#allocation11 + $0x9c8] sm:$0xff]
    %v1322 = vld [vmem:[#allocation11 + $0x9d0] sm:$0xff]
    %v1323 = vld [vmem:[#allocation11 + $0x9d8] sm:$0xff]
    %v1324 = vld [vmem:[#allocation11 + $0x9e0] sm:$0xff]
    %v1325 = vld [vmem:[#allocation11 + $0x9e8] sm:$0xff]
    %v1326 = vld [vmem:[#allocation11 + $0x9f0] sm:$0xff]
    %v1327 = vld [vmem:[#allocation11 + $0x9f8] sm:$0xff]
    %v1328 = vld [vmem:[#allocation11 + $0xa00] sm:$0xff]
    %v1329 = vld [vmem:[#allocation11 + $0xa08] sm:$0xff]
    %v1330 = vld [vmem:[#allocation11 + $0xa10] sm:$0xff]
    %v1331 = vld [vmem:[#allocation11 + $0xa18] sm:$0xff]
    %v1332 = vld [vmem:[#allocation11 + $0xa20] sm:$0xff]
    %v1333 = vld [vmem:[#allocation11 + $0xa28] sm:$0xff]
    %v1334 = vld [vmem:[#allocation11 + $0xa30] sm:$0xff]
    %v1335 = vld [vmem:[#allocation11 + $0xa38] sm:$0xff]
    %v1336 = vld [vmem:[#allocation11 + $0xa40] sm:$0xff]
    %v1337 = vld [vmem:[#allocation11 + $0xa48] sm:$0xff]
    %v1338 = vld [vmem:[#allocation11 + $0xa50] sm:$0xff]
    %v1339 = vld [vmem:[#allocation11 + $0xa58] sm:$0xff]
    %v1340 = vld [vmem:[#allocation11 + $0xa60] sm:$0xff]
    %v1341 = vld [vmem:[#allocation11 + $0xa68] sm:$0xff]
    %v1342 = vld [vmem:[#allocation11 + $0xa70] sm:$0xff]
    %v1343 = vld [vmem:[#allocation11 + $0xa78] sm:$0xff]
    %v1344 = vld [vmem:[#allocation11 + $0xa80] sm:$0xff]
    %v1345 = vld [vmem:[#allocation11 + $0xa88] sm:$0xff]
    %v1346 = vld [vmem:[#allocation11 + $0xa90] sm:$0xff]
    %v1347 = vld [vmem:[#allocation11 + $0xa98] sm:$0xff]
    %v1348 = vld [vmem:[#allocation11 + $0xaa0] sm:$0xff]
    %v1349 = vld [vmem:[#allocation11 + $0xaa8] sm:$0xff]
    %v1350 = vld [vmem:[#allocation11 + $0xab0] sm:$0xff]
    %v1351 = vld [vmem:[#allocation11 + $0xab8] sm:$0xff]
    %v1352 = vld [vmem:[#allocation11 + $0xac0] sm:$0xff]
    %v1353 = vld [vmem:[#allocation11 + $0xac8] sm:$0xff]
    %v1354 = vld [vmem:[#allocation11 + $0xad0] sm:$0xff]
    %v1355 = vld [vmem:[#allocation11 + $0xad8] sm:$0xff]
    %v1356 = vld [vmem:[#allocation11 + $0xae0] sm:$0xff]
    %v1357 = vld [vmem:[#allocation11 + $0xae8] sm:$0xff]
    %v1358 = vld [vmem:[#allocation11 + $0xaf0] sm:$0xff]
    %v1359 = vld [vmem:[#allocation11 + $0xaf8] sm:$0xff]
    %v1360 = vld [vmem:[#allocation11 + $0xb00] sm:$0xff]
    %v1361 = vld [vmem:[#allocation11 + $0xb08] sm:$0xff]
    %v1362 = vld [vmem:[#allocation11 + $0xb10] sm:$0xff]
    %v1363 = vld [vmem:[#allocation11 + $0xb18] sm:$0xff]
    %v1364 = vld [vmem:[#allocation11 + $0xb20] sm:$0xff]
    %v1365 = vld [vmem:[#allocation11 + $0xb28] sm:$0xff]
    %v1366 = vld [vmem:[#allocation11 + $0xb30] sm:$0xff]
    %v1367 = vld [vmem:[#allocation11 + $0xb38] sm:$0xff]
    %v1368 = vld [vmem:[#allocation11 + $0xb40] sm:$0xff]
    %v1369 = vld [vmem:[#allocation11 + $0xb48] sm:$0xff]
    %v1370 = vld [vmem:[#allocation11 + $0xb50] sm:$0xff]
    %v1371 = vld [vmem:[#allocation11 + $0xb58] sm:$0xff]
    %v1372 = vld [vmem:[#allocation11 + $0xb60] sm:$0xff]
    %v1373 = vld [vmem:[#allocation11 + $0xb68] sm:$0xff]
    %v1374 = vld [vmem:[#allocation11 + $0xb70] sm:$0xff]
    %v1375 = vld [vmem:[#allocation11 + $0xb78] sm:$0xff]
    %v1376 = vld [vmem:[#allocation11 + $0xb80] sm:$0xff]
    %v1377 = vld [vmem:[#allocation11 + $0xb88] sm:$0xff]
    %v1378 = vld [vmem:[#allocation11 + $0xb90] sm:$0xff]
    %v1379 = vld [vmem:[#allocation11 + $0xb98] sm:$0xff]
    %v1380 = vld [vmem:[#allocation11 + $0xba0] sm:$0xff]
    %v1381 = vld [vmem:[#allocation11 + $0xba8] sm:$0xff]
    %v1382 = vld [vmem:[#allocation11 + $0xbb0] sm:$0xff]
    %v1383 = vld [vmem:[#allocation11 + $0xbb8] sm:$0xff]
    %v1384 = vld [vmem:[#allocation11 + $0xbc0] sm:$0xff]
    %v1385 = vld [vmem:[#allocation11 + $0xbc8] sm:$0xff]
    %v1386 = vld [vmem:[#allocation11 + $0xbd0] sm:$0xff]
    %v1387 = vld [vmem:[#allocation11 + $0xbd8] sm:$0xff]
    %v1388 = vld [vmem:[#allocation11 + $0xbe0] sm:$0xff]
    %v1389 = vld [vmem:[#allocation11 + $0xbe8] sm:$0xff]
    %v1390 = vld [vmem:[#allocation11 + $0xbf0] sm:$0xff]
    %v1391 = vld [vmem:[#allocation11 + $0xbf8] sm:$0xff]
    %v1392 = vld [vmem:[#allocation11 + $0xc00] sm:$0xff]
    %v1393 = vld [vmem:[#allocation11 + $0xc08] sm:$0xff]
    %v1394 = vld [vmem:[#allocation11 + $0xc10] sm:$0xff]
    %v1395 = vld [vmem:[#allocation11 + $0xc18] sm:$0xff]
    %v1396 = vld [vmem:[#allocation11 + $0xc20] sm:$0xff]
    %v1397 = vld [vmem:[#allocation11 + $0xc28] sm:$0xff]
    %v1398 = vld [vmem:[#allocation11 + $0xc30] sm:$0xff]
    %v1399 = vld [vmem:[#allocation11 + $0xc38] sm:$0xff]
    %v1400 = vld [vmem:[#allocation11 + $0xc40] sm:$0xff]
    %v1401 = vld [vmem:[#allocation11 + $0xc48] sm:$0xff]
    %v1402 = vld [vmem:[#allocation11 + $0xc50] sm:$0xff]
    %v1403 = vld [vmem:[#allocation11 + $0xc58] sm:$0xff]
    %v1404 = vld [vmem:[#allocation11 + $0xc60] sm:$0xff]
    %v1405 = vld [vmem:[#allocation11 + $0xc68] sm:$0xff]
    %v1406 = vld [vmem:[#allocation11 + $0xc70] sm:$0xff]
    %v1407 = vld [vmem:[#allocation11 + $0xc78] sm:$0xff]
    %v1408 = vld [vmem:[#allocation11 + $0xc80] sm:$0xff]
    %v1409 = vld [vmem:[#allocation11 + $0xc88] sm:$0xff]
    %v1410 = vld [vmem:[#allocation11 + $0xc90] sm:$0xff]
    %v1411 = vld [vmem:[#allocation11 + $0xc98] sm:$0xff]
    %v1412 = vld [vmem:[#allocation11 + $0xca0] sm:$0xff]
    %v1413 = vld [vmem:[#allocation11 + $0xca8] sm:$0xff]
    %v1414 = vld [vmem:[#allocation11 + $0xcb0] sm:$0xff]
    %v1415 = vld [vmem:[#allocation11 + $0xcb8] sm:$0xff]
    %v1416 = vld [vmem:[#allocation11 + $0xcc0] sm:$0xff]
    %v1417 = vld [vmem:[#allocation11 + $0xcc8] sm:$0xff]
    %v1418 = vld [vmem:[#allocation11 + $0xcd0] sm:$0xff]
    %v1419 = vld [vmem:[#allocation11 + $0xcd8] sm:$0xff]
    %v1420 = vld [vmem:[#allocation11 + $0xce0] sm:$0xff]
    %v1421 = vld [vmem:[#allocation11 + $0xce8] sm:$0xff]
    %v1422 = vld [vmem:[#allocation11 + $0xcf0] sm:$0xff]
    %v1423 = vld [vmem:[#allocation11 + $0xcf8] sm:$0xff]
    %v1424 = vld [vmem:[#allocation11 + $0xd00] sm:$0xff]
    %v1425 = vld [vmem:[#allocation11 + $0xd08] sm:$0xff]
    %v1426 = vld [vmem:[#allocation11 + $0xd10] sm:$0xff]
    %v1427 = vld [vmem:[#allocation11 + $0xd18] sm:$0xff]
    %v1428 = vld [vmem:[#allocation11 + $0xd20] sm:$0xff]
    %v1429 = vld [vmem:[#allocation11 + $0xd28] sm:$0xff]
    %v1430 = vld [vmem:[#allocation11 + $0xd30] sm:$0xff]
    %v1431 = vld [vmem:[#allocation11 + $0xd38] sm:$0xff]
    %v1432 = vld [vmem:[#allocation11 + $0xd40] sm:$0xff]
    %v1433 = vld [vmem:[#allocation11 + $0xd48] sm:$0xff]
    %v1434 = vld [vmem:[#allocation11 + $0xd50] sm:$0xff]
    %v1435 = vld [vmem:[#allocation11 + $0xd58] sm:$0xff]
    %v1436 = vld [vmem:[#allocation11 + $0xd60] sm:$0xff]
    %v1437 = vld [vmem:[#allocation11 + $0xd68] sm:$0xff]
    %v1438 = vld [vmem:[#allocation11 + $0xd70] sm:$0xff]
    %v1439 = vld [vmem:[#allocation11 + $0xd78] sm:$0xff]
    %v1440 = vld [vmem:[#allocation11 + $0xd80] sm:$0xff]
    %v1441 = vld [vmem:[#allocation11 + $0xd88] sm:$0xff]
    %v1442 = vld [vmem:[#allocation11 + $0xd90] sm:$0xff]
    %v1443 = vld [vmem:[#allocation11 + $0xd98] sm:$0xff]
    %v1444 = vld [vmem:[#allocation11 + $0xda0] sm:$0xff]
    %v1445 = vld [vmem:[#allocation11 + $0xda8] sm:$0xff]
    %v1446 = vld [vmem:[#allocation11 + $0xdb0] sm:$0xff]
    %v1447 = vld [vmem:[#allocation11 + $0xdb8] sm:$0xff]
    %v1448 = vld [vmem:[#allocation11 + $0xdc0] sm:$0xff]
    %v1449 = vld [vmem:[#allocation11 + $0xdc8] sm:$0xff]
    %v1450 = vld [vmem:[#allocation11 + $0xdd0] sm:$0xff]
    %v1451 = vld [vmem:[#allocation11 + $0xdd8] sm:$0xff]
    %v1452 = vld [vmem:[#allocation11 + $0xde0] sm:$0xff]
    %v1453 = vld [vmem:[#allocation11 + $0xde8] sm:$0xff]
    %v1454 = vld [vmem:[#allocation11 + $0xdf0] sm:$0xff]
    %v1455 = vld [vmem:[#allocation11 + $0xdf8] sm:$0xff]
    %v1456 = vld [vmem:[#allocation11 + $0xe00] sm:$0xff]
    %v1457 = vld [vmem:[#allocation11 + $0xe08] sm:$0xff]
    %v1458 = vld [vmem:[#allocation11 + $0xe10] sm:$0xff]
    %v1459 = vld [vmem:[#allocation11 + $0xe18] sm:$0xff]
    %v1460 = vld [vmem:[#allocation11 + $0xe20] sm:$0xff]
    %v1461 = vld [vmem:[#allocation11 + $0xe28] sm:$0xff]
    %v1462 = vld [vmem:[#allocation11 + $0xe30] sm:$0xff]
    %v1463 = vld [vmem:[#allocation11 + $0xe38] sm:$0xff]
    %v1464 = vld [vmem:[#allocation11 + $0xe40] sm:$0xff]
    %v1465 = vld [vmem:[#allocation11 + $0xe48] sm:$0xff]
    %v1466 = vld [vmem:[#allocation11 + $0xe50] sm:$0xff]
    %v1467 = vld [vmem:[#allocation11 + $0xe58] sm:$0xff]
    %v1468 = vld [vmem:[#allocation11 + $0xe60] sm:$0xff]
    %v1469 = vld [vmem:[#allocation11 + $0xe68] sm:$0xff]
    %v1470 = vld [vmem:[#allocation11 + $0xe70] sm:$0xff]
    %v1471 = vld [vmem:[#allocation11 + $0xe78] sm:$0xff]
    %v1472 = vld [vmem:[#allocation11 + $0xe80] sm:$0xff]
    %v1473 = vld [vmem:[#allocation11 + $0xe88] sm:$0xff]
    %v1474 = vld [vmem:[#allocation11 + $0xe90] sm:$0xff]
    %v1475 = vld [vmem:[#allocation11 + $0xe98] sm:$0xff]
    %v1476 = vld [vmem:[#allocation11 + $0xea0] sm:$0xff]
    %v1477 = vld [vmem:[#allocation11 + $0xea8] sm:$0xff]
    %v1478 = vld [vmem:[#allocation11 + $0xeb0] sm:$0xff]
    %v1479 = vld [vmem:[#allocation11 + $0xeb8] sm:$0xff]
    %v1480 = vld [vmem:[#allocation11 + $0xec0] sm:$0xff]
    %v1481 = vld [vmem:[#allocation11 + $0xec8] sm:$0xff]
    %v1482 = vld [vmem:[#allocation11 + $0xed0] sm:$0xff]
    %v1483 = vld [vmem:[#allocation11 + $0xed8] sm:$0xff]
    %v1484 = vld [vmem:[#allocation11 + $0xee0] sm:$0xff]
    %v1485 = vld [vmem:[#allocation11 + $0xee8] sm:$0xff]
    %v1486 = vld [vmem:[#allocation11 + $0xef0] sm:$0xff]
    %v1487 = vld [vmem:[#allocation11 + $0xef8] sm:$0xff]
    %v1488 = vld [vmem:[#allocation11 + $0xf00] sm:$0xff]
    %v1489 = vld [vmem:[#allocation11 + $0xf08] sm:$0xff]
    %v1490 = vld [vmem:[#allocation11 + $0xf10] sm:$0xff]
    %v1491 = vld [vmem:[#allocation11 + $0xf18] sm:$0xff]
    %v1492 = vld [vmem:[#allocation11 + $0xf20] sm:$0xff]
    %v1493 = vld [vmem:[#allocation11 + $0xf28] sm:$0xff]
    %v1494 = vld [vmem:[#allocation11 + $0xf30] sm:$0xff]
    %v1495 = vld [vmem:[#allocation11 + $0xf38] sm:$0xff]
    %v1496 = vld [vmem:[#allocation11 + $0xf40] sm:$0xff]
    %v1497 = vld [vmem:[#allocation11 + $0xf48] sm:$0xff]
    %v1498 = vld [vmem:[#allocation11 + $0xf50] sm:$0xff]
    %v1499 = vld [vmem:[#allocation11 + $0xf58] sm:$0xff]
    %v1500 = vld [vmem:[#allocation11 + $0xf60] sm:$0xff]
    %v1501 = vld [vmem:[#allocation11 + $0xf68] sm:$0xff]
    %v1502 = vld [vmem:[#allocation11 + $0xf70] sm:$0xff]
    %v1503 = vld [vmem:[#allocation11 + $0xf78] sm:$0xff]
    %v1504 = vld [vmem:[#allocation11 + $0xf80] sm:$0xff]
    %v1505 = vld [vmem:[#allocation11 + $0xf88] sm:$0xff]
    %v1506 = vld [vmem:[#allocation11 + $0xf90] sm:$0xff]
    %v1507 = vld [vmem:[#allocation11 + $0xf98] sm:$0xff]
    %v1508 = vld [vmem:[#allocation11 + $0xfa0] sm:$0xff]
    %v1509 = vld [vmem:[#allocation11 + $0xfa8] sm:$0xff]
    %v1510 = vld [vmem:[#allocation11 + $0xfb0] sm:$0xff]
    %v1511 = vld [vmem:[#allocation11 + $0xfb8] sm:$0xff]
    %v1512 = vld [vmem:[#allocation11 + $0xfc0] sm:$0xff]
    %v1513 = vld [vmem:[#allocation11 + $0xfc8] sm:$0xff]
    %v1514 = vld [vmem:[#allocation11 + $0xfd0] sm:$0xff]
    %v1515 = vld [vmem:[#allocation11 + $0xfd8] sm:$0xff]
    %v1516 = vld [vmem:[#allocation11 + $0xfe0] sm:$0xff]
    %v1517 = vld [vmem:[#allocation11 + $0xfe8] sm:$0xff]
    %v1518 = vld [vmem:[#allocation11 + $0xff0] sm:$0xff]
    %v1519 = vld [vmem:[#allocation11 + $0xff8] sm:$0xff]
    %v1520 = vld [vmem:[#allocation13] sm:$0xf]
    %v1522 = vlaneseq
    %v1523 = vshrl.u32 %v1522, 7
    %v1524 = vsub.s32 0, %v1523
    %v1525 = vrot.slane %v1520, %v1524
    %v1526 = vlaneseq
    %v1527 = vshrl.u32 %v1526, 7
    %v1528 = vsub.s32 1, %v1527
    %v1529 = vrot.slane %v1520, %v1528
    %v1530 = vlaneseq
    %v1531 = vshrl.u32 %v1530, 7
    %v1532 = vsub.s32 2, %v1531
    %v1533 = vrot.slane %v1520, %v1532
    %v1534 = vlaneseq
    %v1535 = vshrl.u32 %v1534, 7
    %v1536 = vsub.s32 3, %v1535
    %v1537 = vrot.slane %v1520, %v1536
    %1542 = vmatprep.subr.mxu0 %v1069
    %1543 = vmatpush1.msra.mxu0 %v1068
    %1544 = vmatprep.subr.mxu0 %v1065
    %1545 = vmatpush1.msra.mxu0 %v1064
    %1546 = vmatprep.subr.mxu0 %v1061
    %1547 = vmatpush1.msra.mxu0 %v1060
    %1548 = vmatprep.subr.mxu0 %v1057
    %1549 = vmatpush1.msra.mxu0 %v1056
    %1550 = vmatprep.subr.mxu0 %v1053
    %1551 = vmatpush1.msra.mxu0 %v1052
    %1552 = vmatprep.subr.mxu0 %v1049
    %1553 = vmatpush1.msra.mxu0 %v1048
    %1554 = vmatprep.subr.mxu0 %v1045
    %1555 = vmatpush1.msra.mxu0 %v1044
    %1556 = vmatprep.subr.mxu0 %v1041
    %1557 = vmatpush1.msra.mxu0 %v1040
    %1558 = vmatprep.subr.mxu0 %v1037
    %1559 = vmatpush1.msra.mxu0 %v1036
    %1560 = vmatprep.subr.mxu0 %v1033
    %1561 = vmatpush1.msra.mxu0 %v1032
    %1562 = vmatprep.subr.mxu0 %v1029
    %1563 = vmatpush1.msra.mxu0 %v1028
    %1564 = vmatprep.subr.mxu0 %v1025
    %1565 = vmatpush1.msra.mxu0 %v1024
    %1566 = vmatprep.subr.mxu0 %v1021
    %1567 = vmatpush1.msra.mxu0 %v1020
    %1568 = vmatprep.subr.mxu0 %v1017
    %1569 = vmatpush1.msra.mxu0 %v1016
    %1570 = vmatprep.subr.mxu0 %v1013
    %1571 = vmatpush1.msra.mxu0 %v1012
    %1572 = vmatprep.subr.mxu0 %v1009
    %1573 = vmatpush1.msra.mxu0 %v1008
    %1574 = vmatprep.subr.mxu0 %v1133
    %1575 = vmatpush2.msra.mxu0 %v1132
    %1576 = vmatprep.subr.mxu0 %v1129
    %1577 = vmatpush2.msra.mxu0 %v1128
    %1578 = vmatprep.subr.mxu0 %v1125
    %1579 = vmatpush2.msra.mxu0 %v1124
    %1580 = vmatprep.subr.mxu0 %v1121
    %1581 = vmatpush2.msra.mxu0 %v1120
    %1582 = vmatprep.subr.mxu0 %v1117
    %1583 = vmatpush2.msra.mxu0 %v1116
    %1584 = vmatprep.subr.mxu0 %v1113
    %1585 = vmatpush2.msra.mxu0 %v1112
    %1586 = vmatprep.subr.mxu0 %v1109
    %1587 = vmatpush2.msra.mxu0 %v1108
    %1588 = vmatprep.subr.mxu0 %v1105
    %1589 = vmatpush2.msra.mxu0 %v1104
    %1590 = vmatprep.subr.mxu0 %v1101
    %1591 = vmatpush2.msra.mxu0 %v1100
    %1592 = vmatprep.subr.mxu0 %v1097
    %1593 = vmatpush2.msra.mxu0 %v1096
    %1594 = vmatprep.subr.mxu0 %v1093
    %1595 = vmatpush2.msra.mxu0 %v1092
    %1596 = vmatprep.subr.mxu0 %v1089
    %1597 = vmatpush2.msra.mxu0 %v1088
    %1598 = vmatprep.subr.mxu0 %v1085
    %1599 = vmatpush2.msra.mxu0 %v1084
    %1600 = vmatprep.subr.mxu0 %v1081
    %1601 = vmatpush2.msra.mxu0 %v1080
    %1602 = vmatprep.subr.mxu0 %v1077
    %1603 = vmatpush2.msra.mxu0 %v1076
    %1604 = vmatprep.subr.mxu0 %v1073
    %1605 = vmatpush2.msra.mxu0 %v1072
    %1606 = vmatprep.mubr.f32.mxu0 %v993
    %1607 = vmatmul.mubr.f32.gmra.mxu0 %v992
    %v1608 = vpop.f32.mrf.mxu0
    %v1609 = vadd.f32 %v1525, %v1608
    %v1610 = vpop.f32.mrf.mxu0
    %v1611 = vadd.f32 %v1529, %v1610
    %1612 = vmatprep.mubr.f32.mxu0 %v1001
    %1613 = vmatmul.mubr.f32.gmra.mxu0 %v1000
    %v1614 = vpop.f32.mrf.mxu0
    %v1615 = vadd.f32 %v1525, %v1614
    %v1616 = vpop.f32.mrf.mxu0
    %v1617 = vadd.f32 %v1529, %v1616
    %1618 = vdwg.mxu0
    %1619 = vmatprep.subr.mxu0 %v1197
    %1620 = vmatpush1.msra.mxu0 %v1196
    %1621 = vmatprep.subr.mxu0 %v1193
    %1622 = vmatpush1.msra.mxu0 %v1192
    %1623 = vmatprep.subr.mxu0 %v1189
    %1624 = vmatpush1.msra.mxu0 %v1188
    %1625 = vmatprep.subr.mxu0 %v1185
    %1626 = vmatpush1.msra.mxu0 %v1184
    %1627 = vmatprep.subr.mxu0 %v1181
    %1628 = vmatpush1.msra.mxu0 %v1180
    %1629 = vmatprep.subr.mxu0 %v1177
    %1630 = vmatpush1.msra.mxu0 %v1176
    %1631 = vmatprep.subr.mxu0 %v1173
    %1632 = vmatpush1.msra.mxu0 %v1172
    %1633 = vmatprep.subr.mxu0 %v1169
    %1634 = vmatpush1.msra.mxu0 %v1168
    %1635 = vmatprep.subr.mxu0 %v1165
    %1636 = vmatpush1.msra.mxu0 %v1164
    %1637 = vmatprep.subr.mxu0 %v1161
    %1638 = vmatpush1.msra.mxu0 %v1160
    %1639 = vmatprep.subr.mxu0 %v1157
    %1640 = vmatpush1.msra.mxu0 %v1156
    %1641 = vmatprep.subr.mxu0 %v1153
    %1642 = vmatpush1.msra.mxu0 %v1152
    %1643 = vmatprep.subr.mxu0 %v1149
    %1644 = vmatpush1.msra.mxu0 %v1148
    %1645 = vmatprep.subr.mxu0 %v1145
    %1646 = vmatpush1.msra.mxu0 %v1144
    %1647 = vmatprep.subr.mxu0 %v1141
    %1648 = vmatpush1.msra.mxu0 %v1140
    %1649 = vmatprep.subr.mxu0 %v1137
    %1650 = vmatpush1.msra.mxu0 %v1136
    %1651 = vmatprep.subr.mxu0 %v1261
    %1652 = vmatpush2.msra.mxu0 %v1260
    %1653 = vmatprep.subr.mxu0 %v1257
    %1654 = vmatpush2.msra.mxu0 %v1256
    %1655 = vmatprep.subr.mxu0 %v1253
    %1656 = vmatpush2.msra.mxu0 %v1252
    %1657 = vmatprep.subr.mxu0 %v1249
    %1658 = vmatpush2.msra.mxu0 %v1248
    %1659 = vmatprep.subr.mxu0 %v1245
    %1660 = vmatpush2.msra.mxu0 %v1244
    %1661 = vmatprep.subr.mxu0 %v1241
    %1662 = vmatpush2.msra.mxu0 %v1240
    %1663 = vmatprep.subr.mxu0 %v1237
    %1664 = vmatpush2.msra.mxu0 %v1236
    %1665 = vmatprep.subr.mxu0 %v1233
    %1666 = vmatpush2.msra.mxu0 %v1232
    %1667 = vmatprep.subr.mxu0 %v1229
    %1668 = vmatpush2.msra.mxu0 %v1228
    %1669 = vmatprep.subr.mxu0 %v1225
    %1670 = vmatpush2.msra.mxu0 %v1224
    %1671 = vmatprep.subr.mxu0 %v1221
    %1672 = vmatpush2.msra.mxu0 %v1220
    %1673 = vmatprep.subr.mxu0 %v1217
    %1674 = vmatpush2.msra.mxu0 %v1216
    %1675 = vmatprep.subr.mxu0 %v1213
    %1676 = vmatpush2.msra.mxu0 %v1212
    %1677 = vmatprep.subr.mxu0 %v1209
    %1678 = vmatpush2.msra.mxu0 %v1208
    %1679 = vmatprep.subr.mxu0 %v1205
    %1680 = vmatpush2.msra.mxu0 %v1204
    %1681 = vmatprep.subr.mxu0 %v1201
    %1682 = vmatpush2.msra.mxu0 %v1200
    %1683 = vmatprep.mubr.f32.mxu0 %v995
    %1684 = vmatmul.mubr.f32.gmra.mxu0 %v994
    %v1685 = vpop.f32.mrf.mxu0
    %v1686 = vadd.f32 %v1609, %v1685
    %v1687 = vpop.f32.mrf.mxu0
    %v1688 = vadd.f32 %v1611, %v1687
    %1689 = vmatprep.mubr.f32.mxu0 %v1003
    %1690 = vmatmul.mubr.f32.gmra.mxu0 %v1002
    %v1691 = vpop.f32.mrf.mxu0
    %v1692 = vadd.f32 %v1615, %v1691
    %v1693 = vpop.f32.mrf.mxu0
    %v1694 = vadd.f32 %v1617, %v1693
    %1695 = vdwg.mxu0
    %1696 = vmatprep.subr.mxu0 %v1325
    %1697 = vmatpush1.msra.mxu0 %v1324
    %1698 = vmatprep.subr.mxu0 %v1321
    %1699 = vmatpush1.msra.mxu0 %v1320
    %1700 = vmatprep.subr.mxu0 %v1317
    %1701 = vmatpush1.msra.mxu0 %v1316
    %1702 = vmatprep.subr.mxu0 %v1313
    %1703 = vmatpush1.msra.mxu0 %v1312
    %1704 = vmatprep.subr.mxu0 %v1309
    %1705 = vmatpush1.msra.mxu0 %v1308
    %1706 = vmatprep.subr.mxu0 %v1305
    %1707 = vmatpush1.msra.mxu0 %v1304
    %1708 = vmatprep.subr.mxu0 %v1301
    %1709 = vmatpush1.msra.mxu0 %v1300
    %1710 = vmatprep.subr.mxu0 %v1297
    %1711 = vmatpush1.msra.mxu0 %v1296
    %1712 = vmatprep.subr.mxu0 %v1293
    %1713 = vmatpush1.msra.mxu0 %v1292
    %1714 = vmatprep.subr.mxu0 %v1289
    %1715 = vmatpush1.msra.mxu0 %v1288
    %1716 = vmatprep.subr.mxu0 %v1285
    %1717 = vmatpush1.msra.mxu0 %v1284
    %1718 = vmatprep.subr.mxu0 %v1281
    %1719 = vmatpush1.msra.mxu0 %v1280
    %1720 = vmatprep.subr.mxu0 %v1277
    %1721 = vmatpush1.msra.mxu0 %v1276
    %1722 = vmatprep.subr.mxu0 %v1273
    %1723 = vmatpush1.msra.mxu0 %v1272
    %1724 = vmatprep.subr.mxu0 %v1269
    %1725 = vmatpush1.msra.mxu0 %v1268
    %1726 = vmatprep.subr.mxu0 %v1265
    %1727 = vmatpush1.msra.mxu0 %v1264
    %1728 = vmatprep.subr.mxu0 %v1389
    %1729 = vmatpush2.msra.mxu0 %v1388
    %1730 = vmatprep.subr.mxu0 %v1385
    %1731 = vmatpush2.msra.mxu0 %v1384
    %1732 = vmatprep.subr.mxu0 %v1381
    %1733 = vmatpush2.msra.mxu0 %v1380
    %1734 = vmatprep.subr.mxu0 %v1377
    %1735 = vmatpush2.msra.mxu0 %v1376
    %1736 = vmatprep.subr.mxu0 %v1373
    %1737 = vmatpush2.msra.mxu0 %v1372
    %1738 = vmatprep.subr.mxu0 %v1369
    %1739 = vmatpush2.msra.mxu0 %v1368
    %1740 = vmatprep.subr.mxu0 %v1365
    %1741 = vmatpush2.msra.mxu0 %v1364
    %1742 = vmatprep.subr.mxu0 %v1361
    %1743 = vmatpush2.msra.mxu0 %v1360
    %1744 = vmatprep.subr.mxu0 %v1357
    %1745 = vmatpush2.msra.mxu0 %v1356
    %1746 = vmatprep.subr.mxu0 %v1353
    %1747 = vmatpush2.msra.mxu0 %v1352
    %1748 = vmatprep.subr.mxu0 %v1349
    %1749 = vmatpush2.msra.mxu0 %v1348
    %1750 = vmatprep.subr.mxu0 %v1345
    %1751 = vmatpush2.msra.mxu0 %v1344
    %1752 = vmatprep.subr.mxu0 %v1341
    %1753 = vmatpush2.msra.mxu0 %v1340
    %1754 = vmatprep.subr.mxu0 %v1337
    %1755 = vmatpush2.msra.mxu0 %v1336
    %1756 = vmatprep.subr.mxu0 %v1333
    %1757 = vmatpush2.msra.mxu0 %v1332
    %1758 = vmatprep.subr.mxu0 %v1329
    %1759 = vmatpush2.msra.mxu0 %v1328
    %1760 = vmatprep.mubr.f32.mxu0 %v997
    %1761 = vmatmul.mubr.f32.gmra.mxu0 %v996
    %v1762 = vpop.f32.mrf.mxu0
    %v1763 = vadd.f32 %v1686, %v1762
    %v1764 = vpop.f32.mrf.mxu0
    %v1765 = vadd.f32 %v1688, %v1764
    %1766 = vmatprep.mubr.f32.mxu0 %v1005
    %1767 = vmatmul.mubr.f32.gmra.mxu0 %v1004
    %v1768 = vpop.f32.mrf.mxu0
    %v1769 = vadd.f32 %v1692, %v1768
    %v1770 = vpop.f32.mrf.mxu0
    %v1771 = vadd.f32 %v1694, %v1770
    %1772 = vdwg.mxu0
    %1773 = vmatprep.subr.mxu0 %v1453
    %1774 = vmatpush1.msra.mxu0 %v1452
    %1775 = vmatprep.subr.mxu0 %v1449
    %1776 = vmatpush1.msra.mxu0 %v1448
    %1777 = vmatprep.subr.mxu0 %v1445
    %1778 = vmatpush1.msra.mxu0 %v1444
    %1779 = vmatprep.subr.mxu0 %v1441
    %1780 = vmatpush1.msra.mxu0 %v1440
    %1781 = vmatprep.subr.mxu0 %v1437
    %1782 = vmatpush1.msra.mxu0 %v1436
    %1783 = vmatprep.subr.mxu0 %v1433
    %1784 = vmatpush1.msra.mxu0 %v1432
    %1785 = vmatprep.subr.mxu0 %v1429
    %1786 = vmatpush1.msra.mxu0 %v1428
    %1787 = vmatprep.subr.mxu0 %v1425
    %1788 = vmatpush1.msra.mxu0 %v1424
    %1789 = vmatprep.subr.mxu0 %v1421
    %1790 = vmatpush1.msra.mxu0 %v1420
    %1791 = vmatprep.subr.mxu0 %v1417
    %1792 = vmatpush1.msra.mxu0 %v1416
    %1793 = vmatprep.subr.mxu0 %v1413
    %1794 = vmatpush1.msra.mxu0 %v1412
    %1795 = vmatprep.subr.mxu0 %v1409
    %1796 = vmatpush1.msra.mxu0 %v1408
    %1797 = vmatprep.subr.mxu0 %v1405
    %1798 = vmatpush1.msra.mxu0 %v1404
    %1799 = vmatprep.subr.mxu0 %v1401
    %1800 = vmatpush1.msra.mxu0 %v1400
    %1801 = vmatprep.subr.mxu0 %v1397
    %1802 = vmatpush1.msra.mxu0 %v1396
    %1803 = vmatprep.subr.mxu0 %v1393
    %1804 = vmatpush1.msra.mxu0 %v1392
    %1805 = vmatprep.subr.mxu0 %v1517
    %1806 = vmatpush2.msra.mxu0 %v1516
    %1807 = vmatprep.subr.mxu0 %v1513
    %1808 = vmatpush2.msra.mxu0 %v1512
    %1809 = vmatprep.subr.mxu0 %v1509
    %1810 = vmatpush2.msra.mxu0 %v1508
    %1811 = vmatprep.subr.mxu0 %v1505
    %1812 = vmatpush2.msra.mxu0 %v1504
    %1813 = vmatprep.subr.mxu0 %v1501
    %1814 = vmatpush2.msra.mxu0 %v1500
    %1815 = vmatprep.subr.mxu0 %v1497
    %1816 = vmatpush2.msra.mxu0 %v1496
    %1817 = vmatprep.subr.mxu0 %v1493
    %1818 = vmatpush2.msra.mxu0 %v1492
    %1819 = vmatprep.subr.mxu0 %v1489
    %1820 = vmatpush2.msra.mxu0 %v1488
    %1821 = vmatprep.subr.mxu0 %v1485
    %1822 = vmatpush2.msra.mxu0 %v1484
    %1823 = vmatprep.subr.mxu0 %v1481
    %1824 = vmatpush2.msra.mxu0 %v1480
    %1825 = vmatprep.subr.mxu0 %v1477
    %1826 = vmatpush2.msra.mxu0 %v1476
    %1827 = vmatprep.subr.mxu0 %v1473
    %1828 = vmatpush2.msra.mxu0 %v1472
    %1829 = vmatprep.subr.mxu0 %v1469
    %1830 = vmatpush2.msra.mxu0 %v1468
    %1831 = vmatprep.subr.mxu0 %v1465
    %1832 = vmatpush2.msra.mxu0 %v1464
    %1833 = vmatprep.subr.mxu0 %v1461
    %1834 = vmatpush2.msra.mxu0 %v1460
    %1835 = vmatprep.subr.mxu0 %v1457
    %1836 = vmatpush2.msra.mxu0 %v1456
    %1837 = vmatprep.mubr.f32.mxu0 %v999
    %1838 = vmatmul.mubr.f32.gmra.mxu0 %v998
    %v1839 = vpop.f32.mrf.mxu0
    %v1840 = vadd.f32 %v1763, %v1839
    %v1841 = vpop.f32.mrf.mxu0
    %v1842 = vadd.f32 %v1765, %v1841
    %1843 = vmatprep.mubr.f32.mxu0 %v1007
    %1844 = vmatmul.mubr.f32.gmra.mxu0 %v1006
    %v1845 = vpop.f32.mrf.mxu0
    %v1846 = vadd.f32 %v1769, %v1845
    %v1847 = vpop.f32.mrf.mxu0
    %v1848 = vadd.f32 %v1771, %v1847
    %1849 = vdwg.mxu0
    %1850 = vmatprep.subr.mxu0 %v1071
    %1851 = vmatpush1.msra.mxu0 %v1070
    %1852 = vmatprep.subr.mxu0 %v1067
    %1853 = vmatpush1.msra.mxu0 %v1066
    %1854 = vmatprep.subr.mxu0 %v1063
    %1855 = vmatpush1.msra.mxu0 %v1062
    %1856 = vmatprep.subr.mxu0 %v1059
    %1857 = vmatpush1.msra.mxu0 %v1058
    %1858 = vmatprep.subr.mxu0 %v1055
    %1859 = vmatpush1.msra.mxu0 %v1054
    %1860 = vmatprep.subr.mxu0 %v1051
    %1861 = vmatpush1.msra.mxu0 %v1050
    %1862 = vmatprep.subr.mxu0 %v1047
    %1863 = vmatpush1.msra.mxu0 %v1046
    %1864 = vmatprep.subr.mxu0 %v1043
    %1865 = vmatpush1.msra.mxu0 %v1042
    %1866 = vmatprep.subr.mxu0 %v1039
    %1867 = vmatpush1.msra.mxu0 %v1038
    %1868 = vmatprep.subr.mxu0 %v1035
    %1869 = vmatpush1.msra.mxu0 %v1034
    %1870 = vmatprep.subr.mxu0 %v1031
    %1871 = vmatpush1.msra.mxu0 %v1030
    %1872 = vmatprep.subr.mxu0 %v1027
    %1873 = vmatpush1.msra.mxu0 %v1026
    %1874 = vmatprep.subr.mxu0 %v1023
    %1875 = vmatpush1.msra.mxu0 %v1022
    %1876 = vmatprep.subr.mxu0 %v1019
    %1877 = vmatpush1.msra.mxu0 %v1018
    %1878 = vmatprep.subr.mxu0 %v1015
    %1879 = vmatpush1.msra.mxu0 %v1014
    %1880 = vmatprep.subr.mxu0 %v1011
    %1881 = vmatpush1.msra.mxu0 %v1010
    %1882 = vmatprep.subr.mxu0 %v1135
    %1883 = vmatpush2.msra.mxu0 %v1134
    %1884 = vmatprep.subr.mxu0 %v1131
    %1885 = vmatpush2.msra.mxu0 %v1130
    %1886 = vmatprep.subr.mxu0 %v1127
    %1887 = vmatpush2.msra.mxu0 %v1126
    %1888 = vmatprep.subr.mxu0 %v1123
    %1889 = vmatpush2.msra.mxu0 %v1122
    %1890 = vmatprep.subr.mxu0 %v1119
    %1891 = vmatpush2.msra.mxu0 %v1118
    %1892 = vmatprep.subr.mxu0 %v1115
    %1893 = vmatpush2.msra.mxu0 %v1114
    %1894 = vmatprep.subr.mxu0 %v1111
    %1895 = vmatpush2.msra.mxu0 %v1110
    %1896 = vmatprep.subr.mxu0 %v1107
    %1897 = vmatpush2.msra.mxu0 %v1106
    %1898 = vmatprep.subr.mxu0 %v1103
    %1899 = vmatpush2.msra.mxu0 %v1102
    %1900 = vmatprep.subr.mxu0 %v1099
    %1901 = vmatpush2.msra.mxu0 %v1098
    %1902 = vmatprep.subr.mxu0 %v1095
    %1903 = vmatpush2.msra.mxu0 %v1094
    %1904 = vmatprep.subr.mxu0 %v1091
    %1905 = vmatpush2.msra.mxu0 %v1090
    %1906 = vmatprep.subr.mxu0 %v1087
    %1907 = vmatpush2.msra.mxu0 %v1086
    %1908 = vmatprep.subr.mxu0 %v1083
    %1909 = vmatpush2.msra.mxu0 %v1082
    %1910 = vmatprep.subr.mxu0 %v1079
    %1911 = vmatpush2.msra.mxu0 %v1078
    %1912 = vmatprep.subr.mxu0 %v1075
    %1913 = vmatpush2.msra.mxu0 %v1074
    %1914 = vmatprep.mubr.f32.mxu0 %v993
    %1915 = vmatmul.mubr.f32.gmra.mxu0 %v992
    %v1916 = vpop.f32.mrf.mxu0
    %v1917 = vadd.f32 %v1533, %v1916
    %v1918 = vpop.f32.mrf.mxu0
    %v1919 = vadd.f32 %v1537, %v1918
    %1920 = vmatprep.mubr.f32.mxu0 %v1001
    %1921 = vmatmul.mubr.f32.gmra.mxu0 %v1000
    %v1922 = vpop.f32.mrf.mxu0
    %v1923 = vadd.f32 %v1533, %v1922
    %v1924 = vpop.f32.mrf.mxu0
    %v1925 = vadd.f32 %v1537, %v1924
    %1926 = vdwg.mxu0
    %1927 = vmatprep.subr.mxu0 %v1199
    %1928 = vmatpush1.msra.mxu0 %v1198
    %1929 = vmatprep.subr.mxu0 %v1195
    %1930 = vmatpush1.msra.mxu0 %v1194
    %1931 = vmatprep.subr.mxu0 %v1191
    %1932 = vmatpush1.msra.mxu0 %v1190
    %1933 = vmatprep.subr.mxu0 %v1187
    %1934 = vmatpush1.msra.mxu0 %v1186
    %1935 = vmatprep.subr.mxu0 %v1183
    %1936 = vmatpush1.msra.mxu0 %v1182
    %1937 = vmatprep.subr.mxu0 %v1179
    %1938 = vmatpush1.msra.mxu0 %v1178
    %1939 = vmatprep.subr.mxu0 %v1175
    %1940 = vmatpush1.msra.mxu0 %v1174
    %1941 = vmatprep.subr.mxu0 %v1171
    %1942 = vmatpush1.msra.mxu0 %v1170
    %1943 = vmatprep.subr.mxu0 %v1167
    %1944 = vmatpush1.msra.mxu0 %v1166
    %1945 = vmatprep.subr.mxu0 %v1163
    %1946 = vmatpush1.msra.mxu0 %v1162
    %1947 = vmatprep.subr.mxu0 %v1159
    %1948 = vmatpush1.msra.mxu0 %v1158
    %1949 = vmatprep.subr.mxu0 %v1155
    %1950 = vmatpush1.msra.mxu0 %v1154
    %1951 = vmatprep.subr.mxu0 %v1151
    %1952 = vmatpush1.msra.mxu0 %v1150
    %1953 = vmatprep.subr.mxu0 %v1147
    %1954 = vmatpush1.msra.mxu0 %v1146
    %1955 = vmatprep.subr.mxu0 %v1143
    %1956 = vmatpush1.msra.mxu0 %v1142
    %1957 = vmatprep.subr.mxu0 %v1139
    %1958 = vmatpush1.msra.mxu0 %v1138
    %1959 = vmatprep.subr.mxu0 %v1263
    %1960 = vmatpush2.msra.mxu0 %v1262
    %1961 = vmatprep.subr.mxu0 %v1259
    %1962 = vmatpush2.msra.mxu0 %v1258
    %1963 = vmatprep.subr.mxu0 %v1255
    %1964 = vmatpush2.msra.mxu0 %v1254
    %1965 = vmatprep.subr.mxu0 %v1251
    %1966 = vmatpush2.msra.mxu0 %v1250
    %1967 = vmatprep.subr.mxu0 %v1247
    %1968 = vmatpush2.msra.mxu0 %v1246
    %1969 = vmatprep.subr.mxu0 %v1243
    %1970 = vmatpush2.msra.mxu0 %v1242
    %1971 = vmatprep.subr.mxu0 %v1239
    %1972 = vmatpush2.msra.mxu0 %v1238
    %1973 = vmatprep.subr.mxu0 %v1235
    %1974 = vmatpush2.msra.mxu0 %v1234
    %1975 = vmatprep.subr.mxu0 %v1231
    %1976 = vmatpush2.msra.mxu0 %v1230
    %1977 = vmatprep.subr.mxu0 %v1227
    %1978 = vmatpush2.msra.mxu0 %v1226
    %1979 = vmatprep.subr.mxu0 %v1223
    %1980 = vmatpush2.msra.mxu0 %v1222
    %1981 = vmatprep.subr.mxu0 %v1219
    %1982 = vmatpush2.msra.mxu0 %v1218
    %1983 = vmatprep.subr.mxu0 %v1215
    %1984 = vmatpush2.msra.mxu0 %v1214
    %1985 = vmatprep.subr.mxu0 %v1211
    %1986 = vmatpush2.msra.mxu0 %v1210
    %1987 = vmatprep.subr.mxu0 %v1207
    %1988 = vmatpush2.msra.mxu0 %v1206
    %1989 = vmatprep.subr.mxu0 %v1203
    %1990 = vmatpush2.msra.mxu0 %v1202
    %1991 = vmatprep.mubr.f32.mxu0 %v995
    %1992 = vmatmul.mubr.f32.gmra.mxu0 %v994
    %v1993 = vpop.f32.mrf.mxu0
    %v1994 = vadd.f32 %v1917, %v1993
    %v1995 = vpop.f32.mrf.mxu0
    %v1996 = vadd.f32 %v1919, %v1995
    %1997 = vmatprep.mubr.f32.mxu0 %v1003
    %1998 = vmatmul.mubr.f32.gmra.mxu0 %v1002
    %v1999 = vpop.f32.mrf.mxu0
    %v2000 = vadd.f32 %v1923, %v1999
    %v2001 = vpop.f32.mrf.mxu0
    %v2002 = vadd.f32 %v1925, %v2001
    %2003 = vdwg.mxu0
    %2004 = vmatprep.subr.mxu0 %v1327
    %2005 = vmatpush1.msra.mxu0 %v1326
    %2006 = vmatprep.subr.mxu0 %v1323
    %2007 = vmatpush1.msra.mxu0 %v1322
    %2008 = vmatprep.subr.mxu0 %v1319
    %2009 = vmatpush1.msra.mxu0 %v1318
    %2010 = vmatprep.subr.mxu0 %v1315
    %2011 = vmatpush1.msra.mxu0 %v1314
    %2012 = vmatprep.subr.mxu0 %v1311
    %2013 = vmatpush1.msra.mxu0 %v1310
    %2014 = vmatprep.subr.mxu0 %v1307
    %2015 = vmatpush1.msra.mxu0 %v1306
    %2016 = vmatprep.subr.mxu0 %v1303
    %2017 = vmatpush1.msra.mxu0 %v1302
    %2018 = vmatprep.subr.mxu0 %v1299
    %2019 = vmatpush1.msra.mxu0 %v1298
    %2020 = vmatprep.subr.mxu0 %v1295
    %2021 = vmatpush1.msra.mxu0 %v1294
    %2022 = vmatprep.subr.mxu0 %v1291
    %2023 = vmatpush1.msra.mxu0 %v1290
    %2024 = vmatprep.subr.mxu0 %v1287
    %2025 = vmatpush1.msra.mxu0 %v1286
    %2026 = vmatprep.subr.mxu0 %v1283
    %2027 = vmatpush1.msra.mxu0 %v1282
    %2028 = vmatprep.subr.mxu0 %v1279
    %2029 = vmatpush1.msra.mxu0 %v1278
    %2030 = vmatprep.subr.mxu0 %v1275
    %2031 = vmatpush1.msra.mxu0 %v1274
    %2032 = vmatprep.subr.mxu0 %v1271
    %2033 = vmatpush1.msra.mxu0 %v1270
    %2034 = vmatprep.subr.mxu0 %v1267
    %2035 = vmatpush1.msra.mxu0 %v1266
    %2036 = vmatprep.subr.mxu0 %v1391
    %2037 = vmatpush2.msra.mxu0 %v1390
    %2038 = vmatprep.subr.mxu0 %v1387
    %2039 = vmatpush2.msra.mxu0 %v1386
    %2040 = vmatprep.subr.mxu0 %v1383
    %2041 = vmatpush2.msra.mxu0 %v1382
    %2042 = vmatprep.subr.mxu0 %v1379
    %2043 = vmatpush2.msra.mxu0 %v1378
    %2044 = vmatprep.subr.mxu0 %v1375
    %2045 = vmatpush2.msra.mxu0 %v1374
    %2046 = vmatprep.subr.mxu0 %v1371
    %2047 = vmatpush2.msra.mxu0 %v1370
    %2048 = vmatprep.subr.mxu0 %v1367
    %2049 = vmatpush2.msra.mxu0 %v1366
    %2050 = vmatprep.subr.mxu0 %v1363
    %2051 = vmatpush2.msra.mxu0 %v1362
    %2052 = vmatprep.subr.mxu0 %v1359
    %2053 = vmatpush2.msra.mxu0 %v1358
    %2054 = vmatprep.subr.mxu0 %v1355
    %2055 = vmatpush2.msra.mxu0 %v1354
    %2056 = vmatprep.subr.mxu0 %v1351
    %2057 = vmatpush2.msra.mxu0 %v1350
    %2058 = vmatprep.subr.mxu0 %v1347
    %2059 = vmatpush2.msra.mxu0 %v1346
    %2060 = vmatprep.subr.mxu0 %v1343
    %2061 = vmatpush2.msra.mxu0 %v1342
    %2062 = vmatprep.subr.mxu0 %v1339
    %2063 = vmatpush2.msra.mxu0 %v1338
    %2064 = vmatprep.subr.mxu0 %v1335
    %2065 = vmatpush2.msra.mxu0 %v1334
    %2066 = vmatprep.subr.mxu0 %v1331
    %2067 = vmatpush2.msra.mxu0 %v1330
    %2068 = vmatprep.mubr.f32.mxu0 %v997
    %2069 = vmatmul.mubr.f32.gmra.mxu0 %v996
    %v2070 = vpop.f32.mrf.mxu0
    %v2071 = vadd.f32 %v1994, %v2070
    %v2072 = vpop.f32.mrf.mxu0
    %v2073 = vadd.f32 %v1996, %v2072
    %2074 = vmatprep.mubr.f32.mxu0 %v1005
    %2075 = vmatmul.mubr.f32.gmra.mxu0 %v1004
    %v2076 = vpop.f32.mrf.mxu0
    %v2077 = vadd.f32 %v2000, %v2076
    %v2078 = vpop.f32.mrf.mxu0
    %v2079 = vadd.f32 %v2002, %v2078
    %2080 = vdwg.mxu0
    %2081 = vmatprep.subr.mxu0 %v1455
    %2082 = vmatpush1.msra.mxu0 %v1454
    %2083 = vmatprep.subr.mxu0 %v1451
    %2084 = vmatpush1.msra.mxu0 %v1450
    %2085 = vmatprep.subr.mxu0 %v1447
    %2086 = vmatpush1.msra.mxu0 %v1446
    %2087 = vmatprep.subr.mxu0 %v1443
    %2088 = vmatpush1.msra.mxu0 %v1442
    %2089 = vmatprep.subr.mxu0 %v1439
    %2090 = vmatpush1.msra.mxu0 %v1438
    %2091 = vmatprep.subr.mxu0 %v1435
    %2092 = vmatpush1.msra.mxu0 %v1434
    %2093 = vmatprep.subr.mxu0 %v1431
    %2094 = vmatpush1.msra.mxu0 %v1430
    %2095 = vmatprep.subr.mxu0 %v1427
    %2096 = vmatpush1.msra.mxu0 %v1426
    %2097 = vmatprep.subr.mxu0 %v1423
    %2098 = vmatpush1.msra.mxu0 %v1422
    %2099 = vmatprep.subr.mxu0 %v1419
    %2100 = vmatpush1.msra.mxu0 %v1418
    %2101 = vmatprep.subr.mxu0 %v1415
    %2102 = vmatpush1.msra.mxu0 %v1414
    %2103 = vmatprep.subr.mxu0 %v1411
    %2104 = vmatpush1.msra.mxu0 %v1410
    %2105 = vmatprep.subr.mxu0 %v1407
    %2106 = vmatpush1.msra.mxu0 %v1406
    %2107 = vmatprep.subr.mxu0 %v1403
    %2108 = vmatpush1.msra.mxu0 %v1402
    %2109 = vmatprep.subr.mxu0 %v1399
    %2110 = vmatpush1.msra.mxu0 %v1398
    %2111 = vmatprep.subr.mxu0 %v1395
    %2112 = vmatpush1.msra.mxu0 %v1394
    %2113 = vmatprep.subr.mxu0 %v1519
    %2114 = vmatpush2.msra.mxu0 %v1518
    %2115 = vmatprep.subr.mxu0 %v1515
    %2116 = vmatpush2.msra.mxu0 %v1514
    %2117 = vmatprep.subr.mxu0 %v1511
    %2118 = vmatpush2.msra.mxu0 %v1510
    %2119 = vmatprep.subr.mxu0 %v1507
    %2120 = vmatpush2.msra.mxu0 %v1506
    %2121 = vmatprep.subr.mxu0 %v1503
    %2122 = vmatpush2.msra.mxu0 %v1502
    %2123 = vmatprep.subr.mxu0 %v1499
    %2124 = vmatpush2.msra.mxu0 %v1498
    %2125 = vmatprep.subr.mxu0 %v1495
    %2126 = vmatpush2.msra.mxu0 %v1494
    %2127 = vmatprep.subr.mxu0 %v1491
    %2128 = vmatpush2.msra.mxu0 %v1490
    %2129 = vmatprep.subr.mxu0 %v1487
    %2130 = vmatpush2.msra.mxu0 %v1486
    %2131 = vmatprep.subr.mxu0 %v1483
    %2132 = vmatpush2.msra.mxu0 %v1482
    %2133 = vmatprep.subr.mxu0 %v1479
    %2134 = vmatpush2.msra.mxu0 %v1478
    %2135 = vmatprep.subr.mxu0 %v1475
    %2136 = vmatpush2.msra.mxu0 %v1474
    %2137 = vmatprep.subr.mxu0 %v1471
    %2138 = vmatpush2.msra.mxu0 %v1470
    %2139 = vmatprep.subr.mxu0 %v1467
    %2140 = vmatpush2.msra.mxu0 %v1466
    %2141 = vmatprep.subr.mxu0 %v1463
    %2142 = vmatpush2.msra.mxu0 %v1462
    %2143 = vmatprep.subr.mxu0 %v1459
    %2144 = vmatpush2.msra.mxu0 %v1458
    %2145 = vmatprep.mubr.f32.mxu0 %v999
    %2146 = vmatmul.mubr.f32.gmra.mxu0 %v998
    %v2147 = vpop.f32.mrf.mxu0
    %v2148 = vadd.f32 %v2071, %v2147
    %v2149 = vpop.f32.mrf.mxu0
    %v2150 = vadd.f32 %v2073, %v2149
    %2151 = vmatprep.mubr.f32.mxu0 %v1007
    %2152 = vmatmul.mubr.f32.gmra.mxu0 %v1006
    %v2153 = vpop.f32.mrf.mxu0
    %v2154 = vadd.f32 %v2077, %v2153
    %v2155 = vpop.f32.mrf.mxu0
    %v2156 = vadd.f32 %v2079, %v2155
    %2157 = vdwg.mxu0
    %v2158 = vld [vmem:[#allocation14] sm:$0xf]
    %v2159 = vld [vmem:[#allocation16] sm:$0xf]
    %v2160 = vadd.f32 %v1840, %v1846
    %v2161 = vrot.slane %v2160, 4
    %v2162 = vadd.f32 %v2160, %v2161
    %v2163 = vrot.slane %v2162, 2
    %v2164 = vadd.f32 %v2162, %v2163
    %v2165 = vrot.slane %v2164, 1
    %v2166 = vadd.f32 %v2164, %v2165
    %v2167 = vadd.f32 %v1842, %v1848
    %v2168 = vrot.slane %v2167, 4
    %v2169 = vadd.f32 %v2167, %v2168
    %v2170 = vrot.slane %v2169, 2
    %v2171 = vadd.f32 %v2169, %v2170
    %v2172 = vrot.slane %v2171, 1
    %v2173 = vadd.f32 %v2171, %v2172
    %v2174 = vadd.f32 %v2148, %v2154
    %v2175 = vrot.slane %v2174, 4
    %v2176 = vadd.f32 %v2174, %v2175
    %v2177 = vrot.slane %v2176, 2
    %v2178 = vadd.f32 %v2176, %v2177
    %v2179 = vrot.slane %v2178, 1
    %v2180 = vadd.f32 %v2178, %v2179
    %v2181 = vadd.f32 %v2150, %v2156
    %v2182 = vrot.slane %v2181, 4
    %v2183 = vadd.f32 %v2181, %v2182
    %v2184 = vrot.slane %v2183, 2
    %v2185 = vadd.f32 %v2183, %v2184
    %v2186 = vrot.slane %v2185, 1
    %v2187 = vadd.f32 %v2185, %v2186
    %v2188 = vmul.f32 %v2166, %v623
    %v2189 = vmul.f32 %v2173, %v623
    %v2190 = vmul.f32 %v2180, %v623
    %v2191 = vmul.f32 %v2187, %v623
    %v2192 = vmul.f32 %v1840, %v1840
    %v2193 = vmul.f32 %v1842, %v1842
    %v2194 = vmul.f32 %v2148, %v2148
    %v2195 = vmul.f32 %v2150, %v2150
    %v2196 = vmul.f32 %v1846, %v1846
    %v2197 = vmul.f32 %v1848, %v1848
    %v2198 = vmul.f32 %v2154, %v2154
    %v2199 = vmul.f32 %v2156, %v2156
    %v2200 = vadd.f32 %v2192, %v2196
    %v2201 = vrot.slane %v2200, 4
    %v2202 = vadd.f32 %v2200, %v2201
    %v2203 = vrot.slane %v2202, 2
    %v2204 = vadd.f32 %v2202, %v2203
    %v2205 = vrot.slane %v2204, 1
    %v2206 = vadd.f32 %v2204, %v2205
    %v2207 = vadd.f32 %v2193, %v2197
    %v2208 = vrot.slane %v2207, 4
    %v2209 = vadd.f32 %v2207, %v2208
    %v2210 = vrot.slane %v2209, 2
    %v2211 = vadd.f32 %v2209, %v2210
    %v2212 = vrot.slane %v2211, 1
    %v2213 = vadd.f32 %v2211, %v2212
    %v2214 = vadd.f32 %v2194, %v2198
    %v2215 = vrot.slane %v2214, 4
    %v2216 = vadd.f32 %v2214, %v2215
    %v2217 = vrot.slane %v2216, 2
    %v2218 = vadd.f32 %v2216, %v2217
    %v2219 = vrot.slane %v2218, 1
    %v2220 = vadd.f32 %v2218, %v2219
    %v2221 = vadd.f32 %v2195, %v2199
    %v2222 = vrot.slane %v2221, 4
    %v2223 = vadd.f32 %v2221, %v2222
    %v2224 = vrot.slane %v2223, 2
    %v2225 = vadd.f32 %v2223, %v2224
    %v2226 = vrot.slane %v2225, 1
    %v2227 = vadd.f32 %v2225, %v2226
    %v2228 = vmul.f32 %v2206, %v623
    %v2229 = vmul.f32 %v2213, %v623
    %v2230 = vmul.f32 %v2220, %v623
    %v2231 = vmul.f32 %v2227, %v623
    %v2232 = vmul.f32 %v2188, %v2188
    %v2233 = vmul.f32 %v2189, %v2189
    %v2234 = vmul.f32 %v2190, %v2190
    %v2235 = vmul.f32 %v2191, %v2191
    %v2236 = vsub.f32 %v2228, %v2232
    %v2237 = vsub.f32 %v2229, %v2233
    %v2238 = vsub.f32 %v2230, %v2234
    %v2239 = vsub.f32 %v2231, %v2235
    %v2240 = vmax.f32 %v2236, 0.0
    %v2241 = vmax.f32 %v2237, 0.0
    %v2242 = vmax.f32 %v2238, 0.0
    %v2243 = vmax.f32 %v2239, 0.0
    %v2244 = vadd.f32 %v2240, 1e-05
    %v2245 = vadd.f32 %v2241, 1e-05
    %v2246 = vadd.f32 %v2242, 1e-05
    %v2247 = vadd.f32 %v2243, 1e-05
    %v2248 = vrsqrt.pop %v2244
    %v2249 = vrsqrt.pop %v2245
    %v2250 = vrsqrt.pop %v2246
    %v2251 = vrsqrt.pop %v2247
    %v2256 = vcombine.low %v2248, %v2249
    %v2257 = vcombine.low %v2250, %v2251
    %v2259 = vunpack.c.l.s4 1966171168
    %v2260 = vunpack.c.0.s8 %v2259
    %v2261 = vlaneseq
    %v2262 = vshrl.u32 %v2261, 7
    %v2263 = vsub.s32 %v2260, %v2262
    %v2264 = vrot.slane %v2256, %v2263
    %v2266 = vunpack.c.l.s4 1966171168
    %v2267 = vunpack.c.0.s8 %v2266
    %v2268 = vlaneseq
    %v2269 = vshrl.u32 %v2268, 7
    %v2270 = vsub.s32 %v2267, %v2269
    %v2271 = vrot.slane %v2257, %v2270
    %v2272 = vcombine.low %v2264, %v2271
    %v2274 = vunpack.c.l.s4 1966171168
    %v2275 = vunpack.c.0.s8 %v2274
    %v2276 = vlaneseq
    %v2277 = vshrl.u32 %v2276, 7
    %v2278 = vsub.s32 %v2275, %v2277
    %v2279 = vrot.slane %v2272, %v2278
    %v2281 = vmul.f32 %v2158, %v2279
    %v2283 = vlaneseq
    %v2284 = vshrl.u32 %v2283, 7
    %v2285 = vsub.s32 0, %v2284
    %v2286 = vrot.slane %v2281, %v2285
    %v2287 = vlaneseq
    %v2288 = vshrl.u32 %v2287, 7
    %v2289 = vsub.s32 1, %v2288
    %v2290 = vrot.slane %v2281, %v2289
    %v2291 = vlaneseq
    %v2292 = vshrl.u32 %v2291, 7
    %v2293 = vsub.s32 2, %v2292
    %v2294 = vrot.slane %v2281, %v2293
    %v2295 = vlaneseq
    %v2296 = vshrl.u32 %v2295, 7
    %v2297 = vsub.s32 3, %v2296
    %v2298 = vrot.slane %v2281, %v2297
    %v2303 = vmul.f32 %v1840, %v2286
    %v2304 = vmul.f32 %v1842, %v2290
    %v2305 = vmul.f32 %v2148, %v2294
    %v2306 = vmul.f32 %v2150, %v2298
    %v2307 = vmul.f32 %v1846, %v2286
    %v2308 = vmul.f32 %v1848, %v2290
    %v2309 = vmul.f32 %v2154, %v2294
    %v2310 = vmul.f32 %v2156, %v2298
    %v2311 = vmul.f32 %v2188, %v2286
    %v2312 = vmul.f32 %v2189, %v2290
    %v2313 = vmul.f32 %v2190, %v2294
    %v2314 = vmul.f32 %v2191, %v2298
    %v2319 = vcombine.low %v2311, %v2312
    %v2320 = vcombine.low %v2313, %v2314
    %v2322 = vunpack.c.l.s4 1966171168
    %v2323 = vunpack.c.0.s8 %v2322
    %v2324 = vlaneseq
    %v2325 = vshrl.u32 %v2324, 7
    %v2326 = vsub.s32 %v2323, %v2325
    %v2327 = vrot.slane %v2319, %v2326
    %v2329 = vunpack.c.l.s4 1966171168
    %v2330 = vunpack.c.0.s8 %v2329
    %v2331 = vlaneseq
    %v2332 = vshrl.u32 %v2331, 7
    %v2333 = vsub.s32 %v2330, %v2332
    %v2334 = vrot.slane %v2320, %v2333
    %v2335 = vcombine.low %v2327, %v2334
    %v2337 = vunpack.c.l.s4 1966171168
    %v2338 = vunpack.c.0.s8 %v2337
    %v2339 = vlaneseq
    %v2340 = vshrl.u32 %v2339, 7
    %v2341 = vsub.s32 %v2338, %v2340
    %v2342 = vrot.slane %v2335, %v2341
    %v2344 = vsub.f32 %v2159, %v2342
    %v2346 = vlaneseq
    %v2347 = vshrl.u32 %v2346, 7
    %v2348 = vsub.s32 0, %v2347
    %v2349 = vrot.slane %v2344, %v2348
    %v2350 = vlaneseq
    %v2351 = vshrl.u32 %v2350, 7
    %v2352 = vsub.s32 1, %v2351
    %v2353 = vrot.slane %v2344, %v2352
    %v2354 = vlaneseq
    %v2355 = vshrl.u32 %v2354, 7
    %v2356 = vsub.s32 2, %v2355
    %v2357 = vrot.slane %v2344, %v2356
    %v2358 = vlaneseq
    %v2359 = vshrl.u32 %v2358, 7
    %v2360 = vsub.s32 3, %v2359
    %v2361 = vrot.slane %v2344, %v2360
    %v2366 = vadd.f32 %v2303, %v2349
    %v2367 = vadd.f32 %v2304, %v2353
    %v2368 = vadd.f32 %v2305, %v2357
    %v2369 = vadd.f32 %v2306, %v2361
    %v2370 = vadd.f32 %v2307, %v2349
    %v2371 = vadd.f32 %v2308, %v2353
    %v2372 = vadd.f32 %v2309, %v2357
    %v2373 = vadd.f32 %v2310, %v2361
    %v2374 = vmax.f32 %v2366, 0.0
    %v2375 = vmax.f32 %v2367, 0.0
    %v2376 = vmax.f32 %v2368, 0.0
    %v2377 = vmax.f32 %v2369, 0.0
    %v2378 = vmax.f32 %v2370, 0.0
    %v2379 = vmax.f32 %v2371, 0.0
    %v2380 = vmax.f32 %v2372, 0.0
    %v2381 = vmax.f32 %v2373, 0.0
    %v2382 = vld [vmem:[#allocation17] sm:$0xff]
    %v2383 = vld [vmem:[#allocation17 + $0x8] sm:$0xff]
    %v2384 = vld [vmem:[#allocation17 + $0x10] sm:$0xff]
    %v2385 = vld [vmem:[#allocation17 + $0x18] sm:$0xff]
    %v2386 = vld [vmem:[#allocation17 + $0x20] sm:$0xff]
    %v2387 = vld [vmem:[#allocation17 + $0x28] sm:$0xff]
    %v2388 = vld [vmem:[#allocation17 + $0x30] sm:$0xff]
    %v2389 = vld [vmem:[#allocation17 + $0x38] sm:$0xff]
    %v2390 = vld [vmem:[#allocation17 + $0x40] sm:$0xff]
    %v2391 = vld [vmem:[#allocation17 + $0x48] sm:$0xff]
    %v2392 = vld [vmem:[#allocation17 + $0x50] sm:$0xff]
    %v2393 = vld [vmem:[#allocation17 + $0x58] sm:$0xff]
    %v2394 = vld [vmem:[#allocation17 + $0x60] sm:$0xff]
    %v2395 = vld [vmem:[#allocation17 + $0x68] sm:$0xff]
    %v2396 = vld [vmem:[#allocation17 + $0x70] sm:$0xff]
    %v2397 = vld [vmem:[#allocation17 + $0x78] sm:$0xff]
    %v2398 = vld [vmem:[#allocation17 + $0x80] sm:$0xff]
    %v2399 = vld [vmem:[#allocation17 + $0x88] sm:$0xff]
    %v2400 = vld [vmem:[#allocation17 + $0x90] sm:$0xff]
    %v2401 = vld [vmem:[#allocation17 + $0x98] sm:$0xff]
    %v2402 = vld [vmem:[#allocation17 + $0xa0] sm:$0xff]
    %v2403 = vld [vmem:[#allocation17 + $0xa8] sm:$0xff]
    %v2404 = vld [vmem:[#allocation17 + $0xb0] sm:$0xff]
    %v2405 = vld [vmem:[#allocation17 + $0xb8] sm:$0xff]
    %v2406 = vld [vmem:[#allocation17 + $0xc0] sm:$0xff]
    %v2407 = vld [vmem:[#allocation17 + $0xc8] sm:$0xff]
    %v2408 = vld [vmem:[#allocation17 + $0xd0] sm:$0xff]
    %v2409 = vld [vmem:[#allocation17 + $0xd8] sm:$0xff]
    %v2410 = vld [vmem:[#allocation17 + $0xe0] sm:$0xff]
    %v2411 = vld [vmem:[#allocation17 + $0xe8] sm:$0xff]
    %v2412 = vld [vmem:[#allocation17 + $0xf0] sm:$0xff]
    %v2413 = vld [vmem:[#allocation17 + $0xf8] sm:$0xff]
    %v2414 = vld [vmem:[#allocation17 + $0x100] sm:$0xff]
    %v2415 = vld [vmem:[#allocation17 + $0x108] sm:$0xff]
    %v2416 = vld [vmem:[#allocation17 + $0x110] sm:$0xff]
    %v2417 = vld [vmem:[#allocation17 + $0x118] sm:$0xff]
    %v2418 = vld [vmem:[#allocation17 + $0x120] sm:$0xff]
    %v2419 = vld [vmem:[#allocation17 + $0x128] sm:$0xff]
    %v2420 = vld [vmem:[#allocation17 + $0x130] sm:$0xff]
    %v2421 = vld [vmem:[#allocation17 + $0x138] sm:$0xff]
    %v2422 = vld [vmem:[#allocation17 + $0x140] sm:$0xff]
    %v2423 = vld [vmem:[#allocation17 + $0x148] sm:$0xff]
    %v2424 = vld [vmem:[#allocation17 + $0x150] sm:$0xff]
    %v2425 = vld [vmem:[#allocation17 + $0x158] sm:$0xff]
    %v2426 = vld [vmem:[#allocation17 + $0x160] sm:$0xff]
    %v2427 = vld [vmem:[#allocation17 + $0x168] sm:$0xff]
    %v2428 = vld [vmem:[#allocation17 + $0x170] sm:$0xff]
    %v2429 = vld [vmem:[#allocation17 + $0x178] sm:$0xff]
    %v2430 = vld [vmem:[#allocation17 + $0x180] sm:$0xff]
    %v2431 = vld [vmem:[#allocation17 + $0x188] sm:$0xff]
    %v2432 = vld [vmem:[#allocation17 + $0x190] sm:$0xff]
    %v2433 = vld [vmem:[#allocation17 + $0x198] sm:$0xff]
    %v2434 = vld [vmem:[#allocation17 + $0x1a0] sm:$0xff]
    %v2435 = vld [vmem:[#allocation17 + $0x1a8] sm:$0xff]
    %v2436 = vld [vmem:[#allocation17 + $0x1b0] sm:$0xff]
    %v2437 = vld [vmem:[#allocation17 + $0x1b8] sm:$0xff]
    %v2438 = vld [vmem:[#allocation17 + $0x1c0] sm:$0xff]
    %v2439 = vld [vmem:[#allocation17 + $0x1c8] sm:$0xff]
    %v2440 = vld [vmem:[#allocation17 + $0x1d0] sm:$0xff]
    %v2441 = vld [vmem:[#allocation17 + $0x1d8] sm:$0xff]
    %v2442 = vld [vmem:[#allocation17 + $0x1e0] sm:$0xff]
    %v2443 = vld [vmem:[#allocation17 + $0x1e8] sm:$0xff]
    %v2444 = vld [vmem:[#allocation17 + $0x1f0] sm:$0xff]
    %v2445 = vld [vmem:[#allocation17 + $0x1f8] sm:$0xff]
    %v2446 = vld [vmem:[#allocation17 + $0x200] sm:$0xff]
    %v2447 = vld [vmem:[#allocation17 + $0x208] sm:$0xff]
    %v2448 = vld [vmem:[#allocation17 + $0x210] sm:$0xff]
    %v2449 = vld [vmem:[#allocation17 + $0x218] sm:$0xff]
    %v2450 = vld [vmem:[#allocation17 + $0x220] sm:$0xff]
    %v2451 = vld [vmem:[#allocation17 + $0x228] sm:$0xff]
    %v2452 = vld [vmem:[#allocation17 + $0x230] sm:$0xff]
    %v2453 = vld [vmem:[#allocation17 + $0x238] sm:$0xff]
    %v2454 = vld [vmem:[#allocation17 + $0x240] sm:$0xff]
    %v2455 = vld [vmem:[#allocation17 + $0x248] sm:$0xff]
    %v2456 = vld [vmem:[#allocation17 + $0x250] sm:$0xff]
    %v2457 = vld [vmem:[#allocation17 + $0x258] sm:$0xff]
    %v2458 = vld [vmem:[#allocation17 + $0x260] sm:$0xff]
    %v2459 = vld [vmem:[#allocation17 + $0x268] sm:$0xff]
    %v2460 = vld [vmem:[#allocation17 + $0x270] sm:$0xff]
    %v2461 = vld [vmem:[#allocation17 + $0x278] sm:$0xff]
    %v2462 = vld [vmem:[#allocation17 + $0x280] sm:$0xff]
    %v2463 = vld [vmem:[#allocation17 + $0x288] sm:$0xff]
    %v2464 = vld [vmem:[#allocation17 + $0x290] sm:$0xff]
    %v2465 = vld [vmem:[#allocation17 + $0x298] sm:$0xff]
    %v2466 = vld [vmem:[#allocation17 + $0x2a0] sm:$0xff]
    %v2467 = vld [vmem:[#allocation17 + $0x2a8] sm:$0xff]
    %v2468 = vld [vmem:[#allocation17 + $0x2b0] sm:$0xff]
    %v2469 = vld [vmem:[#allocation17 + $0x2b8] sm:$0xff]
    %v2470 = vld [vmem:[#allocation17 + $0x2c0] sm:$0xff]
    %v2471 = vld [vmem:[#allocation17 + $0x2c8] sm:$0xff]
    %v2472 = vld [vmem:[#allocation17 + $0x2d0] sm:$0xff]
    %v2473 = vld [vmem:[#allocation17 + $0x2d8] sm:$0xff]
    %v2474 = vld [vmem:[#allocation17 + $0x2e0] sm:$0xff]
    %v2475 = vld [vmem:[#allocation17 + $0x2e8] sm:$0xff]
    %v2476 = vld [vmem:[#allocation17 + $0x2f0] sm:$0xff]
    %v2477 = vld [vmem:[#allocation17 + $0x2f8] sm:$0xff]
    %v2478 = vld [vmem:[#allocation17 + $0x300] sm:$0xff]
    %v2479 = vld [vmem:[#allocation17 + $0x308] sm:$0xff]
    %v2480 = vld [vmem:[#allocation17 + $0x310] sm:$0xff]
    %v2481 = vld [vmem:[#allocation17 + $0x318] sm:$0xff]
    %v2482 = vld [vmem:[#allocation17 + $0x320] sm:$0xff]
    %v2483 = vld [vmem:[#allocation17 + $0x328] sm:$0xff]
    %v2484 = vld [vmem:[#allocation17 + $0x330] sm:$0xff]
    %v2485 = vld [vmem:[#allocation17 + $0x338] sm:$0xff]
    %v2486 = vld [vmem:[#allocation17 + $0x340] sm:$0xff]
    %v2487 = vld [vmem:[#allocation17 + $0x348] sm:$0xff]
    %v2488 = vld [vmem:[#allocation17 + $0x350] sm:$0xff]
    %v2489 = vld [vmem:[#allocation17 + $0x358] sm:$0xff]
    %v2490 = vld [vmem:[#allocation17 + $0x360] sm:$0xff]
    %v2491 = vld [vmem:[#allocation17 + $0x368] sm:$0xff]
    %v2492 = vld [vmem:[#allocation17 + $0x370] sm:$0xff]
    %v2493 = vld [vmem:[#allocation17 + $0x378] sm:$0xff]
    %v2494 = vld [vmem:[#allocation17 + $0x380] sm:$0xff]
    %v2495 = vld [vmem:[#allocation17 + $0x388] sm:$0xff]
    %v2496 = vld [vmem:[#allocation17 + $0x390] sm:$0xff]
    %v2497 = vld [vmem:[#allocation17 + $0x398] sm:$0xff]
    %v2498 = vld [vmem:[#allocation17 + $0x3a0] sm:$0xff]
    %v2499 = vld [vmem:[#allocation17 + $0x3a8] sm:$0xff]
    %v2500 = vld [vmem:[#allocation17 + $0x3b0] sm:$0xff]
    %v2501 = vld [vmem:[#allocation17 + $0x3b8] sm:$0xff]
    %v2502 = vld [vmem:[#allocation17 + $0x3c0] sm:$0xff]
    %v2503 = vld [vmem:[#allocation17 + $0x3c8] sm:$0xff]
    %v2504 = vld [vmem:[#allocation17 + $0x3d0] sm:$0xff]
    %v2505 = vld [vmem:[#allocation17 + $0x3d8] sm:$0xff]
    %v2506 = vld [vmem:[#allocation17 + $0x3e0] sm:$0xff]
    %v2507 = vld [vmem:[#allocation17 + $0x3e8] sm:$0xff]
    %v2508 = vld [vmem:[#allocation17 + $0x3f0] sm:$0xff]
    %v2509 = vld [vmem:[#allocation17 + $0x3f8] sm:$0xff]
    %v2510 = vld [vmem:[#allocation19] sm:$0x3]
    %v2512 = vlaneseq
    %v2513 = vshrl.u32 %v2512, 7
    %v2514 = vsub.s32 0, %v2513
    %v2515 = vrot.slane %v2510, %v2514
    %v2516 = vlaneseq
    %v2517 = vshrl.u32 %v2516, 7
    %v2518 = vsub.s32 1, %v2517
    %v2519 = vrot.slane %v2510, %v2518
    %2522 = vmatprep.subr.mxu0 %v2413
    %2523 = vmatpush1.msra.mxu0 %v2412
    %2524 = vmatprep.subr.mxu0 %v2411
    %2525 = vmatpush1.msra.mxu0 %v2410
    %2526 = vmatprep.subr.mxu0 %v2409
    %2527 = vmatpush1.msra.mxu0 %v2408
    %2528 = vmatprep.subr.mxu0 %v2407
    %2529 = vmatpush1.msra.mxu0 %v2406
    %2530 = vmatprep.subr.mxu0 %v2405
    %2531 = vmatpush1.msra.mxu0 %v2404
    %2532 = vmatprep.subr.mxu0 %v2403
    %2533 = vmatpush1.msra.mxu0 %v2402
    %2534 = vmatprep.subr.mxu0 %v2401
    %2535 = vmatpush1.msra.mxu0 %v2400
    %2536 = vmatprep.subr.mxu0 %v2399
    %2537 = vmatpush1.msra.mxu0 %v2398
    %2538 = vmatprep.subr.mxu0 %v2397
    %2539 = vmatpush1.msra.mxu0 %v2396
    %2540 = vmatprep.subr.mxu0 %v2395
    %2541 = vmatpush1.msra.mxu0 %v2394
    %2542 = vmatprep.subr.mxu0 %v2393
    %2543 = vmatpush1.msra.mxu0 %v2392
    %2544 = vmatprep.subr.mxu0 %v2391
    %2545 = vmatpush1.msra.mxu0 %v2390
    %2546 = vmatprep.subr.mxu0 %v2389
    %2547 = vmatpush1.msra.mxu0 %v2388
    %2548 = vmatprep.subr.mxu0 %v2387
    %2549 = vmatpush1.msra.mxu0 %v2386
    %2550 = vmatprep.subr.mxu0 %v2385
    %2551 = vmatpush1.msra.mxu0 %v2384
    %2552 = vmatprep.subr.mxu0 %v2383
    %2553 = vmatpush1.msra.mxu0 %v2382
    %2554 = vmatprep.subr.mxu0 %v2445
    %2555 = vmatpush2.msra.mxu0 %v2444
    %2556 = vmatprep.subr.mxu0 %v2443
    %2557 = vmatpush2.msra.mxu0 %v2442
    %2558 = vmatprep.subr.mxu0 %v2441
    %2559 = vmatpush2.msra.mxu0 %v2440
    %2560 = vmatprep.subr.mxu0 %v2439
    %2561 = vmatpush2.msra.mxu0 %v2438
    %2562 = vmatprep.subr.mxu0 %v2437
    %2563 = vmatpush2.msra.mxu0 %v2436
    %2564 = vmatprep.subr.mxu0 %v2435
    %2565 = vmatpush2.msra.mxu0 %v2434
    %2566 = vmatprep.subr.mxu0 %v2433
    %2567 = vmatpush2.msra.mxu0 %v2432
    %2568 = vmatprep.subr.mxu0 %v2431
    %2569 = vmatpush2.msra.mxu0 %v2430
    %2570 = vmatprep.subr.mxu0 %v2429
    %2571 = vmatpush2.msra.mxu0 %v2428
    %2572 = vmatprep.subr.mxu0 %v2427
    %2573 = vmatpush2.msra.mxu0 %v2426
    %2574 = vmatprep.subr.mxu0 %v2425
    %2575 = vmatpush2.msra.mxu0 %v2424
    %2576 = vmatprep.subr.mxu0 %v2423
    %2577 = vmatpush2.msra.mxu0 %v2422
    %2578 = vmatprep.subr.mxu0 %v2421
    %2579 = vmatpush2.msra.mxu0 %v2420
    %2580 = vmatprep.subr.mxu0 %v2419
    %2581 = vmatpush2.msra.mxu0 %v2418
    %2582 = vmatprep.subr.mxu0 %v2417
    %2583 = vmatpush2.msra.mxu0 %v2416
    %2584 = vmatprep.subr.mxu0 %v2415
    %2585 = vmatpush2.msra.mxu0 %v2414
    %2586 = vmatprep.mubr.f32.mxu0 %v2375
    %2587 = vmatmul.mubr.f32.gmra.mxu0 %v2374
    %v2588 = vpop.f32.mrf.mxu0
    %v2589 = vadd.f32 %v2515, %v2588
    %v2590 = vpop.f32.mrf.mxu0
    %v2591 = vadd.f32 %v2519, %v2590
    %2592 = vmatprep.mubr.f32.mxu0 %v2379
    %2593 = vmatmul.mubr.f32.gmra.mxu0 %v2378
    %v2594 = vpop.f32.mrf.mxu0
    %v2595 = vadd.f32 %v2515, %v2594
    %v2596 = vpop.f32.mrf.mxu0
    %v2597 = vadd.f32 %v2519, %v2596
    %2598 = vdwg.mxu0
    %2599 = vmatprep.subr.mxu0 %v2477
    %2600 = vmatpush1.msra.mxu0 %v2476
    %2601 = vmatprep.subr.mxu0 %v2475
    %2602 = vmatpush1.msra.mxu0 %v2474
    %2603 = vmatprep.subr.mxu0 %v2473
    %2604 = vmatpush1.msra.mxu0 %v2472
    %2605 = vmatprep.subr.mxu0 %v2471
    %2606 = vmatpush1.msra.mxu0 %v2470
    %2607 = vmatprep.subr.mxu0 %v2469
    %2608 = vmatpush1.msra.mxu0 %v2468
    %2609 = vmatprep.subr.mxu0 %v2467
    %2610 = vmatpush1.msra.mxu0 %v2466
    %2611 = vmatprep.subr.mxu0 %v2465
    %2612 = vmatpush1.msra.mxu0 %v2464
    %2613 = vmatprep.subr.mxu0 %v2463
    %2614 = vmatpush1.msra.mxu0 %v2462
    %2615 = vmatprep.subr.mxu0 %v2461
    %2616 = vmatpush1.msra.mxu0 %v2460
    %2617 = vmatprep.subr.mxu0 %v2459
    %2618 = vmatpush1.msra.mxu0 %v2458
    %2619 = vmatprep.subr.mxu0 %v2457
    %2620 = vmatpush1.msra.mxu0 %v2456
    %2621 = vmatprep.subr.mxu0 %v2455
    %2622 = vmatpush1.msra.mxu0 %v2454
    %2623 = vmatprep.subr.mxu0 %v2453
    %2624 = vmatpush1.msra.mxu0 %v2452
    %2625 = vmatprep.subr.mxu0 %v2451
    %2626 = vmatpush1.msra.mxu0 %v2450
    %2627 = vmatprep.subr.mxu0 %v2449
    %2628 = vmatpush1.msra.mxu0 %v2448
    %2629 = vmatprep.subr.mxu0 %v2447
    %2630 = vmatpush1.msra.mxu0 %v2446
    %2631 = vmatprep.subr.mxu0 %v2509
    %2632 = vmatpush2.msra.mxu0 %v2508
    %2633 = vmatprep.subr.mxu0 %v2507
    %2634 = vmatpush2.msra.mxu0 %v2506
    %2635 = vmatprep.subr.mxu0 %v2505
    %2636 = vmatpush2.msra.mxu0 %v2504
    %2637 = vmatprep.subr.mxu0 %v2503
    %2638 = vmatpush2.msra.mxu0 %v2502
    %2639 = vmatprep.subr.mxu0 %v2501
    %2640 = vmatpush2.msra.mxu0 %v2500
    %2641 = vmatprep.subr.mxu0 %v2499
    %2642 = vmatpush2.msra.mxu0 %v2498
    %2643 = vmatprep.subr.mxu0 %v2497
    %2644 = vmatpush2.msra.mxu0 %v2496
    %2645 = vmatprep.subr.mxu0 %v2495
    %2646 = vmatpush2.msra.mxu0 %v2494
    %2647 = vmatprep.subr.mxu0 %v2493
    %2648 = vmatpush2.msra.mxu0 %v2492
    %2649 = vmatprep.subr.mxu0 %v2491
    %2650 = vmatpush2.msra.mxu0 %v2490
    %2651 = vmatprep.subr.mxu0 %v2489
    %2652 = vmatpush2.msra.mxu0 %v2488
    %2653 = vmatprep.subr.mxu0 %v2487
    %2654 = vmatpush2.msra.mxu0 %v2486
    %2655 = vmatprep.subr.mxu0 %v2485
    %2656 = vmatpush2.msra.mxu0 %v2484
    %2657 = vmatprep.subr.mxu0 %v2483
    %2658 = vmatpush2.msra.mxu0 %v2482
    %2659 = vmatprep.subr.mxu0 %v2481
    %2660 = vmatpush2.msra.mxu0 %v2480
    %2661 = vmatprep.subr.mxu0 %v2479
    %2662 = vmatpush2.msra.mxu0 %v2478
    %2663 = vmatprep.mubr.f32.mxu0 %v2377
    %2664 = vmatmul.mubr.f32.gmra.mxu0 %v2376
    %v2665 = vpop.f32.mrf.mxu0
    %v2666 = vadd.f32 %v2589, %v2665
    %v2667 = vpop.f32.mrf.mxu0
    %v2668 = vadd.f32 %v2591, %v2667
    %2669 = vmatprep.mubr.f32.mxu0 %v2381
    %2670 = vmatmul.mubr.f32.gmra.mxu0 %v2380
    %v2671 = vpop.f32.mrf.mxu0
    %v2672 = vadd.f32 %v2595, %v2671
    %v2673 = vpop.f32.mrf.mxu0
    %v2674 = vadd.f32 %v2597, %v2673
    %2675 = vdwg.mxu0
    %2676 = vst [vmem:[#allocation20] sm:$0xff] %v2666
    %2677 = vst [vmem:[#allocation20 + $0x8] sm:$0xff] %v2668
    %2678 = vst [vmem:[#allocation20 + $0x10] sm:$0xff] %v2672
    %2679 = vst [vmem:[#allocation20 + $0x18] sm:$0xff] %v2674
    // Predicated region
    $region90: #{descriptor_feature_extractor_forward.1} parent=1 // pred_check
      _
    $region91: #{descriptor_feature_extractor_forward.1} parent=1 // pred_check_branch
      %2681 = sbr.rel (0) target = $region93
    $region92: #{descriptor_feature_extractor_forward.1} parent=1 // pred_region
      %s2683 = ssub.s32 512, 512
      %2684 = vsyncadd [#allocation4], %s2683
      %s2685 = sshll.u32 [#allocation20], 4
      %s2686 = int_to_ptr.vmem [resolvable:$true] %s2685
      %2691 = dma.vmem_to_hbm [thread:$0]  %s2686, 512, %s11, [#allocation4], 256, 256, 16
    $region93: #{descriptor_feature_extractor_forward.1} parent=1 // pred_fallthru
      _
    // Predicated region
    $region94: #{descriptor_feature_extractor_forward.1} parent=1 // pred_check
      _
    $region95: #{descriptor_feature_extractor_forward.1} parent=1 // pred_check_branch
      %2693 = sbr.rel (0) target = $region97
    $region96: #{descriptor_feature_extractor_forward.1} parent=1 // pred_region
      %2694 = dma.done [#allocation4], 512
    $region97: #{descriptor_feature_extractor_forward.1} parent=1 // pred_fallthru
      _
    %2695 = vsyncpa [#allocation3], 1
    %2696 = vsyncpa [#allocation6], 1
    %2697 = vsyncpa [#allocation9], 1
    %2698 = vsyncpa [#allocation12], 1
    %2699 = vsyncpa [#allocation15], 1
    %2700 = vsyncpa [#allocation18], 1
    %2701 = vsyncpa [#allocation4], 1

</llo_original>
